<compile_context>
chip_gen: v5e
topology: v5e:2x2
jax: 0.10.0
libtpu: 0.0.40
codegen_flags: <defaults>
</compile_context>

<pallas_src>
import functools

import jax
import jax.numpy as jnp
from jax.experimental import pallas as pl
from jax.experimental.pallas import tpu as pltpu


# ----------------------------------------------------------------------------
# Fused kernel: 3-layer bi-LSTM + time-mean + fc1 + fc2, single grid step.
# ----------------------------------------------------------------------------
def _fused_lstm_kernel(x_ref, wih0_ref, whh0_ref, b0_ref,
                       wih1_ref, whh1_ref, b1_ref,
                       wih2_ref, whh2_ref, b2_ref,
                       w1_ref, fb1_ref, w2_ref, fb2_ref,
                       out_ref,
                       yf_ref, yb_ref, *, T, B, H):
    f32 = jnp.float32
    G = 4 * H  # gates per direction

    def cell(gates, c_prev):
        # gate order (i, f, o, g): one sigmoid slab [B,3H], one tanh slab [B,H]
        sig = jax.nn.sigmoid(gates[:, :3 * H])
        i = sig[:, :H]
        f = sig[:, H:2 * H]
        o = sig[:, 2 * H:3 * H]
        g = jnp.tanh(gates[:, 3 * H:])
        c = f * c_prev + i * g
        return o * jnp.tanh(c), c

    def run_layer(proj, whh_ref, is_last):
        # proj: [T*B, 8H] = input projection + fused bias for both directions.
        whh = whh_ref[...]                      # [2H, 8H] block-diagonal
        hf = jnp.zeros((B, H), f32)
        hb = jnp.zeros((B, H), f32)
        cf = jnp.zeros((B, H), f32)
        cb = jnp.zeros((B, H), f32)
        sum_f = jnp.zeros((B, H), f32)
        sum_b = jnp.zeros((B, H), f32)
        for s in range(T):                      # static unroll over time
            r = T - 1 - s                       # reverse-direction time index
            h_cat = jnp.concatenate([hf, hb], axis=-1)           # [B, 2H]
            rec = jnp.dot(h_cat, whh,
                          preferred_element_type=f32)            # [B, 8H]
            gf = proj[s * B:(s + 1) * B, :G] + rec[:, :G]
            gb = proj[r * B:(r + 1) * B, G:] + rec[:, G:]
            hf, cf = cell(gf, cf)
            hb, cb = cell(gb, cb)
            if is_last:
                # only the time-mean of the final layer is needed downstream
                sum_f = sum_f + hf
                sum_b = sum_b + hb
            else:
                yf_ref[s * B:(s + 1) * B, :] = hf
                yb_ref[r * B:(r + 1) * B, :] = hb
        return sum_f, sum_b

    # ---- layer 0: hoisted input projection (one big matmul, bias folded) ----
    proj = (jnp.dot(x_ref[...], wih0_ref[...], preferred_element_type=f32)
            + b0_ref[...])
    run_layer(proj, whh0_ref, is_last=False)

    # ---- layers 1, 2 (input = previous layer's [fwd | bwd] outputs) ----
    sum_f = sum_b = None
    for wih_ref, whh_ref, b_ref, is_last in (
            (wih1_ref, whh1_ref, b1_ref, False),
            (wih2_ref, whh2_ref, b2_ref, True)):
        proj = (jnp.dot(yf_ref[...], wih_ref[:H, :],
                        preferred_element_type=f32)
                + jnp.dot(yb_ref[...], wih_ref[H:, :],
                          preferred_element_type=f32)
                + b_ref[...])
        sum_f, sum_b = run_layer(proj, whh_ref, is_last)

    # ---- head: mean over time -> fc1 -> dropout(eval = identity) -> fc2 ----
    inv_t = 1.0 / float(T)
    mean_f = sum_f * inv_t                       # [B, H]
    mean_b = sum_b * inv_t                       # [B, H]
    h1 = (jnp.dot(mean_f, w1_ref[:H, :], preferred_element_type=f32)
          + jnp.dot(mean_b, w1_ref[H:, :], preferred_element_type=f32)
          + fb1_ref[...])
    # nn.Dropout(p=0.1) is the identity at inference time.
    out_ref[...] = (jnp.dot(h1, w2_ref[...], preferred_element_type=f32)
                    + fb2_ref[...])


# ----------------------------------------------------------------------------
# Plain-JAX glue: keypoint selection, parameter init / packing, wrapper.
# ----------------------------------------------------------------------------
def select_indices(x):
    left_arm = x[:, :, jnp.array([3, 4]), :]
    right_arm = x[:, :, jnp.array([6, 7]), :]
    face = x[:, :, 25:95, :]
    left_hand = x[:, :, 95:116, :]
    right_hand = x[:, :, 116:137, :]
    # Same concat order as the PyTorch module.
    return jnp.concatenate(
        [left_arm, right_arm, left_hand, right_hand, face], axis=2)


def init_raw_params(key, input_size, hidden_size, hidden_dim, num_layers,
                    num_classes):
    """PyTorch-layout parameters: w_ih [4H,D], w_hh [4H,H], gate order (i,f,g,o)."""
    H = hidden_size
    stdv = 1.0 / float(H) ** 0.5
    raw = {"lstm": []}
    for layer in range(num_layers):
        d_in = input_size if layer == 0 else 2 * H
        dirs = []
        for _ in range(2):  # forward, backward
            key, k1, k2, k3, k4 = jax.random.split(key, 5)
            w_ih = jax.random.uniform(k1, (4 * H, d_in), jnp.float32, -stdv, stdv)
            w_hh = jax.random.uniform(k2, (4 * H, H), jnp.float32, -stdv, stdv)
            b_ih = jax.random.uniform(k3, (4 * H,), jnp.float32, -stdv, stdv)
            b_hh = jax.random.uniform(k4, (4 * H,), jnp.float32, -stdv, stdv)
            dirs.append((w_ih, w_hh, b_ih, b_hh))
        raw["lstm"].append(tuple(dirs))
    feat = 2 * H
    key, k1, k2, k3, k4 = jax.random.split(key, 5)
    bd1 = 1.0 / float(feat) ** 0.5
    raw["fc1_w"] = jax.random.uniform(k1, (hidden_dim, feat), jnp.float32, -bd1, bd1)
    raw["fc1_b"] = jax.random.uniform(k2, (hidden_dim,), jnp.float32, -bd1, bd1)
    bd2 = 1.0 / float(hidden_dim) ** 0.5
    raw["fc2_w"] = jax.random.uniform(k3, (num_classes, hidden_dim), jnp.float32, -bd2, bd2)
    raw["fc2_b"] = jax.random.uniform(k4, (num_classes,), jnp.float32, -bd2, bd2)
    return raw


def _reorder_ifog(w, H):
    # PyTorch packs LSTM gates as (i, f, g, o); the kernel uses (i, f, o, g).
    return jnp.concatenate([w[:2 * H], w[3 * H:4 * H], w[2 * H:3 * H]], axis=0)


def pack_params(raw, H):
    """Pack PyTorch-layout params into the fused-kernel layout."""
    layers = []
    for fdir, bdir in raw["lstm"]:
        wih_f, whh_f, bih_f, bhh_f = fdir
        wih_b, whh_b, bih_b, bhh_b = bdir
        # Input weights: [D, 8H] (cols 0:4H fwd gates, 4H:8H bwd gates).
        wih = jnp.concatenate([_reorder_ifog(wih_f, H).T,
                               _reorder_ifog(wih_b, H).T], axis=1)
        # Recurrent weights: block-diagonal [2H, 8H] so both directions' gates
        # come from ONE N=8H matmul against [h_fwd | h_bwd].
        whh = jnp.zeros((2 * H, 8 * H), jnp.float32)
        whh = whh.at[:H, :4 * H].set(_reorder_ifog(whh_f, H).T)
        whh = whh.at[H:, 4 * H:].set(_reorder_ifog(whh_b, H).T)
        # Fused biases (b_ih + b_hh) per direction: [1, 8H].
        b = jnp.concatenate([_reorder_ifog(bih_f + bhh_f, H),
                             _reorder_ifog(bih_b + bhh_b, H)])[None, :]
        layers.append((wih, whh, b))
    return {"layers": layers,
            "w1": raw["fc1_w"].T, "b1": raw["fc1_b"][None, :],
            "w2": raw["fc2_w"].T, "b2": raw["fc2_b"][None, :]}


def lstm_forward(packed, x, hidden_size):
    # x: [B, T, K, C]
    x = select_indices(x)                        # [B, T, 116, C]
    B, T = x.shape[0], x.shape[1]
    x = x.reshape(B, T, -1)                      # flatten(start_dim=2)
    x2d = jnp.transpose(x, (1, 0, 2)).reshape(T * B, -1)   # time-major flat
    D0 = x2d.shape[-1]
    H = hidden_size

    (wih0, whh0, b0), (wih1, whh1, b1), (wih2, whh2, b2) = packed["layers"]
    w1, fb1, w2, fb2 = packed["w1"], packed["b1"], packed["w2"], packed["b2"]
    Hd, NC = w1.shape[1], w2.shape[1]

    kernel = functools.partial(_fused_lstm_kernel, T=T, B=B, H=H)
    full2d = lambda i: (0, 0)

    return pl.pallas_call(
        kernel,
        out_shape=jax.ShapeDtypeStruct((B, NC), jnp.float32),
        grid_spec=pltpu.PrefetchScalarGridSpec(
            num_scalar_prefetch=0,
            grid=(1,),
            in_specs=[
                pl.BlockSpec((T * B, D0), full2d),       # x (time-major, flat)
                pl.BlockSpec((D0, 8 * H), full2d),       # wih layer 0
                pl.BlockSpec((2 * H, 8 * H), full2d),    # whh layer 0
                pl.BlockSpec((1, 8 * H), full2d),        # bias layer 0
                pl.BlockSpec((2 * H, 8 * H), full2d),    # wih layer 1
                pl.BlockSpec((2 * H, 8 * H), full2d),    # whh layer 1
                pl.BlockSpec((1, 8 * H), full2d),        # bias layer 1
                pl.BlockSpec((2 * H, 8 * H), full2d),    # wih layer 2
                pl.BlockSpec((2 * H, 8 * H), full2d),    # whh layer 2
                pl.BlockSpec((1, 8 * H), full2d),        # bias layer 2
                pl.BlockSpec((2 * H, Hd), full2d),       # fc1 weight
                pl.BlockSpec((1, Hd), full2d),           # fc1 bias
                pl.BlockSpec((Hd, NC), full2d),          # fc2 weight
                pl.BlockSpec((1, NC), full2d),           # fc2 bias
            ],
            out_specs=pl.BlockSpec((B, NC), full2d),
            scratch_shapes=[
                pltpu.VMEM((T * B, H), jnp.float32),     # fwd layer outputs
                pltpu.VMEM((T * B, H), jnp.float32),     # bwd layer outputs
            ],
        ),
        compiler_params=pltpu.CompilerParams(
            dimension_semantics=("arbitrary",)),
    )(x2d, wih0, whh0, b0, wih1, whh1, b1, wih2, whh2, b2, w1, fb1, w2, fb2)


if __name__ == "__main__":
    # Small shapes consistent with the module (keypoint axis must cover 0..136).
    B, T, K, C = 2, 8, 137, 2
    H, Hd, L, NC = 32, 32, 3, 16          # hidden_size, hidden_dim, layers, classes
    input_size = 116 * C                   # after select_indices + flatten

    key = jax.random.PRNGKey(0)
    kx, kp = jax.random.split(key)
    x = jax.random.normal(kx, (B, T, K, C), jnp.float32)
    raw = init_raw_params(kp, input_size=input_size, hidden_size=H,
                          hidden_dim=Hd, num_layers=L, num_classes=NC)
    packed = pack_params(raw, H)

    fwd = jax.jit(functools.partial(lstm_forward, hidden_size=H))
    out = fwd(packed, x)
    out = jax.block_until_ready(out)
    assert out.shape == (B, NC) and out.dtype == jnp.float32
    print("KERNEL_OK")
</pallas_src>

<mosaic_0001>
module attributes {stable_mosaic.version = 11 : i64} {
  func.func @_fused_lstm_kernel(%arg0: i32, %arg1: memref<16x232xf32, #tpu.memory_space<vmem>>, %arg2: memref<232x256xf32, #tpu.memory_space<vmem>>, %arg3: memref<64x256xf32, #tpu.memory_space<vmem>>, %arg4: memref<1x256xf32, #tpu.memory_space<vmem>>, %arg5: memref<64x256xf32, #tpu.memory_space<vmem>>, %arg6: memref<64x256xf32, #tpu.memory_space<vmem>>, %arg7: memref<1x256xf32, #tpu.memory_space<vmem>>, %arg8: memref<64x256xf32, #tpu.memory_space<vmem>>, %arg9: memref<64x256xf32, #tpu.memory_space<vmem>>, %arg10: memref<1x256xf32, #tpu.memory_space<vmem>>, %arg11: memref<64x32xf32, #tpu.memory_space<vmem>>, %arg12: memref<1x32xf32, #tpu.memory_space<vmem>>, %arg13: memref<32x16xf32, #tpu.memory_space<vmem>>, %arg14: memref<1x16xf32, #tpu.memory_space<vmem>>, %arg15: memref<2x16xf32, #tpu.memory_space<vmem>>, %arg16: memref<16x32xf32, #tpu.memory_space<vmem>>, %arg17: memref<16x32xf32, #tpu.memory_space<vmem>>) attributes {dimension_semantics = [#tpu.dimension_semantics<arbitrary>], iteration_bounds = array<i64: 1>, scalar_prefetch = 0 : i64, scratch_operands = 2 : i64, tpu.core_type = #tpu.core_type<tc>, window_params = [{pipeline_mode = #tpu.pipeline_mode<synchronous>, transform_indices = @transform_0, window_bounds = array<i64: 16, 232>}, {pipeline_mode = #tpu.pipeline_mode<synchronous>, transform_indices = @transform_1, window_bounds = array<i64: 232, 256>}, {pipeline_mode = #tpu.pipeline_mode<synchronous>, transform_indices = @transform_2, window_bounds = array<i64: 64, 256>}, {pipeline_mode = #tpu.pipeline_mode<synchronous>, transform_indices = @transform_3, window_bounds = array<i64: 1, 256>}, {pipeline_mode = #tpu.pipeline_mode<synchronous>, transform_indices = @transform_4, window_bounds = array<i64: 64, 256>}, {pipeline_mode = #tpu.pipeline_mode<synchronous>, transform_indices = @transform_5, window_bounds = array<i64: 64, 256>}, {pipeline_mode = #tpu.pipeline_mode<synchronous>, transform_indices = @transform_6, window_bounds = array<i64: 1, 256>}, {pipeline_mode = #tpu.pipeline_mode<synchronous>, transform_indices = @transform_7, window_bounds = array<i64: 64, 256>}, {pipeline_mode = #tpu.pipeline_mode<synchronous>, transform_indices = @transform_8, window_bounds = array<i64: 64, 256>}, {pipeline_mode = #tpu.pipeline_mode<synchronous>, transform_indices = @transform_9, window_bounds = array<i64: 1, 256>}, {pipeline_mode = #tpu.pipeline_mode<synchronous>, transform_indices = @transform_10, window_bounds = array<i64: 64, 32>}, {pipeline_mode = #tpu.pipeline_mode<synchronous>, transform_indices = @transform_11, window_bounds = array<i64: 1, 32>}, {pipeline_mode = #tpu.pipeline_mode<synchronous>, transform_indices = @transform_12, window_bounds = array<i64: 32, 16>}, {pipeline_mode = #tpu.pipeline_mode<synchronous>, transform_indices = @transform_13, window_bounds = array<i64: 1, 16>}, {pipeline_mode = #tpu.pipeline_mode<synchronous>, transform_indices = @transform_14, window_bounds = array<i64: 2, 16>}]} {
    %c0 = arith.constant 0 : index
    %c0_0 = arith.constant 0 : index
    %0 = vector.load %arg1[%c0, %c0_0] : memref<16x232xf32, #tpu.memory_space<vmem>>, vector<16x232xf32>
    %c0_1 = arith.constant 0 : index
    %c0_2 = arith.constant 0 : index
    %1 = vector.load %arg2[%c0_1, %c0_2] : memref<232x256xf32, #tpu.memory_space<vmem>>, vector<232x256xf32>
    %cst = arith.constant dense<0.000000e+00> : vector<16x256xf32>
    %2 = tpu.matmul %0, %1, %cst {dimension_numbers = #tpu.dot_dimension_numbers<[1], [0], [0], [1], [0, 0, 1, 1], [], []>} : vector<16x232xf32>, vector<232x256xf32>, vector<16x256xf32> -> vector<16x256xf32>
    %c0_3 = arith.constant 0 : index
    %c0_4 = arith.constant 0 : index
    %3 = vector.load %arg4[%c0_3, %c0_4] : memref<1x256xf32, #tpu.memory_space<vmem>>, vector<1x256xf32>
    %4 = vector.broadcast %3 : vector<1x256xf32> to vector<16x256xf32>
    %5 = arith.addf %2, %4 : vector<16x256xf32>
    %c0_5 = arith.constant 0 : index
    %c0_6 = arith.constant 0 : index
    %6 = vector.load %arg3[%c0_5, %c0_6] : memref<64x256xf32, #tpu.memory_space<vmem>>, vector<64x256xf32>
    %cst_7 = arith.constant 0.000000e+00 : f32
    %7 = vector.broadcast %cst_7 : f32 to vector<2x32xf32>
    %cst_8 = arith.constant 0.000000e+00 : f32
    %8 = vector.broadcast %cst_8 : f32 to vector<2x32xf32>
    %cst_9 = arith.constant 0.000000e+00 : f32
    %9 = vector.broadcast %cst_9 : f32 to vector<2x32xf32>
    %cst_10 = arith.constant 0.000000e+00 : f32
    %10 = vector.broadcast %cst_10 : f32 to vector<2x32xf32>
    %11 = tpu.concatenate %7, %8 in 1 : vector<2x32xf32>, vector<2x32xf32> -> vector<2x64xf32>
    %cst_11 = arith.constant dense<0.000000e+00> : vector<2x256xf32>
    %12 = tpu.matmul %11, %6, %cst_11 {dimension_numbers = #tpu.dot_dimension_numbers<[1], [0], [0], [1], [0, 0, 1, 1], [], []>} : vector<2x64xf32>, vector<64x256xf32>, vector<2x256xf32> -> vector<2x256xf32>
    %13 = vector.extract_strided_slice %5 {offsets = [0, 0], sizes = [2, 128], strides = [1, 1]} : vector<16x256xf32> to vector<2x128xf32>
    %14 = vector.extract_strided_slice %12 {offsets = [0, 0], sizes = [2, 128], strides = [1, 1]} : vector<2x256xf32> to vector<2x128xf32>
    %15 = arith.addf %13, %14 : vector<2x128xf32>
    %16 = vector.extract_strided_slice %5 {offsets = [14, 128], sizes = [2, 128], strides = [1, 1]} : vector<16x256xf32> to vector<2x128xf32>
    %17 = vector.extract_strided_slice %12 {offsets = [0, 128], sizes = [2, 128], strides = [1, 1]} : vector<2x256xf32> to vector<2x128xf32>
    %18 = arith.addf %16, %17 : vector<2x128xf32>
    %19 = vector.extract_strided_slice %15 {offsets = [0, 0], sizes = [2, 96], strides = [1, 1]} : vector<2x128xf32> to vector<2x96xf32>
    %20 = arith.negf %19 : vector<2x96xf32>
    %21 = math.exp %20 : vector<2x96xf32>
    %cst_12 = arith.constant 1.000000e+00 : f32
    %22 = vector.broadcast %cst_12 : f32 to vector<2x96xf32>
    %23 = arith.addf %22, %21 : vector<2x96xf32>
    %24 = arith.divf %22, %23 : vector<2x96xf32>
    %25 = vector.extract_strided_slice %24 {offsets = [0, 0], sizes = [2, 32], strides = [1, 1]} : vector<2x96xf32> to vector<2x32xf32>
    %26 = vector.extract_strided_slice %24 {offsets = [0, 32], sizes = [2, 32], strides = [1, 1]} : vector<2x96xf32> to vector<2x32xf32>
    %27 = vector.extract_strided_slice %24 {offsets = [0, 64], sizes = [2, 32], strides = [1, 1]} : vector<2x96xf32> to vector<2x32xf32>
    %28 = vector.extract_strided_slice %15 {offsets = [0, 96], sizes = [2, 32], strides = [1, 1]} : vector<2x128xf32> to vector<2x32xf32>
    %29 = math.tanh %28 : vector<2x32xf32>
    %30 = arith.mulf %26, %9 : vector<2x32xf32>
    %31 = arith.mulf %25, %29 : vector<2x32xf32>
    %32 = arith.addf %30, %31 : vector<2x32xf32>
    %33 = math.tanh %32 : vector<2x32xf32>
    %34 = arith.mulf %27, %33 : vector<2x32xf32>
    %35 = vector.extract_strided_slice %18 {offsets = [0, 0], sizes = [2, 96], strides = [1, 1]} : vector<2x128xf32> to vector<2x96xf32>
    %36 = arith.negf %35 : vector<2x96xf32>
    %37 = math.exp %36 : vector<2x96xf32>
    %cst_13 = arith.constant 1.000000e+00 : f32
    %38 = vector.broadcast %cst_13 : f32 to vector<2x96xf32>
    %39 = arith.addf %38, %37 : vector<2x96xf32>
    %40 = arith.divf %38, %39 : vector<2x96xf32>
    %41 = vector.extract_strided_slice %40 {offsets = [0, 0], sizes = [2, 32], strides = [1, 1]} : vector<2x96xf32> to vector<2x32xf32>
    %42 = vector.extract_strided_slice %40 {offsets = [0, 32], sizes = [2, 32], strides = [1, 1]} : vector<2x96xf32> to vector<2x32xf32>
    %43 = vector.extract_strided_slice %40 {offsets = [0, 64], sizes = [2, 32], strides = [1, 1]} : vector<2x96xf32> to vector<2x32xf32>
    %44 = vector.extract_strided_slice %18 {offsets = [0, 96], sizes = [2, 32], strides = [1, 1]} : vector<2x128xf32> to vector<2x32xf32>
    %45 = math.tanh %44 : vector<2x32xf32>
    %46 = arith.mulf %42, %10 : vector<2x32xf32>
    %47 = arith.mulf %41, %45 : vector<2x32xf32>
    %48 = arith.addf %46, %47 : vector<2x32xf32>
    %49 = math.tanh %48 : vector<2x32xf32>
    %50 = arith.mulf %43, %49 : vector<2x32xf32>
    %c0_14 = arith.constant 0 : index
    %c0_15 = arith.constant 0 : index
    %51 = vector.load %arg16[%c0_14, %c0_15] : memref<16x32xf32, #tpu.memory_space<vmem>>, vector<2x32xf32>
    tpu.vector_store %arg16[%c0_14, %c0_15], %34 {strides = array<i32>} : memref<16x32xf32, #tpu.memory_space<vmem>>, vector<2x32xf32>,
    %c14 = arith.constant 14 : index
    %c0_16 = arith.constant 0 : index
    %52 = vector.load %arg17[%c14, %c0_16] : memref<16x32xf32, #tpu.memory_space<vmem>>, vector<2x32xf32>
    tpu.vector_store %arg17[%c14, %c0_16], %50 {strides = array<i32>} : memref<16x32xf32, #tpu.memory_space<vmem>>, vector<2x32xf32>,
    %53 = tpu.concatenate %34, %50 in 1 : vector<2x32xf32>, vector<2x32xf32> -> vector<2x64xf32>
    %cst_17 = arith.constant dense<0.000000e+00> : vector<2x256xf32>
    %54 = tpu.matmul %53, %6, %cst_17 {dimension_numbers = #tpu.dot_dimension_numbers<[1], [0], [0], [1], [0, 0, 1, 1], [], []>} : vector<2x64xf32>, vector<64x256xf32>, vector<2x256xf32> -> vector<2x256xf32>
    %55 = vector.extract_strided_slice %5 {offsets = [2, 0], sizes = [2, 128], strides = [1, 1]} : vector<16x256xf32> to vector<2x128xf32>
    %56 = vector.extract_strided_slice %54 {offsets = [0, 0], sizes = [2, 128], strides = [1, 1]} : vector<2x256xf32> to vector<2x128xf32>
    %57 = arith.addf %55, %56 : vector<2x128xf32>
    %58 = vector.extract_strided_slice %5 {offsets = [12, 128], sizes = [2, 128], strides = [1, 1]} : vector<16x256xf32> to vector<2x128xf32>
    %59 = vector.extract_strided_slice %54 {offsets = [0, 128], sizes = [2, 128], strides = [1, 1]} : vector<2x256xf32> to vector<2x128xf32>
    %60 = arith.addf %58, %59 : vector<2x128xf32>
    %61 = vector.extract_strided_slice %57 {offsets = [0, 0], sizes = [2, 96], strides = [1, 1]} : vector<2x128xf32> to vector<2x96xf32>
    %62 = arith.negf %61 : vector<2x96xf32>
    %63 = math.exp %62 : vector<2x96xf32>
    %cst_18 = arith.constant 1.000000e+00 : f32
    %64 = vector.broadcast %cst_18 : f32 to vector<2x96xf32>
    %65 = arith.addf %64, %63 : vector<2x96xf32>
    %66 = arith.divf %64, %65 : vector<2x96xf32>
    %67 = vector.extract_strided_slice %66 {offsets = [0, 0], sizes = [2, 32], strides = [1, 1]} : vector<2x96xf32> to vector<2x32xf32>
    %68 = vector.extract_strided_slice %66 {offsets = [0, 32], sizes = [2, 32], strides = [1, 1]} : vector<2x96xf32> to vector<2x32xf32>
    %69 = vector.extract_strided_slice %66 {offsets = [0, 64], sizes = [2, 32], strides = [1, 1]} : vector<2x96xf32> to vector<2x32xf32>
    %70 = vector.extract_strided_slice %57 {offsets = [0, 96], sizes = [2, 32], strides = [1, 1]} : vector<2x128xf32> to vector<2x32xf32>
    %71 = math.tanh %70 : vector<2x32xf32>
    %72 = arith.mulf %68, %32 : vector<2x32xf32>
    %73 = arith.mulf %67, %71 : vector<2x32xf32>
    %74 = arith.addf %72, %73 : vector<2x32xf32>
    %75 = math.tanh %74 : vector<2x32xf32>
    %76 = arith.mulf %69, %75 : vector<2x32xf32>
    %77 = vector.extract_strided_slice %60 {offsets = [0, 0], sizes = [2, 96], strides = [1, 1]} : vector<2x128xf32> to vector<2x96xf32>
    %78 = arith.negf %77 : vector<2x96xf32>
    %79 = math.exp %78 : vector<2x96xf32>
    %cst_19 = arith.constant 1.000000e+00 : f32
    %80 = vector.broadcast %cst_19 : f32 to vector<2x96xf32>
    %81 = arith.addf %80, %79 : vector<2x96xf32>
    %82 = arith.divf %80, %81 : vector<2x96xf32>
    %83 = vector.extract_strided_slice %82 {offsets = [0, 0], sizes = [2, 32], strides = [1, 1]} : vector<2x96xf32> to vector<2x32xf32>
    %84 = vector.extract_strided_slice %82 {offsets = [0, 32], sizes = [2, 32], strides = [1, 1]} : vector<2x96xf32> to vector<2x32xf32>
    %85 = vector.extract_strided_slice %82 {offsets = [0, 64], sizes = [2, 32], strides = [1, 1]} : vector<2x96xf32> to vector<2x32xf32>
    %86 = vector.extract_strided_slice %60 {offsets = [0, 96], sizes = [2, 32], strides = [1, 1]} : vector<2x128xf32> to vector<2x32xf32>
    %87 = math.tanh %86 : vector<2x32xf32>
    %88 = arith.mulf %84, %48 : vector<2x32xf32>
    %89 = arith.mulf %83, %87 : vector<2x32xf32>
    %90 = arith.addf %88, %89 : vector<2x32xf32>
    %91 = math.tanh %90 : vector<2x32xf32>
    %92 = arith.mulf %85, %91 : vector<2x32xf32>
    %c2 = arith.constant 2 : index
    %c0_20 = arith.constant 0 : index
    %93 = vector.load %arg16[%c2, %c0_20] : memref<16x32xf32, #tpu.memory_space<vmem>>, vector<2x32xf32>
    tpu.vector_store %arg16[%c2, %c0_20], %76 {strides = array<i32>} : memref<16x32xf32, #tpu.memory_space<vmem>>, vector<2x32xf32>,
    %c12 = arith.constant 12 : index
    %c0_21 = arith.constant 0 : index
    %94 = vector.load %arg17[%c12, %c0_21] : memref<16x32xf32, #tpu.memory_space<vmem>>, vector<2x32xf32>
    tpu.vector_store %arg17[%c12, %c0_21], %92 {strides = array<i32>} : memref<16x32xf32, #tpu.memory_space<vmem>>, vector<2x32xf32>,
    %95 = tpu.concatenate %76, %92 in 1 : vector<2x32xf32>, vector<2x32xf32> -> vector<2x64xf32>
    %cst_22 = arith.constant dense<0.000000e+00> : vector<2x256xf32>
    %96 = tpu.matmul %95, %6, %cst_22 {dimension_numbers = #tpu.dot_dimension_numbers<[1], [0], [0], [1], [0, 0, 1, 1], [], []>} : vector<2x64xf32>, vector<64x256xf32>, vector<2x256xf32> -> vector<2x256xf32>
    %97 = vector.extract_strided_slice %5 {offsets = [4, 0], sizes = [2, 128], strides = [1, 1]} : vector<16x256xf32> to vector<2x128xf32>
    %98 = vector.extract_strided_slice %96 {offsets = [0, 0], sizes = [2, 128], strides = [1, 1]} : vector<2x256xf32> to vector<2x128xf32>
    %99 = arith.addf %97, %98 : vector<2x128xf32>
    %100 = vector.extract_strided_slice %5 {offsets = [10, 128], sizes = [2, 128], strides = [1, 1]} : vector<16x256xf32> to vector<2x128xf32>
    %101 = vector.extract_strided_slice %96 {offsets = [0, 128], sizes = [2, 128], strides = [1, 1]} : vector<2x256xf32> to vector<2x128xf32>
    %102 = arith.addf %100, %101 : vector<2x128xf32>
    %103 = vector.extract_strided_slice %99 {offsets = [0, 0], sizes = [2, 96], strides = [1, 1]} : vector<2x128xf32> to vector<2x96xf32>
    %104 = arith.negf %103 : vector<2x96xf32>
    %105 = math.exp %104 : vector<2x96xf32>
    %cst_23 = arith.constant 1.000000e+00 : f32
    %106 = vector.broadcast %cst_23 : f32 to vector<2x96xf32>
    %107 = arith.addf %106, %105 : vector<2x96xf32>
    %108 = arith.divf %106, %107 : vector<2x96xf32>
    %109 = vector.extract_strided_slice %108 {offsets = [0, 0], sizes = [2, 32], strides = [1, 1]} : vector<2x96xf32> to vector<2x32xf32>
    %110 = vector.extract_strided_slice %108 {offsets = [0, 32], sizes = [2, 32], strides = [1, 1]} : vector<2x96xf32> to vector<2x32xf32>
    %111 = vector.extract_strided_slice %108 {offsets = [0, 64], sizes = [2, 32], strides = [1, 1]} : vector<2x96xf32> to vector<2x32xf32>
    %112 = vector.extract_strided_slice %99 {offsets = [0, 96], sizes = [2, 32], strides = [1, 1]} : vector<2x128xf32> to vector<2x32xf32>
    %113 = math.tanh %112 : vector<2x32xf32>
    %114 = arith.mulf %110, %74 : vector<2x32xf32>
    %115 = arith.mulf %109, %113 : vector<2x32xf32>
    %116 = arith.addf %114, %115 : vector<2x32xf32>
    %117 = math.tanh %116 : vector<2x32xf32>
    %118 = arith.mulf %111, %117 : vector<2x32xf32>
    %119 = vector.extract_strided_slice %102 {offsets = [0, 0], sizes = [2, 96], strides = [1, 1]} : vector<2x128xf32> to vector<2x96xf32>
    %120 = arith.negf %119 : vector<2x96xf32>
    %121 = math.exp %120 : vector<2x96xf32>
    %cst_24 = arith.constant 1.000000e+00 : f32
    %122 = vector.broadcast %cst_24 : f32 to vector<2x96xf32>
    %123 = arith.addf %122, %121 : vector<2x96xf32>
    %124 = arith.divf %122, %123 : vector<2x96xf32>
    %125 = vector.extract_strided_slice %124 {offsets = [0, 0], sizes = [2, 32], strides = [1, 1]} : vector<2x96xf32> to vector<2x32xf32>
    %126 = vector.extract_strided_slice %124 {offsets = [0, 32], sizes = [2, 32], strides = [1, 1]} : vector<2x96xf32> to vector<2x32xf32>
    %127 = vector.extract_strided_slice %124 {offsets = [0, 64], sizes = [2, 32], strides = [1, 1]} : vector<2x96xf32> to vector<2x32xf32>
    %128 = vector.extract_strided_slice %102 {offsets = [0, 96], sizes = [2, 32], strides = [1, 1]} : vector<2x128xf32> to vector<2x32xf32>
    %129 = math.tanh %128 : vector<2x32xf32>
    %130 = arith.mulf %126, %90 : vector<2x32xf32>
    %131 = arith.mulf %125, %129 : vector<2x32xf32>
    %132 = arith.addf %130, %131 : vector<2x32xf32>
    %133 = math.tanh %132 : vector<2x32xf32>
    %134 = arith.mulf %127, %133 : vector<2x32xf32>
    %c4 = arith.constant 4 : index
    %c0_25 = arith.constant 0 : index
    %135 = vector.load %arg16[%c4, %c0_25] : memref<16x32xf32, #tpu.memory_space<vmem>>, vector<2x32xf32>
    tpu.vector_store %arg16[%c4, %c0_25], %118 {strides = array<i32>} : memref<16x32xf32, #tpu.memory_space<vmem>>, vector<2x32xf32>,
    %c10 = arith.constant 10 : index
    %c0_26 = arith.constant 0 : index
    %136 = vector.load %arg17[%c10, %c0_26] : memref<16x32xf32, #tpu.memory_space<vmem>>, vector<2x32xf32>
    tpu.vector_store %arg17[%c10, %c0_26], %134 {strides = array<i32>} : memref<16x32xf32, #tpu.memory_space<vmem>>, vector<2x32xf32>,
    %137 = tpu.concatenate %118, %134 in 1 : vector<2x32xf32>, vector<2x32xf32> -> vector<2x64xf32>
    %cst_27 = arith.constant dense<0.000000e+00> : vector<2x256xf32>
    %138 = tpu.matmul %137, %6, %cst_27 {dimension_numbers = #tpu.dot_dimension_numbers<[1], [0], [0], [1], [0, 0, 1, 1], [], []>} : vector<2x64xf32>, vector<64x256xf32>, vector<2x256xf32> -> vector<2x256xf32>
    %139 = vector.extract_strided_slice %5 {offsets = [6, 0], sizes = [2, 128], strides = [1, 1]} : vector<16x256xf32> to vector<2x128xf32>
    %140 = vector.extract_strided_slice %138 {offsets = [0, 0], sizes = [2, 128], strides = [1, 1]} : vector<2x256xf32> to vector<2x128xf32>
    %141 = arith.addf %139, %140 : vector<2x128xf32>
    %142 = vector.extract_strided_slice %5 {offsets = [8, 128], sizes = [2, 128], strides = [1, 1]} : vector<16x256xf32> to vector<2x128xf32>
    %143 = vector.extract_strided_slice %138 {offsets = [0, 128], sizes = [2, 128], strides = [1, 1]} : vector<2x256xf32> to vector<2x128xf32>
    %144 = arith.addf %142, %143 : vector<2x128xf32>
    %145 = vector.extract_strided_slice %141 {offsets = [0, 0], sizes = [2, 96], strides = [1, 1]} : vector<2x128xf32> to vector<2x96xf32>
    %146 = arith.negf %145 : vector<2x96xf32>
    %147 = math.exp %146 : vector<2x96xf32>
    %cst_28 = arith.constant 1.000000e+00 : f32
    %148 = vector.broadcast %cst_28 : f32 to vector<2x96xf32>
    %149 = arith.addf %148, %147 : vector<2x96xf32>
    %150 = arith.divf %148, %149 : vector<2x96xf32>
    %151 = vector.extract_strided_slice %150 {offsets = [0, 0], sizes = [2, 32], strides = [1, 1]} : vector<2x96xf32> to vector<2x32xf32>
    %152 = vector.extract_strided_slice %150 {offsets = [0, 32], sizes = [2, 32], strides = [1, 1]} : vector<2x96xf32> to vector<2x32xf32>
    %153 = vector.extract_strided_slice %150 {offsets = [0, 64], sizes = [2, 32], strides = [1, 1]} : vector<2x96xf32> to vector<2x32xf32>
    %154 = vector.extract_strided_slice %141 {offsets = [0, 96], sizes = [2, 32], strides = [1, 1]} : vector<2x128xf32> to vector<2x32xf32>
    %155 = math.tanh %154 : vector<2x32xf32>
    %156 = arith.mulf %152, %116 : vector<2x32xf32>
    %157 = arith.mulf %151, %155 : vector<2x32xf32>
    %158 = arith.addf %156, %157 : vector<2x32xf32>
    %159 = math.tanh %158 : vector<2x32xf32>
    %160 = arith.mulf %153, %159 : vector<2x32xf32>
    %161 = vector.extract_strided_slice %144 {offsets = [0, 0], sizes = [2, 96], strides = [1, 1]} : vector<2x128xf32> to vector<2x96xf32>
    %162 = arith.negf %161 : vector<2x96xf32>
    %163 = math.exp %162 : vector<2x96xf32>
    %cst_29 = arith.constant 1.000000e+00 : f32
    %164 = vector.broadcast %cst_29 : f32 to vector<2x96xf32>
    %165 = arith.addf %164, %163 : vector<2x96xf32>
    %166 = arith.divf %164, %165 : vector<2x96xf32>
    %167 = vector.extract_strided_slice %166 {offsets = [0, 0], sizes = [2, 32], strides = [1, 1]} : vector<2x96xf32> to vector<2x32xf32>
    %168 = vector.extract_strided_slice %166 {offsets = [0, 32], sizes = [2, 32], strides = [1, 1]} : vector<2x96xf32> to vector<2x32xf32>
    %169 = vector.extract_strided_slice %166 {offsets = [0, 64], sizes = [2, 32], strides = [1, 1]} : vector<2x96xf32> to vector<2x32xf32>
    %170 = vector.extract_strided_slice %144 {offsets = [0, 96], sizes = [2, 32], strides = [1, 1]} : vector<2x128xf32> to vector<2x32xf32>
    %171 = math.tanh %170 : vector<2x32xf32>
    %172 = arith.mulf %168, %132 : vector<2x32xf32>
    %173 = arith.mulf %167, %171 : vector<2x32xf32>
    %174 = arith.addf %172, %173 : vector<2x32xf32>
    %175 = math.tanh %174 : vector<2x32xf32>
    %176 = arith.mulf %169, %175 : vector<2x32xf32>
    %c6 = arith.constant 6 : index
    %c0_30 = arith.constant 0 : index
    %177 = vector.load %arg16[%c6, %c0_30] : memref<16x32xf32, #tpu.memory_space<vmem>>, vector<2x32xf32>
    tpu.vector_store %arg16[%c6, %c0_30], %160 {strides = array<i32>} : memref<16x32xf32, #tpu.memory_space<vmem>>, vector<2x32xf32>,
    %c8 = arith.constant 8 : index
    %c0_31 = arith.constant 0 : index
    %178 = vector.load %arg17[%c8, %c0_31] : memref<16x32xf32, #tpu.memory_space<vmem>>, vector<2x32xf32>
    tpu.vector_store %arg17[%c8, %c0_31], %176 {strides = array<i32>} : memref<16x32xf32, #tpu.memory_space<vmem>>, vector<2x32xf32>,
    %179 = tpu.concatenate %160, %176 in 1 : vector<2x32xf32>, vector<2x32xf32> -> vector<2x64xf32>
    %cst_32 = arith.constant dense<0.000000e+00> : vector<2x256xf32>
    %180 = tpu.matmul %179, %6, %cst_32 {dimension_numbers = #tpu.dot_dimension_numbers<[1], [0], [0], [1], [0, 0, 1, 1], [], []>} : vector<2x64xf32>, vector<64x256xf32>, vector<2x256xf32> -> vector<2x256xf32>
    %181 = vector.extract_strided_slice %5 {offsets = [8, 0], sizes = [2, 128], strides = [1, 1]} : vector<16x256xf32> to vector<2x128xf32>
    %182 = vector.extract_strided_slice %180 {offsets = [0, 0], sizes = [2, 128], strides = [1, 1]} : vector<2x256xf32> to vector<2x128xf32>
    %183 = arith.addf %181, %182 : vector<2x128xf32>
    %184 = vector.extract_strided_slice %5 {offsets = [6, 128], sizes = [2, 128], strides = [1, 1]} : vector<16x256xf32> to vector<2x128xf32>
    %185 = vector.extract_strided_slice %180 {offsets = [0, 128], sizes = [2, 128], strides = [1, 1]} : vector<2x256xf32> to vector<2x128xf32>
    %186 = arith.addf %184, %185 : vector<2x128xf32>
    %187 = vector.extract_strided_slice %183 {offsets = [0, 0], sizes = [2, 96], strides = [1, 1]} : vector<2x128xf32> to vector<2x96xf32>
    %188 = arith.negf %187 : vector<2x96xf32>
    %189 = math.exp %188 : vector<2x96xf32>
    %cst_33 = arith.constant 1.000000e+00 : f32
    %190 = vector.broadcast %cst_33 : f32 to vector<2x96xf32>
    %191 = arith.addf %190, %189 : vector<2x96xf32>
    %192 = arith.divf %190, %191 : vector<2x96xf32>
    %193 = vector.extract_strided_slice %192 {offsets = [0, 0], sizes = [2, 32], strides = [1, 1]} : vector<2x96xf32> to vector<2x32xf32>
    %194 = vector.extract_strided_slice %192 {offsets = [0, 32], sizes = [2, 32], strides = [1, 1]} : vector<2x96xf32> to vector<2x32xf32>
    %195 = vector.extract_strided_slice %192 {offsets = [0, 64], sizes = [2, 32], strides = [1, 1]} : vector<2x96xf32> to vector<2x32xf32>
    %196 = vector.extract_strided_slice %183 {offsets = [0, 96], sizes = [2, 32], strides = [1, 1]} : vector<2x128xf32> to vector<2x32xf32>
    %197 = math.tanh %196 : vector<2x32xf32>
    %198 = arith.mulf %194, %158 : vector<2x32xf32>
    %199 = arith.mulf %193, %197 : vector<2x32xf32>
    %200 = arith.addf %198, %199 : vector<2x32xf32>
    %201 = math.tanh %200 : vector<2x32xf32>
    %202 = arith.mulf %195, %201 : vector<2x32xf32>
    %203 = vector.extract_strided_slice %186 {offsets = [0, 0], sizes = [2, 96], strides = [1, 1]} : vector<2x128xf32> to vector<2x96xf32>
    %204 = arith.negf %203 : vector<2x96xf32>
    %205 = math.exp %204 : vector<2x96xf32>
    %cst_34 = arith.constant 1.000000e+00 : f32
    %206 = vector.broadcast %cst_34 : f32 to vector<2x96xf32>
    %207 = arith.addf %206, %205 : vector<2x96xf32>
    %208 = arith.divf %206, %207 : vector<2x96xf32>
    %209 = vector.extract_strided_slice %208 {offsets = [0, 0], sizes = [2, 32], strides = [1, 1]} : vector<2x96xf32> to vector<2x32xf32>
    %210 = vector.extract_strided_slice %208 {offsets = [0, 32], sizes = [2, 32], strides = [1, 1]} : vector<2x96xf32> to vector<2x32xf32>
    %211 = vector.extract_strided_slice %208 {offsets = [0, 64], sizes = [2, 32], strides = [1, 1]} : vector<2x96xf32> to vector<2x32xf32>
    %212 = vector.extract_strided_slice %186 {offsets = [0, 96], sizes = [2, 32], strides = [1, 1]} : vector<2x128xf32> to vector<2x32xf32>
    %213 = math.tanh %212 : vector<2x32xf32>
    %214 = arith.mulf %210, %174 : vector<2x32xf32>
    %215 = arith.mulf %209, %213 : vector<2x32xf32>
    %216 = arith.addf %214, %215 : vector<2x32xf32>
    %217 = math.tanh %216 : vector<2x32xf32>
    %218 = arith.mulf %211, %217 : vector<2x32xf32>
    %c8_35 = arith.constant 8 : index
    %c0_36 = arith.constant 0 : index
    %219 = vector.load %arg16[%c8_35, %c0_36] : memref<16x32xf32, #tpu.memory_space<vmem>>, vector<2x32xf32>
    tpu.vector_store %arg16[%c8_35, %c0_36], %202 {strides = array<i32>} : memref<16x32xf32, #tpu.memory_space<vmem>>, vector<2x32xf32>,
    %c6_37 = arith.constant 6 : index
    %c0_38 = arith.constant 0 : index
    %220 = vector.load %arg17[%c6_37, %c0_38] : memref<16x32xf32, #tpu.memory_space<vmem>>, vector<2x32xf32>
    tpu.vector_store %arg17[%c6_37, %c0_38], %218 {strides = array<i32>} : memref<16x32xf32, #tpu.memory_space<vmem>>, vector<2x32xf32>,
    %221 = tpu.concatenate %202, %218 in 1 : vector<2x32xf32>, vector<2x32xf32> -> vector<2x64xf32>
    %cst_39 = arith.constant dense<0.000000e+00> : vector<2x256xf32>
    %222 = tpu.matmul %221, %6, %cst_39 {dimension_numbers = #tpu.dot_dimension_numbers<[1], [0], [0], [1], [0, 0, 1, 1], [], []>} : vector<2x64xf32>, vector<64x256xf32>, vector<2x256xf32> -> vector<2x256xf32>
    %223 = vector.extract_strided_slice %5 {offsets = [10, 0], sizes = [2, 128], strides = [1, 1]} : vector<16x256xf32> to vector<2x128xf32>
    %224 = vector.extract_strided_slice %222 {offsets = [0, 0], sizes = [2, 128], strides = [1, 1]} : vector<2x256xf32> to vector<2x128xf32>
    %225 = arith.addf %223, %224 : vector<2x128xf32>
    %226 = vector.extract_strided_slice %5 {offsets = [4, 128], sizes = [2, 128], strides = [1, 1]} : vector<16x256xf32> to vector<2x128xf32>
    %227 = vector.extract_strided_slice %222 {offsets = [0, 128], sizes = [2, 128], strides = [1, 1]} : vector<2x256xf32> to vector<2x128xf32>
    %228 = arith.addf %226, %227 : vector<2x128xf32>
    %229 = vector.extract_strided_slice %225 {offsets = [0, 0], sizes = [2, 96], strides = [1, 1]} : vector<2x128xf32> to vector<2x96xf32>
    %230 = arith.negf %229 : vector<2x96xf32>
    %231 = math.exp %230 : vector<2x96xf32>
    %cst_40 = arith.constant 1.000000e+00 : f32
    %232 = vector.broadcast %cst_40 : f32 to vector<2x96xf32>
    %233 = arith.addf %232, %231 : vector<2x96xf32>
    %234 = arith.divf %232, %233 : vector<2x96xf32>
    %235 = vector.extract_strided_slice %234 {offsets = [0, 0], sizes = [2, 32], strides = [1, 1]} : vector<2x96xf32> to vector<2x32xf32>
    %236 = vector.extract_strided_slice %234 {offsets = [0, 32], sizes = [2, 32], strides = [1, 1]} : vector<2x96xf32> to vector<2x32xf32>
    %237 = vector.extract_strided_slice %234 {offsets = [0, 64], sizes = [2, 32], strides = [1, 1]} : vector<2x96xf32> to vector<2x32xf32>
    %238 = vector.extract_strided_slice %225 {offsets = [0, 96], sizes = [2, 32], strides = [1, 1]} : vector<2x128xf32> to vector<2x32xf32>
    %239 = math.tanh %238 : vector<2x32xf32>
    %240 = arith.mulf %236, %200 : vector<2x32xf32>
    %241 = arith.mulf %235, %239 : vector<2x32xf32>
    %242 = arith.addf %240, %241 : vector<2x32xf32>
    %243 = math.tanh %242 : vector<2x32xf32>
    %244 = arith.mulf %237, %243 : vector<2x32xf32>
    %245 = vector.extract_strided_slice %228 {offsets = [0, 0], sizes = [2, 96], strides = [1, 1]} : vector<2x128xf32> to vector<2x96xf32>
    %246 = arith.negf %245 : vector<2x96xf32>
    %247 = math.exp %246 : vector<2x96xf32>
    %cst_41 = arith.constant 1.000000e+00 : f32
    %248 = vector.broadcast %cst_41 : f32 to vector<2x96xf32>
    %249 = arith.addf %248, %247 : vector<2x96xf32>
    %250 = arith.divf %248, %249 : vector<2x96xf32>
    %251 = vector.extract_strided_slice %250 {offsets = [0, 0], sizes = [2, 32], strides = [1, 1]} : vector<2x96xf32> to vector<2x32xf32>
    %252 = vector.extract_strided_slice %250 {offsets = [0, 32], sizes = [2, 32], strides = [1, 1]} : vector<2x96xf32> to vector<2x32xf32>
    %253 = vector.extract_strided_slice %250 {offsets = [0, 64], sizes = [2, 32], strides = [1, 1]} : vector<2x96xf32> to vector<2x32xf32>
    %254 = vector.extract_strided_slice %228 {offsets = [0, 96], sizes = [2, 32], strides = [1, 1]} : vector<2x128xf32> to vector<2x32xf32>
    %255 = math.tanh %254 : vector<2x32xf32>
    %256 = arith.mulf %252, %216 : vector<2x32xf32>
    %257 = arith.mulf %251, %255 : vector<2x32xf32>
    %258 = arith.addf %256, %257 : vector<2x32xf32>
    %259 = math.tanh %258 : vector<2x32xf32>
    %260 = arith.mulf %253, %259 : vector<2x32xf32>
    %c10_42 = arith.constant 10 : index
    %c0_43 = arith.constant 0 : index
    %261 = vector.load %arg16[%c10_42, %c0_43] : memref<16x32xf32, #tpu.memory_space<vmem>>, vector<2x32xf32>
    tpu.vector_store %arg16[%c10_42, %c0_43], %244 {strides = array<i32>} : memref<16x32xf32, #tpu.memory_space<vmem>>, vector<2x32xf32>,
    %c4_44 = arith.constant 4 : index
    %c0_45 = arith.constant 0 : index
    %262 = vector.load %arg17[%c4_44, %c0_45] : memref<16x32xf32, #tpu.memory_space<vmem>>, vector<2x32xf32>
    tpu.vector_store %arg17[%c4_44, %c0_45], %260 {strides = array<i32>} : memref<16x32xf32, #tpu.memory_space<vmem>>, vector<2x32xf32>,
    %263 = tpu.concatenate %244, %260 in 1 : vector<2x32xf32>, vector<2x32xf32> -> vector<2x64xf32>
    %cst_46 = arith.constant dense<0.000000e+00> : vector<2x256xf32>
    %264 = tpu.matmul %263, %6, %cst_46 {dimension_numbers = #tpu.dot_dimension_numbers<[1], [0], [0], [1], [0, 0, 1, 1], [], []>} : vector<2x64xf32>, vector<64x256xf32>, vector<2x256xf32> -> vector<2x256xf32>
    %265 = vector.extract_strided_slice %5 {offsets = [12, 0], sizes = [2, 128], strides = [1, 1]} : vector<16x256xf32> to vector<2x128xf32>
    %266 = vector.extract_strided_slice %264 {offsets = [0, 0], sizes = [2, 128], strides = [1, 1]} : vector<2x256xf32> to vector<2x128xf32>
    %267 = arith.addf %265, %266 : vector<2x128xf32>
    %268 = vector.extract_strided_slice %5 {offsets = [2, 128], sizes = [2, 128], strides = [1, 1]} : vector<16x256xf32> to vector<2x128xf32>
    %269 = vector.extract_strided_slice %264 {offsets = [0, 128], sizes = [2, 128], strides = [1, 1]} : vector<2x256xf32> to vector<2x128xf32>
    %270 = arith.addf %268, %269 : vector<2x128xf32>
    %271 = vector.extract_strided_slice %267 {offsets = [0, 0], sizes = [2, 96], strides = [1, 1]} : vector<2x128xf32> to vector<2x96xf32>
    %272 = arith.negf %271 : vector<2x96xf32>
    %273 = math.exp %272 : vector<2x96xf32>
    %cst_47 = arith.constant 1.000000e+00 : f32
    %274 = vector.broadcast %cst_47 : f32 to vector<2x96xf32>
    %275 = arith.addf %274, %273 : vector<2x96xf32>
    %276 = arith.divf %274, %275 : vector<2x96xf32>
    %277 = vector.extract_strided_slice %276 {offsets = [0, 0], sizes = [2, 32], strides = [1, 1]} : vector<2x96xf32> to vector<2x32xf32>
    %278 = vector.extract_strided_slice %276 {offsets = [0, 32], sizes = [2, 32], strides = [1, 1]} : vector<2x96xf32> to vector<2x32xf32>
    %279 = vector.extract_strided_slice %276 {offsets = [0, 64], sizes = [2, 32], strides = [1, 1]} : vector<2x96xf32> to vector<2x32xf32>
    %280 = vector.extract_strided_slice %267 {offsets = [0, 96], sizes = [2, 32], strides = [1, 1]} : vector<2x128xf32> to vector<2x32xf32>
    %281 = math.tanh %280 : vector<2x32xf32>
    %282 = arith.mulf %278, %242 : vector<2x32xf32>
    %283 = arith.mulf %277, %281 : vector<2x32xf32>
    %284 = arith.addf %282, %283 : vector<2x32xf32>
    %285 = math.tanh %284 : vector<2x32xf32>
    %286 = arith.mulf %279, %285 : vector<2x32xf32>
    %287 = vector.extract_strided_slice %270 {offsets = [0, 0], sizes = [2, 96], strides = [1, 1]} : vector<2x128xf32> to vector<2x96xf32>
    %288 = arith.negf %287 : vector<2x96xf32>
    %289 = math.exp %288 : vector<2x96xf32>
    %cst_48 = arith.constant 1.000000e+00 : f32
    %290 = vector.broadcast %cst_48 : f32 to vector<2x96xf32>
    %291 = arith.addf %290, %289 : vector<2x96xf32>
    %292 = arith.divf %290, %291 : vector<2x96xf32>
    %293 = vector.extract_strided_slice %292 {offsets = [0, 0], sizes = [2, 32], strides = [1, 1]} : vector<2x96xf32> to vector<2x32xf32>
    %294 = vector.extract_strided_slice %292 {offsets = [0, 32], sizes = [2, 32], strides = [1, 1]} : vector<2x96xf32> to vector<2x32xf32>
    %295 = vector.extract_strided_slice %292 {offsets = [0, 64], sizes = [2, 32], strides = [1, 1]} : vector<2x96xf32> to vector<2x32xf32>
    %296 = vector.extract_strided_slice %270 {offsets = [0, 96], sizes = [2, 32], strides = [1, 1]} : vector<2x128xf32> to vector<2x32xf32>
    %297 = math.tanh %296 : vector<2x32xf32>
    %298 = arith.mulf %294, %258 : vector<2x32xf32>
    %299 = arith.mulf %293, %297 : vector<2x32xf32>
    %300 = arith.addf %298, %299 : vector<2x32xf32>
    %301 = math.tanh %300 : vector<2x32xf32>
    %302 = arith.mulf %295, %301 : vector<2x32xf32>
    %c12_49 = arith.constant 12 : index
    %c0_50 = arith.constant 0 : index
    %303 = vector.load %arg16[%c12_49, %c0_50] : memref<16x32xf32, #tpu.memory_space<vmem>>, vector<2x32xf32>
    tpu.vector_store %arg16[%c12_49, %c0_50], %286 {strides = array<i32>} : memref<16x32xf32, #tpu.memory_space<vmem>>, vector<2x32xf32>,
    %c2_51 = arith.constant 2 : index
    %c0_52 = arith.constant 0 : index
    %304 = vector.load %arg17[%c2_51, %c0_52] : memref<16x32xf32, #tpu.memory_space<vmem>>, vector<2x32xf32>
    tpu.vector_store %arg17[%c2_51, %c0_52], %302 {strides = array<i32>} : memref<16x32xf32, #tpu.memory_space<vmem>>, vector<2x32xf32>,
    %305 = tpu.concatenate %286, %302 in 1 : vector<2x32xf32>, vector<2x32xf32> -> vector<2x64xf32>
    %cst_53 = arith.constant dense<0.000000e+00> : vector<2x256xf32>
    %306 = tpu.matmul %305, %6, %cst_53 {dimension_numbers = #tpu.dot_dimension_numbers<[1], [0], [0], [1], [0, 0, 1, 1], [], []>} : vector<2x64xf32>, vector<64x256xf32>, vector<2x256xf32> -> vector<2x256xf32>
    %307 = vector.extract_strided_slice %5 {offsets = [14, 0], sizes = [2, 128], strides = [1, 1]} : vector<16x256xf32> to vector<2x128xf32>
    %308 = vector.extract_strided_slice %306 {offsets = [0, 0], sizes = [2, 128], strides = [1, 1]} : vector<2x256xf32> to vector<2x128xf32>
    %309 = arith.addf %307, %308 : vector<2x128xf32>
    %310 = vector.extract_strided_slice %5 {offsets = [0, 128], sizes = [2, 128], strides = [1, 1]} : vector<16x256xf32> to vector<2x128xf32>
    %311 = vector.extract_strided_slice %306 {offsets = [0, 128], sizes = [2, 128], strides = [1, 1]} : vector<2x256xf32> to vector<2x128xf32>
    %312 = arith.addf %310, %311 : vector<2x128xf32>
    %313 = vector.extract_strided_slice %309 {offsets = [0, 0], sizes = [2, 96], strides = [1, 1]} : vector<2x128xf32> to vector<2x96xf32>
    %314 = arith.negf %313 : vector<2x96xf32>
    %315 = math.exp %314 : vector<2x96xf32>
    %cst_54 = arith.constant 1.000000e+00 : f32
    %316 = vector.broadcast %cst_54 : f32 to vector<2x96xf32>
    %317 = arith.addf %316, %315 : vector<2x96xf32>
    %318 = arith.divf %316, %317 : vector<2x96xf32>
    %319 = vector.extract_strided_slice %318 {offsets = [0, 0], sizes = [2, 32], strides = [1, 1]} : vector<2x96xf32> to vector<2x32xf32>
    %320 = vector.extract_strided_slice %318 {offsets = [0, 32], sizes = [2, 32], strides = [1, 1]} : vector<2x96xf32> to vector<2x32xf32>
    %321 = vector.extract_strided_slice %318 {offsets = [0, 64], sizes = [2, 32], strides = [1, 1]} : vector<2x96xf32> to vector<2x32xf32>
    %322 = vector.extract_strided_slice %309 {offsets = [0, 96], sizes = [2, 32], strides = [1, 1]} : vector<2x128xf32> to vector<2x32xf32>
    %323 = math.tanh %322 : vector<2x32xf32>
    %324 = arith.mulf %320, %284 : vector<2x32xf32>
    %325 = arith.mulf %319, %323 : vector<2x32xf32>
    %326 = arith.addf %324, %325 : vector<2x32xf32>
    %327 = math.tanh %326 : vector<2x32xf32>
    %328 = arith.mulf %321, %327 : vector<2x32xf32>
    %329 = vector.extract_strided_slice %312 {offsets = [0, 0], sizes = [2, 96], strides = [1, 1]} : vector<2x128xf32> to vector<2x96xf32>
    %330 = arith.negf %329 : vector<2x96xf32>
    %331 = math.exp %330 : vector<2x96xf32>
    %cst_55 = arith.constant 1.000000e+00 : f32
    %332 = vector.broadcast %cst_55 : f32 to vector<2x96xf32>
    %333 = arith.addf %332, %331 : vector<2x96xf32>
    %334 = arith.divf %332, %333 : vector<2x96xf32>
    %335 = vector.extract_strided_slice %334 {offsets = [0, 0], sizes = [2, 32], strides = [1, 1]} : vector<2x96xf32> to vector<2x32xf32>
    %336 = vector.extract_strided_slice %334 {offsets = [0, 32], sizes = [2, 32], strides = [1, 1]} : vector<2x96xf32> to vector<2x32xf32>
    %337 = vector.extract_strided_slice %334 {offsets = [0, 64], sizes = [2, 32], strides = [1, 1]} : vector<2x96xf32> to vector<2x32xf32>
    %338 = vector.extract_strided_slice %312 {offsets = [0, 96], sizes = [2, 32], strides = [1, 1]} : vector<2x128xf32> to vector<2x32xf32>
    %339 = math.tanh %338 : vector<2x32xf32>
    %340 = arith.mulf %336, %300 : vector<2x32xf32>
    %341 = arith.mulf %335, %339 : vector<2x32xf32>
    %342 = arith.addf %340, %341 : vector<2x32xf32>
    %343 = math.tanh %342 : vector<2x32xf32>
    %344 = arith.mulf %337, %343 : vector<2x32xf32>
    %c14_56 = arith.constant 14 : index
    %c0_57 = arith.constant 0 : index
    %345 = vector.load %arg16[%c14_56, %c0_57] : memref<16x32xf32, #tpu.memory_space<vmem>>, vector<2x32xf32>
    tpu.vector_store %arg16[%c14_56, %c0_57], %328 {strides = array<i32>} : memref<16x32xf32, #tpu.memory_space<vmem>>, vector<2x32xf32>,
    %c0_58 = arith.constant 0 : index
    %c0_59 = arith.constant 0 : index
    %346 = vector.load %arg17[%c0_58, %c0_59] : memref<16x32xf32, #tpu.memory_space<vmem>>, vector<2x32xf32>
    tpu.vector_store %arg17[%c0_58, %c0_59], %344 {strides = array<i32>} : memref<16x32xf32, #tpu.memory_space<vmem>>, vector<2x32xf32>,
    %c0_60 = arith.constant 0 : index
    %c0_61 = arith.constant 0 : index
    %347 = vector.load %arg16[%c0_60, %c0_61] : memref<16x32xf32, #tpu.memory_space<vmem>>, vector<16x32xf32>
    %c0_62 = arith.constant 0 : index
    %c0_63 = arith.constant 0 : index
    %348 = vector.load %arg5[%c0_62, %c0_63] : memref<64x256xf32, #tpu.memory_space<vmem>>, vector<32x256xf32>
    %cst_64 = arith.constant dense<0.000000e+00> : vector<16x256xf32>
    %349 = tpu.matmul %347, %348, %cst_64 {dimension_numbers = #tpu.dot_dimension_numbers<[1], [0], [0], [1], [0, 0, 1, 1], [], []>} : vector<16x32xf32>, vector<32x256xf32>, vector<16x256xf32> -> vector<16x256xf32>
    %c0_65 = arith.constant 0 : index
    %c0_66 = arith.constant 0 : index
    %350 = vector.load %arg17[%c0_65, %c0_66] : memref<16x32xf32, #tpu.memory_space<vmem>>, vector<16x32xf32>
    %c32 = arith.constant 32 : index
    %c0_67 = arith.constant 0 : index
    %351 = vector.load %arg5[%c32, %c0_67] : memref<64x256xf32, #tpu.memory_space<vmem>>, vector<32x256xf32>
    %cst_68 = arith.constant dense<0.000000e+00> : vector<16x256xf32>
    %352 = tpu.matmul %350, %351, %cst_68 {dimension_numbers = #tpu.dot_dimension_numbers<[1], [0], [0], [1], [0, 0, 1, 1], [], []>} : vector<16x32xf32>, vector<32x256xf32>, vector<16x256xf32> -> vector<16x256xf32>
    %353 = arith.addf %349, %352 : vector<16x256xf32>
    %c0_69 = arith.constant 0 : index
    %c0_70 = arith.constant 0 : index
    %354 = vector.load %arg7[%c0_69, %c0_70] : memref<1x256xf32, #tpu.memory_space<vmem>>, vector<1x256xf32>
    %355 = vector.broadcast %354 : vector<1x256xf32> to vector<16x256xf32>
    %356 = arith.addf %353, %355 : vector<16x256xf32>
    %c0_71 = arith.constant 0 : index
    %c0_72 = arith.constant 0 : index
    %357 = vector.load %arg6[%c0_71, %c0_72] : memref<64x256xf32, #tpu.memory_space<vmem>>, vector<64x256xf32>
    %cst_73 = arith.constant 0.000000e+00 : f32
    %358 = vector.broadcast %cst_73 : f32 to vector<2x32xf32>
    %cst_74 = arith.constant 0.000000e+00 : f32
    %359 = vector.broadcast %cst_74 : f32 to vector<2x32xf32>
    %cst_75 = arith.constant 0.000000e+00 : f32
    %360 = vector.broadcast %cst_75 : f32 to vector<2x32xf32>
    %cst_76 = arith.constant 0.000000e+00 : f32
    %361 = vector.broadcast %cst_76 : f32 to vector<2x32xf32>
    %362 = tpu.concatenate %358, %359 in 1 : vector<2x32xf32>, vector<2x32xf32> -> vector<2x64xf32>
    %cst_77 = arith.constant dense<0.000000e+00> : vector<2x256xf32>
    %363 = tpu.matmul %362, %357, %cst_77 {dimension_numbers = #tpu.dot_dimension_numbers<[1], [0], [0], [1], [0, 0, 1, 1], [], []>} : vector<2x64xf32>, vector<64x256xf32>, vector<2x256xf32> -> vector<2x256xf32>
    %364 = vector.extract_strided_slice %356 {offsets = [0, 0], sizes = [2, 128], strides = [1, 1]} : vector<16x256xf32> to vector<2x128xf32>
    %365 = vector.extract_strided_slice %363 {offsets = [0, 0], sizes = [2, 128], strides = [1, 1]} : vector<2x256xf32> to vector<2x128xf32>
    %366 = arith.addf %364, %365 : vector<2x128xf32>
    %367 = vector.extract_strided_slice %356 {offsets = [14, 128], sizes = [2, 128], strides = [1, 1]} : vector<16x256xf32> to vector<2x128xf32>
    %368 = vector.extract_strided_slice %363 {offsets = [0, 128], sizes = [2, 128], strides = [1, 1]} : vector<2x256xf32> to vector<2x128xf32>
    %369 = arith.addf %367, %368 : vector<2x128xf32>
    %370 = vector.extract_strided_slice %366 {offsets = [0, 0], sizes = [2, 96], strides = [1, 1]} : vector<2x128xf32> to vector<2x96xf32>
    %371 = arith.negf %370 : vector<2x96xf32>
    %372 = math.exp %371 : vector<2x96xf32>
    %cst_78 = arith.constant 1.000000e+00 : f32
    %373 = vector.broadcast %cst_78 : f32 to vector<2x96xf32>
    %374 = arith.addf %373, %372 : vector<2x96xf32>
    %375 = arith.divf %373, %374 : vector<2x96xf32>
    %376 = vector.extract_strided_slice %375 {offsets = [0, 0], sizes = [2, 32], strides = [1, 1]} : vector<2x96xf32> to vector<2x32xf32>
    %377 = vector.extract_strided_slice %375 {offsets = [0, 32], sizes = [2, 32], strides = [1, 1]} : vector<2x96xf32> to vector<2x32xf32>
    %378 = vector.extract_strided_slice %375 {offsets = [0, 64], sizes = [2, 32], strides = [1, 1]} : vector<2x96xf32> to vector<2x32xf32>
    %379 = vector.extract_strided_slice %366 {offsets = [0, 96], sizes = [2, 32], strides = [1, 1]} : vector<2x128xf32> to vector<2x32xf32>
    %380 = math.tanh %379 : vector<2x32xf32>
    %381 = arith.mulf %377, %360 : vector<2x32xf32>
    %382 = arith.mulf %376, %380 : vector<2x32xf32>
    %383 = arith.addf %381, %382 : vector<2x32xf32>
    %384 = math.tanh %383 : vector<2x32xf32>
    %385 = arith.mulf %378, %384 : vector<2x32xf32>
    %386 = vector.extract_strided_slice %369 {offsets = [0, 0], sizes = [2, 96], strides = [1, 1]} : vector<2x128xf32> to vector<2x96xf32>
    %387 = arith.negf %386 : vector<2x96xf32>
    %388 = math.exp %387 : vector<2x96xf32>
    %cst_79 = arith.constant 1.000000e+00 : f32
    %389 = vector.broadcast %cst_79 : f32 to vector<2x96xf32>
    %390 = arith.addf %389, %388 : vector<2x96xf32>
    %391 = arith.divf %389, %390 : vector<2x96xf32>
    %392 = vector.extract_strided_slice %391 {offsets = [0, 0], sizes = [2, 32], strides = [1, 1]} : vector<2x96xf32> to vector<2x32xf32>
    %393 = vector.extract_strided_slice %391 {offsets = [0, 32], sizes = [2, 32], strides = [1, 1]} : vector<2x96xf32> to vector<2x32xf32>
    %394 = vector.extract_strided_slice %391 {offsets = [0, 64], sizes = [2, 32], strides = [1, 1]} : vector<2x96xf32> to vector<2x32xf32>
    %395 = vector.extract_strided_slice %369 {offsets = [0, 96], sizes = [2, 32], strides = [1, 1]} : vector<2x128xf32> to vector<2x32xf32>
    %396 = math.tanh %395 : vector<2x32xf32>
    %397 = arith.mulf %393, %361 : vector<2x32xf32>
    %398 = arith.mulf %392, %396 : vector<2x32xf32>
    %399 = arith.addf %397, %398 : vector<2x32xf32>
    %400 = math.tanh %399 : vector<2x32xf32>
    %401 = arith.mulf %394, %400 : vector<2x32xf32>
    %c0_80 = arith.constant 0 : index
    %c0_81 = arith.constant 0 : index
    %402 = vector.load %arg16[%c0_80, %c0_81] : memref<16x32xf32, #tpu.memory_space<vmem>>, vector<2x32xf32>
    tpu.vector_store %arg16[%c0_80, %c0_81], %385 {strides = array<i32>} : memref<16x32xf32, #tpu.memory_space<vmem>>, vector<2x32xf32>,
    %c14_82 = arith.constant 14 : index
    %c0_83 = arith.constant 0 : index
    %403 = vector.load %arg17[%c14_82, %c0_83] : memref<16x32xf32, #tpu.memory_space<vmem>>, vector<2x32xf32>
    tpu.vector_store %arg17[%c14_82, %c0_83], %401 {strides = array<i32>} : memref<16x32xf32, #tpu.memory_space<vmem>>, vector<2x32xf32>,
    %404 = tpu.concatenate %385, %401 in 1 : vector<2x32xf32>, vector<2x32xf32> -> vector<2x64xf32>
    %cst_84 = arith.constant dense<0.000000e+00> : vector<2x256xf32>
    %405 = tpu.matmul %404, %357, %cst_84 {dimension_numbers = #tpu.dot_dimension_numbers<[1], [0], [0], [1], [0, 0, 1, 1], [], []>} : vector<2x64xf32>, vector<64x256xf32>, vector<2x256xf32> -> vector<2x256xf32>
    %406 = vector.extract_strided_slice %356 {offsets = [2, 0], sizes = [2, 128], strides = [1, 1]} : vector<16x256xf32> to vector<2x128xf32>
    %407 = vector.extract_strided_slice %405 {offsets = [0, 0], sizes = [2, 128], strides = [1, 1]} : vector<2x256xf32> to vector<2x128xf32>
    %408 = arith.addf %406, %407 : vector<2x128xf32>
    %409 = vector.extract_strided_slice %356 {offsets = [12, 128], sizes = [2, 128], strides = [1, 1]} : vector<16x256xf32> to vector<2x128xf32>
    %410 = vector.extract_strided_slice %405 {offsets = [0, 128], sizes = [2, 128], strides = [1, 1]} : vector<2x256xf32> to vector<2x128xf32>
    %411 = arith.addf %409, %410 : vector<2x128xf32>
    %412 = vector.extract_strided_slice %408 {offsets = [0, 0], sizes = [2, 96], strides = [1, 1]} : vector<2x128xf32> to vector<2x96xf32>
    %413 = arith.negf %412 : vector<2x96xf32>
    %414 = math.exp %413 : vector<2x96xf32>
    %cst_85 = arith.constant 1.000000e+00 : f32
    %415 = vector.broadcast %cst_85 : f32 to vector<2x96xf32>
    %416 = arith.addf %415, %414 : vector<2x96xf32>
    %417 = arith.divf %415, %416 : vector<2x96xf32>
    %418 = vector.extract_strided_slice %417 {offsets = [0, 0], sizes = [2, 32], strides = [1, 1]} : vector<2x96xf32> to vector<2x32xf32>
    %419 = vector.extract_strided_slice %417 {offsets = [0, 32], sizes = [2, 32], strides = [1, 1]} : vector<2x96xf32> to vector<2x32xf32>
    %420 = vector.extract_strided_slice %417 {offsets = [0, 64], sizes = [2, 32], strides = [1, 1]} : vector<2x96xf32> to vector<2x32xf32>
    %421 = vector.extract_strided_slice %408 {offsets = [0, 96], sizes = [2, 32], strides = [1, 1]} : vector<2x128xf32> to vector<2x32xf32>
    %422 = math.tanh %421 : vector<2x32xf32>
    %423 = arith.mulf %419, %383 : vector<2x32xf32>
    %424 = arith.mulf %418, %422 : vector<2x32xf32>
    %425 = arith.addf %423, %424 : vector<2x32xf32>
    %426 = math.tanh %425 : vector<2x32xf32>
    %427 = arith.mulf %420, %426 : vector<2x32xf32>
    %428 = vector.extract_strided_slice %411 {offsets = [0, 0], sizes = [2, 96], strides = [1, 1]} : vector<2x128xf32> to vector<2x96xf32>
    %429 = arith.negf %428 : vector<2x96xf32>
    %430 = math.exp %429 : vector<2x96xf32>
    %cst_86 = arith.constant 1.000000e+00 : f32
    %431 = vector.broadcast %cst_86 : f32 to vector<2x96xf32>
    %432 = arith.addf %431, %430 : vector<2x96xf32>
    %433 = arith.divf %431, %432 : vector<2x96xf32>
    %434 = vector.extract_strided_slice %433 {offsets = [0, 0], sizes = [2, 32], strides = [1, 1]} : vector<2x96xf32> to vector<2x32xf32>
    %435 = vector.extract_strided_slice %433 {offsets = [0, 32], sizes = [2, 32], strides = [1, 1]} : vector<2x96xf32> to vector<2x32xf32>
    %436 = vector.extract_strided_slice %433 {offsets = [0, 64], sizes = [2, 32], strides = [1, 1]} : vector<2x96xf32> to vector<2x32xf32>
    %437 = vector.extract_strided_slice %411 {offsets = [0, 96], sizes = [2, 32], strides = [1, 1]} : vector<2x128xf32> to vector<2x32xf32>
    %438 = math.tanh %437 : vector<2x32xf32>
    %439 = arith.mulf %435, %399 : vector<2x32xf32>
    %440 = arith.mulf %434, %438 : vector<2x32xf32>
    %441 = arith.addf %439, %440 : vector<2x32xf32>
    %442 = math.tanh %441 : vector<2x32xf32>
    %443 = arith.mulf %436, %442 : vector<2x32xf32>
    %c2_87 = arith.constant 2 : index
    %c0_88 = arith.constant 0 : index
    %444 = vector.load %arg16[%c2_87, %c0_88] : memref<16x32xf32, #tpu.memory_space<vmem>>, vector<2x32xf32>
    tpu.vector_store %arg16[%c2_87, %c0_88], %427 {strides = array<i32>} : memref<16x32xf32, #tpu.memory_space<vmem>>, vector<2x32xf32>,
    %c12_89 = arith.constant 12 : index
    %c0_90 = arith.constant 0 : index
    %445 = vector.load %arg17[%c12_89, %c0_90] : memref<16x32xf32, #tpu.memory_space<vmem>>, vector<2x32xf32>
    tpu.vector_store %arg17[%c12_89, %c0_90], %443 {strides = array<i32>} : memref<16x32xf32, #tpu.memory_space<vmem>>, vector<2x32xf32>,
    %446 = tpu.concatenate %427, %443 in 1 : vector<2x32xf32>, vector<2x32xf32> -> vector<2x64xf32>
    %cst_91 = arith.constant dense<0.000000e+00> : vector<2x256xf32>
    %447 = tpu.matmul %446, %357, %cst_91 {dimension_numbers = #tpu.dot_dimension_numbers<[1], [0], [0], [1], [0, 0, 1, 1], [], []>} : vector<2x64xf32>, vector<64x256xf32>, vector<2x256xf32> -> vector<2x256xf32>
    %448 = vector.extract_strided_slice %356 {offsets = [4, 0], sizes = [2, 128], strides = [1, 1]} : vector<16x256xf32> to vector<2x128xf32>
    %449 = vector.extract_strided_slice %447 {offsets = [0, 0], sizes = [2, 128], strides = [1, 1]} : vector<2x256xf32> to vector<2x128xf32>
    %450 = arith.addf %448, %449 : vector<2x128xf32>
    %451 = vector.extract_strided_slice %356 {offsets = [10, 128], sizes = [2, 128], strides = [1, 1]} : vector<16x256xf32> to vector<2x128xf32>
    %452 = vector.extract_strided_slice %447 {offsets = [0, 128], sizes = [2, 128], strides = [1, 1]} : vector<2x256xf32> to vector<2x128xf32>
    %453 = arith.addf %451, %452 : vector<2x128xf32>
    %454 = vector.extract_strided_slice %450 {offsets = [0, 0], sizes = [2, 96], strides = [1, 1]} : vector<2x128xf32> to vector<2x96xf32>
    %455 = arith.negf %454 : vector<2x96xf32>
    %456 = math.exp %455 : vector<2x96xf32>
    %cst_92 = arith.constant 1.000000e+00 : f32
    %457 = vector.broadcast %cst_92 : f32 to vector<2x96xf32>
    %458 = arith.addf %457, %456 : vector<2x96xf32>
    %459 = arith.divf %457, %458 : vector<2x96xf32>
    %460 = vector.extract_strided_slice %459 {offsets = [0, 0], sizes = [2, 32], strides = [1, 1]} : vector<2x96xf32> to vector<2x32xf32>
    %461 = vector.extract_strided_slice %459 {offsets = [0, 32], sizes = [2, 32], strides = [1, 1]} : vector<2x96xf32> to vector<2x32xf32>
    %462 = vector.extract_strided_slice %459 {offsets = [0, 64], sizes = [2, 32], strides = [1, 1]} : vector<2x96xf32> to vector<2x32xf32>
    %463 = vector.extract_strided_slice %450 {offsets = [0, 96], sizes = [2, 32], strides = [1, 1]} : vector<2x128xf32> to vector<2x32xf32>
    %464 = math.tanh %463 : vector<2x32xf32>
    %465 = arith.mulf %461, %425 : vector<2x32xf32>
    %466 = arith.mulf %460, %464 : vector<2x32xf32>
    %467 = arith.addf %465, %466 : vector<2x32xf32>
    %468 = math.tanh %467 : vector<2x32xf32>
    %469 = arith.mulf %462, %468 : vector<2x32xf32>
    %470 = vector.extract_strided_slice %453 {offsets = [0, 0], sizes = [2, 96], strides = [1, 1]} : vector<2x128xf32> to vector<2x96xf32>
    %471 = arith.negf %470 : vector<2x96xf32>
    %472 = math.exp %471 : vector<2x96xf32>
    %cst_93 = arith.constant 1.000000e+00 : f32
    %473 = vector.broadcast %cst_93 : f32 to vector<2x96xf32>
    %474 = arith.addf %473, %472 : vector<2x96xf32>
    %475 = arith.divf %473, %474 : vector<2x96xf32>
    %476 = vector.extract_strided_slice %475 {offsets = [0, 0], sizes = [2, 32], strides = [1, 1]} : vector<2x96xf32> to vector<2x32xf32>
    %477 = vector.extract_strided_slice %475 {offsets = [0, 32], sizes = [2, 32], strides = [1, 1]} : vector<2x96xf32> to vector<2x32xf32>
    %478 = vector.extract_strided_slice %475 {offsets = [0, 64], sizes = [2, 32], strides = [1, 1]} : vector<2x96xf32> to vector<2x32xf32>
    %479 = vector.extract_strided_slice %453 {offsets = [0, 96], sizes = [2, 32], strides = [1, 1]} : vector<2x128xf32> to vector<2x32xf32>
    %480 = math.tanh %479 : vector<2x32xf32>
    %481 = arith.mulf %477, %441 : vector<2x32xf32>
    %482 = arith.mulf %476, %480 : vector<2x32xf32>
    %483 = arith.addf %481, %482 : vector<2x32xf32>
    %484 = math.tanh %483 : vector<2x32xf32>
    %485 = arith.mulf %478, %484 : vector<2x32xf32>
    %c4_94 = arith.constant 4 : index
    %c0_95 = arith.constant 0 : index
    %486 = vector.load %arg16[%c4_94, %c0_95] : memref<16x32xf32, #tpu.memory_space<vmem>>, vector<2x32xf32>
    tpu.vector_store %arg16[%c4_94, %c0_95], %469 {strides = array<i32>} : memref<16x32xf32, #tpu.memory_space<vmem>>, vector<2x32xf32>,
    %c10_96 = arith.constant 10 : index
    %c0_97 = arith.constant 0 : index
    %487 = vector.load %arg17[%c10_96, %c0_97] : memref<16x32xf32, #tpu.memory_space<vmem>>, vector<2x32xf32>
    tpu.vector_store %arg17[%c10_96, %c0_97], %485 {strides = array<i32>} : memref<16x32xf32, #tpu.memory_space<vmem>>, vector<2x32xf32>,
    %488 = tpu.concatenate %469, %485 in 1 : vector<2x32xf32>, vector<2x32xf32> -> vector<2x64xf32>
    %cst_98 = arith.constant dense<0.000000e+00> : vector<2x256xf32>
    %489 = tpu.matmul %488, %357, %cst_98 {dimension_numbers = #tpu.dot_dimension_numbers<[1], [0], [0], [1], [0, 0, 1, 1], [], []>} : vector<2x64xf32>, vector<64x256xf32>, vector<2x256xf32> -> vector<2x256xf32>
    %490 = vector.extract_strided_slice %356 {offsets = [6, 0], sizes = [2, 128], strides = [1, 1]} : vector<16x256xf32> to vector<2x128xf32>
    %491 = vector.extract_strided_slice %489 {offsets = [0, 0], sizes = [2, 128], strides = [1, 1]} : vector<2x256xf32> to vector<2x128xf32>
    %492 = arith.addf %490, %491 : vector<2x128xf32>
    %493 = vector.extract_strided_slice %356 {offsets = [8, 128], sizes = [2, 128], strides = [1, 1]} : vector<16x256xf32> to vector<2x128xf32>
    %494 = vector.extract_strided_slice %489 {offsets = [0, 128], sizes = [2, 128], strides = [1, 1]} : vector<2x256xf32> to vector<2x128xf32>
    %495 = arith.addf %493, %494 : vector<2x128xf32>
    %496 = vector.extract_strided_slice %492 {offsets = [0, 0], sizes = [2, 96], strides = [1, 1]} : vector<2x128xf32> to vector<2x96xf32>
    %497 = arith.negf %496 : vector<2x96xf32>
    %498 = math.exp %497 : vector<2x96xf32>
    %cst_99 = arith.constant 1.000000e+00 : f32
    %499 = vector.broadcast %cst_99 : f32 to vector<2x96xf32>
    %500 = arith.addf %499, %498 : vector<2x96xf32>
    %501 = arith.divf %499, %500 : vector<2x96xf32>
    %502 = vector.extract_strided_slice %501 {offsets = [0, 0], sizes = [2, 32], strides = [1, 1]} : vector<2x96xf32> to vector<2x32xf32>
    %503 = vector.extract_strided_slice %501 {offsets = [0, 32], sizes = [2, 32], strides = [1, 1]} : vector<2x96xf32> to vector<2x32xf32>
    %504 = vector.extract_strided_slice %501 {offsets = [0, 64], sizes = [2, 32], strides = [1, 1]} : vector<2x96xf32> to vector<2x32xf32>
    %505 = vector.extract_strided_slice %492 {offsets = [0, 96], sizes = [2, 32], strides = [1, 1]} : vector<2x128xf32> to vector<2x32xf32>
    %506 = math.tanh %505 : vector<2x32xf32>
    %507 = arith.mulf %503, %467 : vector<2x32xf32>
    %508 = arith.mulf %502, %506 : vector<2x32xf32>
    %509 = arith.addf %507, %508 : vector<2x32xf32>
    %510 = math.tanh %509 : vector<2x32xf32>
    %511 = arith.mulf %504, %510 : vector<2x32xf32>
    %512 = vector.extract_strided_slice %495 {offsets = [0, 0], sizes = [2, 96], strides = [1, 1]} : vector<2x128xf32> to vector<2x96xf32>
    %513 = arith.negf %512 : vector<2x96xf32>
    %514 = math.exp %513 : vector<2x96xf32>
    %cst_100 = arith.constant 1.000000e+00 : f32
    %515 = vector.broadcast %cst_100 : f32 to vector<2x96xf32>
    %516 = arith.addf %515, %514 : vector<2x96xf32>
    %517 = arith.divf %515, %516 : vector<2x96xf32>
    %518 = vector.extract_strided_slice %517 {offsets = [0, 0], sizes = [2, 32], strides = [1, 1]} : vector<2x96xf32> to vector<2x32xf32>
    %519 = vector.extract_strided_slice %517 {offsets = [0, 32], sizes = [2, 32], strides = [1, 1]} : vector<2x96xf32> to vector<2x32xf32>
    %520 = vector.extract_strided_slice %517 {offsets = [0, 64], sizes = [2, 32], strides = [1, 1]} : vector<2x96xf32> to vector<2x32xf32>
    %521 = vector.extract_strided_slice %495 {offsets = [0, 96], sizes = [2, 32], strides = [1, 1]} : vector<2x128xf32> to vector<2x32xf32>
    %522 = math.tanh %521 : vector<2x32xf32>
    %523 = arith.mulf %519, %483 : vector<2x32xf32>
    %524 = arith.mulf %518, %522 : vector<2x32xf32>
    %525 = arith.addf %523, %524 : vector<2x32xf32>
    %526 = math.tanh %525 : vector<2x32xf32>
    %527 = arith.mulf %520, %526 : vector<2x32xf32>
    %c6_101 = arith.constant 6 : index
    %c0_102 = arith.constant 0 : index
    %528 = vector.load %arg16[%c6_101, %c0_102] : memref<16x32xf32, #tpu.memory_space<vmem>>, vector<2x32xf32>
    tpu.vector_store %arg16[%c6_101, %c0_102], %511 {strides = array<i32>} : memref<16x32xf32, #tpu.memory_space<vmem>>, vector<2x32xf32>,
    %c8_103 = arith.constant 8 : index
    %c0_104 = arith.constant 0 : index
    %529 = vector.load %arg17[%c8_103, %c0_104] : memref<16x32xf32, #tpu.memory_space<vmem>>, vector<2x32xf32>
    tpu.vector_store %arg17[%c8_103, %c0_104], %527 {strides = array<i32>} : memref<16x32xf32, #tpu.memory_space<vmem>>, vector<2x32xf32>,
    %530 = tpu.concatenate %511, %527 in 1 : vector<2x32xf32>, vector<2x32xf32> -> vector<2x64xf32>
    %cst_105 = arith.constant dense<0.000000e+00> : vector<2x256xf32>
    %531 = tpu.matmul %530, %357, %cst_105 {dimension_numbers = #tpu.dot_dimension_numbers<[1], [0], [0], [1], [0, 0, 1, 1], [], []>} : vector<2x64xf32>, vector<64x256xf32>, vector<2x256xf32> -> vector<2x256xf32>
    %532 = vector.extract_strided_slice %356 {offsets = [8, 0], sizes = [2, 128], strides = [1, 1]} : vector<16x256xf32> to vector<2x128xf32>
    %533 = vector.extract_strided_slice %531 {offsets = [0, 0], sizes = [2, 128], strides = [1, 1]} : vector<2x256xf32> to vector<2x128xf32>
    %534 = arith.addf %532, %533 : vector<2x128xf32>
    %535 = vector.extract_strided_slice %356 {offsets = [6, 128], sizes = [2, 128], strides = [1, 1]} : vector<16x256xf32> to vector<2x128xf32>
    %536 = vector.extract_strided_slice %531 {offsets = [0, 128], sizes = [2, 128], strides = [1, 1]} : vector<2x256xf32> to vector<2x128xf32>
    %537 = arith.addf %535, %536 : vector<2x128xf32>
    %538 = vector.extract_strided_slice %534 {offsets = [0, 0], sizes = [2, 96], strides = [1, 1]} : vector<2x128xf32> to vector<2x96xf32>
    %539 = arith.negf %538 : vector<2x96xf32>
    %540 = math.exp %539 : vector<2x96xf32>
    %cst_106 = arith.constant 1.000000e+00 : f32
    %541 = vector.broadcast %cst_106 : f32 to vector<2x96xf32>
    %542 = arith.addf %541, %540 : vector<2x96xf32>
    %543 = arith.divf %541, %542 : vector<2x96xf32>
    %544 = vector.extract_strided_slice %543 {offsets = [0, 0], sizes = [2, 32], strides = [1, 1]} : vector<2x96xf32> to vector<2x32xf32>
    %545 = vector.extract_strided_slice %543 {offsets = [0, 32], sizes = [2, 32], strides = [1, 1]} : vector<2x96xf32> to vector<2x32xf32>
    %546 = vector.extract_strided_slice %543 {offsets = [0, 64], sizes = [2, 32], strides = [1, 1]} : vector<2x96xf32> to vector<2x32xf32>
    %547 = vector.extract_strided_slice %534 {offsets = [0, 96], sizes = [2, 32], strides = [1, 1]} : vector<2x128xf32> to vector<2x32xf32>
    %548 = math.tanh %547 : vector<2x32xf32>
    %549 = arith.mulf %545, %509 : vector<2x32xf32>
    %550 = arith.mulf %544, %548 : vector<2x32xf32>
    %551 = arith.addf %549, %550 : vector<2x32xf32>
    %552 = math.tanh %551 : vector<2x32xf32>
    %553 = arith.mulf %546, %552 : vector<2x32xf32>
    %554 = vector.extract_strided_slice %537 {offsets = [0, 0], sizes = [2, 96], strides = [1, 1]} : vector<2x128xf32> to vector<2x96xf32>
    %555 = arith.negf %554 : vector<2x96xf32>
    %556 = math.exp %555 : vector<2x96xf32>
    %cst_107 = arith.constant 1.000000e+00 : f32
    %557 = vector.broadcast %cst_107 : f32 to vector<2x96xf32>
    %558 = arith.addf %557, %556 : vector<2x96xf32>
    %559 = arith.divf %557, %558 : vector<2x96xf32>
    %560 = vector.extract_strided_slice %559 {offsets = [0, 0], sizes = [2, 32], strides = [1, 1]} : vector<2x96xf32> to vector<2x32xf32>
    %561 = vector.extract_strided_slice %559 {offsets = [0, 32], sizes = [2, 32], strides = [1, 1]} : vector<2x96xf32> to vector<2x32xf32>
    %562 = vector.extract_strided_slice %559 {offsets = [0, 64], sizes = [2, 32], strides = [1, 1]} : vector<2x96xf32> to vector<2x32xf32>
    %563 = vector.extract_strided_slice %537 {offsets = [0, 96], sizes = [2, 32], strides = [1, 1]} : vector<2x128xf32> to vector<2x32xf32>
    %564 = math.tanh %563 : vector<2x32xf32>
    %565 = arith.mulf %561, %525 : vector<2x32xf32>
    %566 = arith.mulf %560, %564 : vector<2x32xf32>
    %567 = arith.addf %565, %566 : vector<2x32xf32>
    %568 = math.tanh %567 : vector<2x32xf32>
    %569 = arith.mulf %562, %568 : vector<2x32xf32>
    %c8_108 = arith.constant 8 : index
    %c0_109 = arith.constant 0 : index
    %570 = vector.load %arg16[%c8_108, %c0_109] : memref<16x32xf32, #tpu.memory_space<vmem>>, vector<2x32xf32>
    tpu.vector_store %arg16[%c8_108, %c0_109], %553 {strides = array<i32>} : memref<16x32xf32, #tpu.memory_space<vmem>>, vector<2x32xf32>,
    %c6_110 = arith.constant 6 : index
    %c0_111 = arith.constant 0 : index
    %571 = vector.load %arg17[%c6_110, %c0_111] : memref<16x32xf32, #tpu.memory_space<vmem>>, vector<2x32xf32>
    tpu.vector_store %arg17[%c6_110, %c0_111], %569 {strides = array<i32>} : memref<16x32xf32, #tpu.memory_space<vmem>>, vector<2x32xf32>,
    %572 = tpu.concatenate %553, %569 in 1 : vector<2x32xf32>, vector<2x32xf32> -> vector<2x64xf32>
    %cst_112 = arith.constant dense<0.000000e+00> : vector<2x256xf32>
    %573 = tpu.matmul %572, %357, %cst_112 {dimension_numbers = #tpu.dot_dimension_numbers<[1], [0], [0], [1], [0, 0, 1, 1], [], []>} : vector<2x64xf32>, vector<64x256xf32>, vector<2x256xf32> -> vector<2x256xf32>
    %574 = vector.extract_strided_slice %356 {offsets = [10, 0], sizes = [2, 128], strides = [1, 1]} : vector<16x256xf32> to vector<2x128xf32>
    %575 = vector.extract_strided_slice %573 {offsets = [0, 0], sizes = [2, 128], strides = [1, 1]} : vector<2x256xf32> to vector<2x128xf32>
    %576 = arith.addf %574, %575 : vector<2x128xf32>
    %577 = vector.extract_strided_slice %356 {offsets = [4, 128], sizes = [2, 128], strides = [1, 1]} : vector<16x256xf32> to vector<2x128xf32>
    %578 = vector.extract_strided_slice %573 {offsets = [0, 128], sizes = [2, 128], strides = [1, 1]} : vector<2x256xf32> to vector<2x128xf32>
    %579 = arith.addf %577, %578 : vector<2x128xf32>
    %580 = vector.extract_strided_slice %576 {offsets = [0, 0], sizes = [2, 96], strides = [1, 1]} : vector<2x128xf32> to vector<2x96xf32>
    %581 = arith.negf %580 : vector<2x96xf32>
    %582 = math.exp %581 : vector<2x96xf32>
    %cst_113 = arith.constant 1.000000e+00 : f32
    %583 = vector.broadcast %cst_113 : f32 to vector<2x96xf32>
    %584 = arith.addf %583, %582 : vector<2x96xf32>
    %585 = arith.divf %583, %584 : vector<2x96xf32>
    %586 = vector.extract_strided_slice %585 {offsets = [0, 0], sizes = [2, 32], strides = [1, 1]} : vector<2x96xf32> to vector<2x32xf32>
    %587 = vector.extract_strided_slice %585 {offsets = [0, 32], sizes = [2, 32], strides = [1, 1]} : vector<2x96xf32> to vector<2x32xf32>
    %588 = vector.extract_strided_slice %585 {offsets = [0, 64], sizes = [2, 32], strides = [1, 1]} : vector<2x96xf32> to vector<2x32xf32>
    %589 = vector.extract_strided_slice %576 {offsets = [0, 96], sizes = [2, 32], strides = [1, 1]} : vector<2x128xf32> to vector<2x32xf32>
    %590 = math.tanh %589 : vector<2x32xf32>
    %591 = arith.mulf %587, %551 : vector<2x32xf32>
    %592 = arith.mulf %586, %590 : vector<2x32xf32>
    %593 = arith.addf %591, %592 : vector<2x32xf32>
    %594 = math.tanh %593 : vector<2x32xf32>
    %595 = arith.mulf %588, %594 : vector<2x32xf32>
    %596 = vector.extract_strided_slice %579 {offsets = [0, 0], sizes = [2, 96], strides = [1, 1]} : vector<2x128xf32> to vector<2x96xf32>
    %597 = arith.negf %596 : vector<2x96xf32>
    %598 = math.exp %597 : vector<2x96xf32>
    %cst_114 = arith.constant 1.000000e+00 : f32
    %599 = vector.broadcast %cst_114 : f32 to vector<2x96xf32>
    %600 = arith.addf %599, %598 : vector<2x96xf32>
    %601 = arith.divf %599, %600 : vector<2x96xf32>
    %602 = vector.extract_strided_slice %601 {offsets = [0, 0], sizes = [2, 32], strides = [1, 1]} : vector<2x96xf32> to vector<2x32xf32>
    %603 = vector.extract_strided_slice %601 {offsets = [0, 32], sizes = [2, 32], strides = [1, 1]} : vector<2x96xf32> to vector<2x32xf32>
    %604 = vector.extract_strided_slice %601 {offsets = [0, 64], sizes = [2, 32], strides = [1, 1]} : vector<2x96xf32> to vector<2x32xf32>
    %605 = vector.extract_strided_slice %579 {offsets = [0, 96], sizes = [2, 32], strides = [1, 1]} : vector<2x128xf32> to vector<2x32xf32>
    %606 = math.tanh %605 : vector<2x32xf32>
    %607 = arith.mulf %603, %567 : vector<2x32xf32>
    %608 = arith.mulf %602, %606 : vector<2x32xf32>
    %609 = arith.addf %607, %608 : vector<2x32xf32>
    %610 = math.tanh %609 : vector<2x32xf32>
    %611 = arith.mulf %604, %610 : vector<2x32xf32>
    %c10_115 = arith.constant 10 : index
    %c0_116 = arith.constant 0 : index
    %612 = vector.load %arg16[%c10_115, %c0_116] : memref<16x32xf32, #tpu.memory_space<vmem>>, vector<2x32xf32>
    tpu.vector_store %arg16[%c10_115, %c0_116], %595 {strides = array<i32>} : memref<16x32xf32, #tpu.memory_space<vmem>>, vector<2x32xf32>,
    %c4_117 = arith.constant 4 : index
    %c0_118 = arith.constant 0 : index
    %613 = vector.load %arg17[%c4_117, %c0_118] : memref<16x32xf32, #tpu.memory_space<vmem>>, vector<2x32xf32>
    tpu.vector_store %arg17[%c4_117, %c0_118], %611 {strides = array<i32>} : memref<16x32xf32, #tpu.memory_space<vmem>>, vector<2x32xf32>,
    %614 = tpu.concatenate %595, %611 in 1 : vector<2x32xf32>, vector<2x32xf32> -> vector<2x64xf32>
    %cst_119 = arith.constant dense<0.000000e+00> : vector<2x256xf32>
    %615 = tpu.matmul %614, %357, %cst_119 {dimension_numbers = #tpu.dot_dimension_numbers<[1], [0], [0], [1], [0, 0, 1, 1], [], []>} : vector<2x64xf32>, vector<64x256xf32>, vector<2x256xf32> -> vector<2x256xf32>
    %616 = vector.extract_strided_slice %356 {offsets = [12, 0], sizes = [2, 128], strides = [1, 1]} : vector<16x256xf32> to vector<2x128xf32>
    %617 = vector.extract_strided_slice %615 {offsets = [0, 0], sizes = [2, 128], strides = [1, 1]} : vector<2x256xf32> to vector<2x128xf32>
    %618 = arith.addf %616, %617 : vector<2x128xf32>
    %619 = vector.extract_strided_slice %356 {offsets = [2, 128], sizes = [2, 128], strides = [1, 1]} : vector<16x256xf32> to vector<2x128xf32>
    %620 = vector.extract_strided_slice %615 {offsets = [0, 128], sizes = [2, 128], strides = [1, 1]} : vector<2x256xf32> to vector<2x128xf32>
    %621 = arith.addf %619, %620 : vector<2x128xf32>
    %622 = vector.extract_strided_slice %618 {offsets = [0, 0], sizes = [2, 96], strides = [1, 1]} : vector<2x128xf32> to vector<2x96xf32>
    %623 = arith.negf %622 : vector<2x96xf32>
    %624 = math.exp %623 : vector<2x96xf32>
    %cst_120 = arith.constant 1.000000e+00 : f32
    %625 = vector.broadcast %cst_120 : f32 to vector<2x96xf32>
    %626 = arith.addf %625, %624 : vector<2x96xf32>
    %627 = arith.divf %625, %626 : vector<2x96xf32>
    %628 = vector.extract_strided_slice %627 {offsets = [0, 0], sizes = [2, 32], strides = [1, 1]} : vector<2x96xf32> to vector<2x32xf32>
    %629 = vector.extract_strided_slice %627 {offsets = [0, 32], sizes = [2, 32], strides = [1, 1]} : vector<2x96xf32> to vector<2x32xf32>
    %630 = vector.extract_strided_slice %627 {offsets = [0, 64], sizes = [2, 32], strides = [1, 1]} : vector<2x96xf32> to vector<2x32xf32>
    %631 = vector.extract_strided_slice %618 {offsets = [0, 96], sizes = [2, 32], strides = [1, 1]} : vector<2x128xf32> to vector<2x32xf32>
    %632 = math.tanh %631 : vector<2x32xf32>
    %633 = arith.mulf %629, %593 : vector<2x32xf32>
    %634 = arith.mulf %628, %632 : vector<2x32xf32>
    %635 = arith.addf %633, %634 : vector<2x32xf32>
    %636 = math.tanh %635 : vector<2x32xf32>
    %637 = arith.mulf %630, %636 : vector<2x32xf32>
    %638 = vector.extract_strided_slice %621 {offsets = [0, 0], sizes = [2, 96], strides = [1, 1]} : vector<2x128xf32> to vector<2x96xf32>
    %639 = arith.negf %638 : vector<2x96xf32>
    %640 = math.exp %639 : vector<2x96xf32>
    %cst_121 = arith.constant 1.000000e+00 : f32
    %641 = vector.broadcast %cst_121 : f32 to vector<2x96xf32>
    %642 = arith.addf %641, %640 : vector<2x96xf32>
    %643 = arith.divf %641, %642 : vector<2x96xf32>
    %644 = vector.extract_strided_slice %643 {offsets = [0, 0], sizes = [2, 32], strides = [1, 1]} : vector<2x96xf32> to vector<2x32xf32>
    %645 = vector.extract_strided_slice %643 {offsets = [0, 32], sizes = [2, 32], strides = [1, 1]} : vector<2x96xf32> to vector<2x32xf32>
    %646 = vector.extract_strided_slice %643 {offsets = [0, 64], sizes = [2, 32], strides = [1, 1]} : vector<2x96xf32> to vector<2x32xf32>
    %647 = vector.extract_strided_slice %621 {offsets = [0, 96], sizes = [2, 32], strides = [1, 1]} : vector<2x128xf32> to vector<2x32xf32>
    %648 = math.tanh %647 : vector<2x32xf32>
    %649 = arith.mulf %645, %609 : vector<2x32xf32>
    %650 = arith.mulf %644, %648 : vector<2x32xf32>
    %651 = arith.addf %649, %650 : vector<2x32xf32>
    %652 = math.tanh %651 : vector<2x32xf32>
    %653 = arith.mulf %646, %652 : vector<2x32xf32>
    %c12_122 = arith.constant 12 : index
    %c0_123 = arith.constant 0 : index
    %654 = vector.load %arg16[%c12_122, %c0_123] : memref<16x32xf32, #tpu.memory_space<vmem>>, vector<2x32xf32>
    tpu.vector_store %arg16[%c12_122, %c0_123], %637 {strides = array<i32>} : memref<16x32xf32, #tpu.memory_space<vmem>>, vector<2x32xf32>,
    %c2_124 = arith.constant 2 : index
    %c0_125 = arith.constant 0 : index
    %655 = vector.load %arg17[%c2_124, %c0_125] : memref<16x32xf32, #tpu.memory_space<vmem>>, vector<2x32xf32>
    tpu.vector_store %arg17[%c2_124, %c0_125], %653 {strides = array<i32>} : memref<16x32xf32, #tpu.memory_space<vmem>>, vector<2x32xf32>,
    %656 = tpu.concatenate %637, %653 in 1 : vector<2x32xf32>, vector<2x32xf32> -> vector<2x64xf32>
    %cst_126 = arith.constant dense<0.000000e+00> : vector<2x256xf32>
    %657 = tpu.matmul %656, %357, %cst_126 {dimension_numbers = #tpu.dot_dimension_numbers<[1], [0], [0], [1], [0, 0, 1, 1], [], []>} : vector<2x64xf32>, vector<64x256xf32>, vector<2x256xf32> -> vector<2x256xf32>
    %658 = vector.extract_strided_slice %356 {offsets = [14, 0], sizes = [2, 128], strides = [1, 1]} : vector<16x256xf32> to vector<2x128xf32>
    %659 = vector.extract_strided_slice %657 {offsets = [0, 0], sizes = [2, 128], strides = [1, 1]} : vector<2x256xf32> to vector<2x128xf32>
    %660 = arith.addf %658, %659 : vector<2x128xf32>
    %661 = vector.extract_strided_slice %356 {offsets = [0, 128], sizes = [2, 128], strides = [1, 1]} : vector<16x256xf32> to vector<2x128xf32>
    %662 = vector.extract_strided_slice %657 {offsets = [0, 128], sizes = [2, 128], strides = [1, 1]} : vector<2x256xf32> to vector<2x128xf32>
    %663 = arith.addf %661, %662 : vector<2x128xf32>
    %664 = vector.extract_strided_slice %660 {offsets = [0, 0], sizes = [2, 96], strides = [1, 1]} : vector<2x128xf32> to vector<2x96xf32>
    %665 = arith.negf %664 : vector<2x96xf32>
    %666 = math.exp %665 : vector<2x96xf32>
    %cst_127 = arith.constant 1.000000e+00 : f32
    %667 = vector.broadcast %cst_127 : f32 to vector<2x96xf32>
    %668 = arith.addf %667, %666 : vector<2x96xf32>
    %669 = arith.divf %667, %668 : vector<2x96xf32>
    %670 = vector.extract_strided_slice %669 {offsets = [0, 0], sizes = [2, 32], strides = [1, 1]} : vector<2x96xf32> to vector<2x32xf32>
    %671 = vector.extract_strided_slice %669 {offsets = [0, 32], sizes = [2, 32], strides = [1, 1]} : vector<2x96xf32> to vector<2x32xf32>
    %672 = vector.extract_strided_slice %669 {offsets = [0, 64], sizes = [2, 32], strides = [1, 1]} : vector<2x96xf32> to vector<2x32xf32>
    %673 = vector.extract_strided_slice %660 {offsets = [0, 96], sizes = [2, 32], strides = [1, 1]} : vector<2x128xf32> to vector<2x32xf32>
    %674 = math.tanh %673 : vector<2x32xf32>
    %675 = arith.mulf %671, %635 : vector<2x32xf32>
    %676 = arith.mulf %670, %674 : vector<2x32xf32>
    %677 = arith.addf %675, %676 : vector<2x32xf32>
    %678 = math.tanh %677 : vector<2x32xf32>
    %679 = arith.mulf %672, %678 : vector<2x32xf32>
    %680 = vector.extract_strided_slice %663 {offsets = [0, 0], sizes = [2, 96], strides = [1, 1]} : vector<2x128xf32> to vector<2x96xf32>
    %681 = arith.negf %680 : vector<2x96xf32>
    %682 = math.exp %681 : vector<2x96xf32>
    %cst_128 = arith.constant 1.000000e+00 : f32
    %683 = vector.broadcast %cst_128 : f32 to vector<2x96xf32>
    %684 = arith.addf %683, %682 : vector<2x96xf32>
    %685 = arith.divf %683, %684 : vector<2x96xf32>
    %686 = vector.extract_strided_slice %685 {offsets = [0, 0], sizes = [2, 32], strides = [1, 1]} : vector<2x96xf32> to vector<2x32xf32>
    %687 = vector.extract_strided_slice %685 {offsets = [0, 32], sizes = [2, 32], strides = [1, 1]} : vector<2x96xf32> to vector<2x32xf32>
    %688 = vector.extract_strided_slice %685 {offsets = [0, 64], sizes = [2, 32], strides = [1, 1]} : vector<2x96xf32> to vector<2x32xf32>
    %689 = vector.extract_strided_slice %663 {offsets = [0, 96], sizes = [2, 32], strides = [1, 1]} : vector<2x128xf32> to vector<2x32xf32>
    %690 = math.tanh %689 : vector<2x32xf32>
    %691 = arith.mulf %687, %651 : vector<2x32xf32>
    %692 = arith.mulf %686, %690 : vector<2x32xf32>
    %693 = arith.addf %691, %692 : vector<2x32xf32>
    %694 = math.tanh %693 : vector<2x32xf32>
    %695 = arith.mulf %688, %694 : vector<2x32xf32>
    %c14_129 = arith.constant 14 : index
    %c0_130 = arith.constant 0 : index
    %696 = vector.load %arg16[%c14_129, %c0_130] : memref<16x32xf32, #tpu.memory_space<vmem>>, vector<2x32xf32>
    tpu.vector_store %arg16[%c14_129, %c0_130], %679 {strides = array<i32>} : memref<16x32xf32, #tpu.memory_space<vmem>>, vector<2x32xf32>,
    %c0_131 = arith.constant 0 : index
    %c0_132 = arith.constant 0 : index
    %697 = vector.load %arg17[%c0_131, %c0_132] : memref<16x32xf32, #tpu.memory_space<vmem>>, vector<2x32xf32>
    tpu.vector_store %arg17[%c0_131, %c0_132], %695 {strides = array<i32>} : memref<16x32xf32, #tpu.memory_space<vmem>>, vector<2x32xf32>,
    %c0_133 = arith.constant 0 : index
    %c0_134 = arith.constant 0 : index
    %698 = vector.load %arg16[%c0_133, %c0_134] : memref<16x32xf32, #tpu.memory_space<vmem>>, vector<16x32xf32>
    %c0_135 = arith.constant 0 : index
    %c0_136 = arith.constant 0 : index
    %699 = vector.load %arg8[%c0_135, %c0_136] : memref<64x256xf32, #tpu.memory_space<vmem>>, vector<32x256xf32>
    %cst_137 = arith.constant dense<0.000000e+00> : vector<16x256xf32>
    %700 = tpu.matmul %698, %699, %cst_137 {dimension_numbers = #tpu.dot_dimension_numbers<[1], [0], [0], [1], [0, 0, 1, 1], [], []>} : vector<16x32xf32>, vector<32x256xf32>, vector<16x256xf32> -> vector<16x256xf32>
    %c0_138 = arith.constant 0 : index
    %c0_139 = arith.constant 0 : index
    %701 = vector.load %arg17[%c0_138, %c0_139] : memref<16x32xf32, #tpu.memory_space<vmem>>, vector<16x32xf32>
    %c32_140 = arith.constant 32 : index
    %c0_141 = arith.constant 0 : index
    %702 = vector.load %arg8[%c32_140, %c0_141] : memref<64x256xf32, #tpu.memory_space<vmem>>, vector<32x256xf32>
    %cst_142 = arith.constant dense<0.000000e+00> : vector<16x256xf32>
    %703 = tpu.matmul %701, %702, %cst_142 {dimension_numbers = #tpu.dot_dimension_numbers<[1], [0], [0], [1], [0, 0, 1, 1], [], []>} : vector<16x32xf32>, vector<32x256xf32>, vector<16x256xf32> -> vector<16x256xf32>
    %704 = arith.addf %700, %703 : vector<16x256xf32>
    %c0_143 = arith.constant 0 : index
    %c0_144 = arith.constant 0 : index
    %705 = vector.load %arg10[%c0_143, %c0_144] : memref<1x256xf32, #tpu.memory_space<vmem>>, vector<1x256xf32>
    %706 = vector.broadcast %705 : vector<1x256xf32> to vector<16x256xf32>
    %707 = arith.addf %704, %706 : vector<16x256xf32>
    %c0_145 = arith.constant 0 : index
    %c0_146 = arith.constant 0 : index
    %708 = vector.load %arg9[%c0_145, %c0_146] : memref<64x256xf32, #tpu.memory_space<vmem>>, vector<64x256xf32>
    %cst_147 = arith.constant 0.000000e+00 : f32
    %709 = vector.broadcast %cst_147 : f32 to vector<2x32xf32>
    %cst_148 = arith.constant 0.000000e+00 : f32
    %710 = vector.broadcast %cst_148 : f32 to vector<2x32xf32>
    %cst_149 = arith.constant 0.000000e+00 : f32
    %711 = vector.broadcast %cst_149 : f32 to vector<2x32xf32>
    %cst_150 = arith.constant 0.000000e+00 : f32
    %712 = vector.broadcast %cst_150 : f32 to vector<2x32xf32>
    %cst_151 = arith.constant 0.000000e+00 : f32
    %713 = vector.broadcast %cst_151 : f32 to vector<2x32xf32>
    %cst_152 = arith.constant 0.000000e+00 : f32
    %714 = vector.broadcast %cst_152 : f32 to vector<2x32xf32>
    %715 = tpu.concatenate %709, %710 in 1 : vector<2x32xf32>, vector<2x32xf32> -> vector<2x64xf32>
    %cst_153 = arith.constant dense<0.000000e+00> : vector<2x256xf32>
    %716 = tpu.matmul %715, %708, %cst_153 {dimension_numbers = #tpu.dot_dimension_numbers<[1], [0], [0], [1], [0, 0, 1, 1], [], []>} : vector<2x64xf32>, vector<64x256xf32>, vector<2x256xf32> -> vector<2x256xf32>
    %717 = vector.extract_strided_slice %707 {offsets = [0, 0], sizes = [2, 128], strides = [1, 1]} : vector<16x256xf32> to vector<2x128xf32>
    %718 = vector.extract_strided_slice %716 {offsets = [0, 0], sizes = [2, 128], strides = [1, 1]} : vector<2x256xf32> to vector<2x128xf32>
    %719 = arith.addf %717, %718 : vector<2x128xf32>
    %720 = vector.extract_strided_slice %707 {offsets = [14, 128], sizes = [2, 128], strides = [1, 1]} : vector<16x256xf32> to vector<2x128xf32>
    %721 = vector.extract_strided_slice %716 {offsets = [0, 128], sizes = [2, 128], strides = [1, 1]} : vector<2x256xf32> to vector<2x128xf32>
    %722 = arith.addf %720, %721 : vector<2x128xf32>
    %723 = vector.extract_strided_slice %719 {offsets = [0, 0], sizes = [2, 96], strides = [1, 1]} : vector<2x128xf32> to vector<2x96xf32>
    %724 = arith.negf %723 : vector<2x96xf32>
    %725 = math.exp %724 : vector<2x96xf32>
    %cst_154 = arith.constant 1.000000e+00 : f32
    %726 = vector.broadcast %cst_154 : f32 to vector<2x96xf32>
    %727 = arith.addf %726, %725 : vector<2x96xf32>
    %728 = arith.divf %726, %727 : vector<2x96xf32>
    %729 = vector.extract_strided_slice %728 {offsets = [0, 0], sizes = [2, 32], strides = [1, 1]} : vector<2x96xf32> to vector<2x32xf32>
    %730 = vector.extract_strided_slice %728 {offsets = [0, 32], sizes = [2, 32], strides = [1, 1]} : vector<2x96xf32> to vector<2x32xf32>
    %731 = vector.extract_strided_slice %728 {offsets = [0, 64], sizes = [2, 32], strides = [1, 1]} : vector<2x96xf32> to vector<2x32xf32>
    %732 = vector.extract_strided_slice %719 {offsets = [0, 96], sizes = [2, 32], strides = [1, 1]} : vector<2x128xf32> to vector<2x32xf32>
    %733 = math.tanh %732 : vector<2x32xf32>
    %734 = arith.mulf %730, %711 : vector<2x32xf32>
    %735 = arith.mulf %729, %733 : vector<2x32xf32>
    %736 = arith.addf %734, %735 : vector<2x32xf32>
    %737 = math.tanh %736 : vector<2x32xf32>
    %738 = arith.mulf %731, %737 : vector<2x32xf32>
    %739 = vector.extract_strided_slice %722 {offsets = [0, 0], sizes = [2, 96], strides = [1, 1]} : vector<2x128xf32> to vector<2x96xf32>
    %740 = arith.negf %739 : vector<2x96xf32>
    %741 = math.exp %740 : vector<2x96xf32>
    %cst_155 = arith.constant 1.000000e+00 : f32
    %742 = vector.broadcast %cst_155 : f32 to vector<2x96xf32>
    %743 = arith.addf %742, %741 : vector<2x96xf32>
    %744 = arith.divf %742, %743 : vector<2x96xf32>
    %745 = vector.extract_strided_slice %744 {offsets = [0, 0], sizes = [2, 32], strides = [1, 1]} : vector<2x96xf32> to vector<2x32xf32>
    %746 = vector.extract_strided_slice %744 {offsets = [0, 32], sizes = [2, 32], strides = [1, 1]} : vector<2x96xf32> to vector<2x32xf32>
    %747 = vector.extract_strided_slice %744 {offsets = [0, 64], sizes = [2, 32], strides = [1, 1]} : vector<2x96xf32> to vector<2x32xf32>
    %748 = vector.extract_strided_slice %722 {offsets = [0, 96], sizes = [2, 32], strides = [1, 1]} : vector<2x128xf32> to vector<2x32xf32>
    %749 = math.tanh %748 : vector<2x32xf32>
    %750 = arith.mulf %746, %712 : vector<2x32xf32>
    %751 = arith.mulf %745, %749 : vector<2x32xf32>
    %752 = arith.addf %750, %751 : vector<2x32xf32>
    %753 = math.tanh %752 : vector<2x32xf32>
    %754 = arith.mulf %747, %753 : vector<2x32xf32>
    %755 = arith.addf %713, %738 : vector<2x32xf32>
    %756 = arith.addf %714, %754 : vector<2x32xf32>
    %757 = tpu.concatenate %738, %754 in 1 : vector<2x32xf32>, vector<2x32xf32> -> vector<2x64xf32>
    %cst_156 = arith.constant dense<0.000000e+00> : vector<2x256xf32>
    %758 = tpu.matmul %757, %708, %cst_156 {dimension_numbers = #tpu.dot_dimension_numbers<[1], [0], [0], [1], [0, 0, 1, 1], [], []>} : vector<2x64xf32>, vector<64x256xf32>, vector<2x256xf32> -> vector<2x256xf32>
    %759 = vector.extract_strided_slice %707 {offsets = [2, 0], sizes = [2, 128], strides = [1, 1]} : vector<16x256xf32> to vector<2x128xf32>
    %760 = vector.extract_strided_slice %758 {offsets = [0, 0], sizes = [2, 128], strides = [1, 1]} : vector<2x256xf32> to vector<2x128xf32>
    %761 = arith.addf %759, %760 : vector<2x128xf32>
    %762 = vector.extract_strided_slice %707 {offsets = [12, 128], sizes = [2, 128], strides = [1, 1]} : vector<16x256xf32> to vector<2x128xf32>
    %763 = vector.extract_strided_slice %758 {offsets = [0, 128], sizes = [2, 128], strides = [1, 1]} : vector<2x256xf32> to vector<2x128xf32>
    %764 = arith.addf %762, %763 : vector<2x128xf32>
    %765 = vector.extract_strided_slice %761 {offsets = [0, 0], sizes = [2, 96], strides = [1, 1]} : vector<2x128xf32> to vector<2x96xf32>
    %766 = arith.negf %765 : vector<2x96xf32>
    %767 = math.exp %766 : vector<2x96xf32>
    %cst_157 = arith.constant 1.000000e+00 : f32
    %768 = vector.broadcast %cst_157 : f32 to vector<2x96xf32>
    %769 = arith.addf %768, %767 : vector<2x96xf32>
    %770 = arith.divf %768, %769 : vector<2x96xf32>
    %771 = vector.extract_strided_slice %770 {offsets = [0, 0], sizes = [2, 32], strides = [1, 1]} : vector<2x96xf32> to vector<2x32xf32>
    %772 = vector.extract_strided_slice %770 {offsets = [0, 32], sizes = [2, 32], strides = [1, 1]} : vector<2x96xf32> to vector<2x32xf32>
    %773 = vector.extract_strided_slice %770 {offsets = [0, 64], sizes = [2, 32], strides = [1, 1]} : vector<2x96xf32> to vector<2x32xf32>
    %774 = vector.extract_strided_slice %761 {offsets = [0, 96], sizes = [2, 32], strides = [1, 1]} : vector<2x128xf32> to vector<2x32xf32>
    %775 = math.tanh %774 : vector<2x32xf32>
    %776 = arith.mulf %772, %736 : vector<2x32xf32>
    %777 = arith.mulf %771, %775 : vector<2x32xf32>
    %778 = arith.addf %776, %777 : vector<2x32xf32>
    %779 = math.tanh %778 : vector<2x32xf32>
    %780 = arith.mulf %773, %779 : vector<2x32xf32>
    %781 = vector.extract_strided_slice %764 {offsets = [0, 0], sizes = [2, 96], strides = [1, 1]} : vector<2x128xf32> to vector<2x96xf32>
    %782 = arith.negf %781 : vector<2x96xf32>
    %783 = math.exp %782 : vector<2x96xf32>
    %cst_158 = arith.constant 1.000000e+00 : f32
    %784 = vector.broadcast %cst_158 : f32 to vector<2x96xf32>
    %785 = arith.addf %784, %783 : vector<2x96xf32>
    %786 = arith.divf %784, %785 : vector<2x96xf32>
    %787 = vector.extract_strided_slice %786 {offsets = [0, 0], sizes = [2, 32], strides = [1, 1]} : vector<2x96xf32> to vector<2x32xf32>
    %788 = vector.extract_strided_slice %786 {offsets = [0, 32], sizes = [2, 32], strides = [1, 1]} : vector<2x96xf32> to vector<2x32xf32>
    %789 = vector.extract_strided_slice %786 {offsets = [0, 64], sizes = [2, 32], strides = [1, 1]} : vector<2x96xf32> to vector<2x32xf32>
    %790 = vector.extract_strided_slice %764 {offsets = [0, 96], sizes = [2, 32], strides = [1, 1]} : vector<2x128xf32> to vector<2x32xf32>
    %791 = math.tanh %790 : vector<2x32xf32>
    %792 = arith.mulf %788, %752 : vector<2x32xf32>
    %793 = arith.mulf %787, %791 : vector<2x32xf32>
    %794 = arith.addf %792, %793 : vector<2x32xf32>
    %795 = math.tanh %794 : vector<2x32xf32>
    %796 = arith.mulf %789, %795 : vector<2x32xf32>
    %797 = arith.addf %755, %780 : vector<2x32xf32>
    %798 = arith.addf %756, %796 : vector<2x32xf32>
    %799 = tpu.concatenate %780, %796 in 1 : vector<2x32xf32>, vector<2x32xf32> -> vector<2x64xf32>
    %cst_159 = arith.constant dense<0.000000e+00> : vector<2x256xf32>
    %800 = tpu.matmul %799, %708, %cst_159 {dimension_numbers = #tpu.dot_dimension_numbers<[1], [0], [0], [1], [0, 0, 1, 1], [], []>} : vector<2x64xf32>, vector<64x256xf32>, vector<2x256xf32> -> vector<2x256xf32>
    %801 = vector.extract_strided_slice %707 {offsets = [4, 0], sizes = [2, 128], strides = [1, 1]} : vector<16x256xf32> to vector<2x128xf32>
    %802 = vector.extract_strided_slice %800 {offsets = [0, 0], sizes = [2, 128], strides = [1, 1]} : vector<2x256xf32> to vector<2x128xf32>
    %803 = arith.addf %801, %802 : vector<2x128xf32>
    %804 = vector.extract_strided_slice %707 {offsets = [10, 128], sizes = [2, 128], strides = [1, 1]} : vector<16x256xf32> to vector<2x128xf32>
    %805 = vector.extract_strided_slice %800 {offsets = [0, 128], sizes = [2, 128], strides = [1, 1]} : vector<2x256xf32> to vector<2x128xf32>
    %806 = arith.addf %804, %805 : vector<2x128xf32>
    %807 = vector.extract_strided_slice %803 {offsets = [0, 0], sizes = [2, 96], strides = [1, 1]} : vector<2x128xf32> to vector<2x96xf32>
    %808 = arith.negf %807 : vector<2x96xf32>
    %809 = math.exp %808 : vector<2x96xf32>
    %cst_160 = arith.constant 1.000000e+00 : f32
    %810 = vector.broadcast %cst_160 : f32 to vector<2x96xf32>
    %811 = arith.addf %810, %809 : vector<2x96xf32>
    %812 = arith.divf %810, %811 : vector<2x96xf32>
    %813 = vector.extract_strided_slice %812 {offsets = [0, 0], sizes = [2, 32], strides = [1, 1]} : vector<2x96xf32> to vector<2x32xf32>
    %814 = vector.extract_strided_slice %812 {offsets = [0, 32], sizes = [2, 32], strides = [1, 1]} : vector<2x96xf32> to vector<2x32xf32>
    %815 = vector.extract_strided_slice %812 {offsets = [0, 64], sizes = [2, 32], strides = [1, 1]} : vector<2x96xf32> to vector<2x32xf32>
    %816 = vector.extract_strided_slice %803 {offsets = [0, 96], sizes = [2, 32], strides = [1, 1]} : vector<2x128xf32> to vector<2x32xf32>
    %817 = math.tanh %816 : vector<2x32xf32>
    %818 = arith.mulf %814, %778 : vector<2x32xf32>
    %819 = arith.mulf %813, %817 : vector<2x32xf32>
    %820 = arith.addf %818, %819 : vector<2x32xf32>
    %821 = math.tanh %820 : vector<2x32xf32>
    %822 = arith.mulf %815, %821 : vector<2x32xf32>
    %823 = vector.extract_strided_slice %806 {offsets = [0, 0], sizes = [2, 96], strides = [1, 1]} : vector<2x128xf32> to vector<2x96xf32>
    %824 = arith.negf %823 : vector<2x96xf32>
    %825 = math.exp %824 : vector<2x96xf32>
    %cst_161 = arith.constant 1.000000e+00 : f32
    %826 = vector.broadcast %cst_161 : f32 to vector<2x96xf32>
    %827 = arith.addf %826, %825 : vector<2x96xf32>
    %828 = arith.divf %826, %827 : vector<2x96xf32>
    %829 = vector.extract_strided_slice %828 {offsets = [0, 0], sizes = [2, 32], strides = [1, 1]} : vector<2x96xf32> to vector<2x32xf32>
    %830 = vector.extract_strided_slice %828 {offsets = [0, 32], sizes = [2, 32], strides = [1, 1]} : vector<2x96xf32> to vector<2x32xf32>
    %831 = vector.extract_strided_slice %828 {offsets = [0, 64], sizes = [2, 32], strides = [1, 1]} : vector<2x96xf32> to vector<2x32xf32>
    %832 = vector.extract_strided_slice %806 {offsets = [0, 96], sizes = [2, 32], strides = [1, 1]} : vector<2x128xf32> to vector<2x32xf32>
    %833 = math.tanh %832 : vector<2x32xf32>
    %834 = arith.mulf %830, %794 : vector<2x32xf32>
    %835 = arith.mulf %829, %833 : vector<2x32xf32>
    %836 = arith.addf %834, %835 : vector<2x32xf32>
    %837 = math.tanh %836 : vector<2x32xf32>
    %838 = arith.mulf %831, %837 : vector<2x32xf32>
    %839 = arith.addf %797, %822 : vector<2x32xf32>
    %840 = arith.addf %798, %838 : vector<2x32xf32>
    %841 = tpu.concatenate %822, %838 in 1 : vector<2x32xf32>, vector<2x32xf32> -> vector<2x64xf32>
    %cst_162 = arith.constant dense<0.000000e+00> : vector<2x256xf32>
    %842 = tpu.matmul %841, %708, %cst_162 {dimension_numbers = #tpu.dot_dimension_numbers<[1], [0], [0], [1], [0, 0, 1, 1], [], []>} : vector<2x64xf32>, vector<64x256xf32>, vector<2x256xf32> -> vector<2x256xf32>
    %843 = vector.extract_strided_slice %707 {offsets = [6, 0], sizes = [2, 128], strides = [1, 1]} : vector<16x256xf32> to vector<2x128xf32>
    %844 = vector.extract_strided_slice %842 {offsets = [0, 0], sizes = [2, 128], strides = [1, 1]} : vector<2x256xf32> to vector<2x128xf32>
    %845 = arith.addf %843, %844 : vector<2x128xf32>
    %846 = vector.extract_strided_slice %707 {offsets = [8, 128], sizes = [2, 128], strides = [1, 1]} : vector<16x256xf32> to vector<2x128xf32>
    %847 = vector.extract_strided_slice %842 {offsets = [0, 128], sizes = [2, 128], strides = [1, 1]} : vector<2x256xf32> to vector<2x128xf32>
    %848 = arith.addf %846, %847 : vector<2x128xf32>
    %849 = vector.extract_strided_slice %845 {offsets = [0, 0], sizes = [2, 96], strides = [1, 1]} : vector<2x128xf32> to vector<2x96xf32>
    %850 = arith.negf %849 : vector<2x96xf32>
    %851 = math.exp %850 : vector<2x96xf32>
    %cst_163 = arith.constant 1.000000e+00 : f32
    %852 = vector.broadcast %cst_163 : f32 to vector<2x96xf32>
    %853 = arith.addf %852, %851 : vector<2x96xf32>
    %854 = arith.divf %852, %853 : vector<2x96xf32>
    %855 = vector.extract_strided_slice %854 {offsets = [0, 0], sizes = [2, 32], strides = [1, 1]} : vector<2x96xf32> to vector<2x32xf32>
    %856 = vector.extract_strided_slice %854 {offsets = [0, 32], sizes = [2, 32], strides = [1, 1]} : vector<2x96xf32> to vector<2x32xf32>
    %857 = vector.extract_strided_slice %854 {offsets = [0, 64], sizes = [2, 32], strides = [1, 1]} : vector<2x96xf32> to vector<2x32xf32>
    %858 = vector.extract_strided_slice %845 {offsets = [0, 96], sizes = [2, 32], strides = [1, 1]} : vector<2x128xf32> to vector<2x32xf32>
    %859 = math.tanh %858 : vector<2x32xf32>
    %860 = arith.mulf %856, %820 : vector<2x32xf32>
    %861 = arith.mulf %855, %859 : vector<2x32xf32>
    %862 = arith.addf %860, %861 : vector<2x32xf32>
    %863 = math.tanh %862 : vector<2x32xf32>
    %864 = arith.mulf %857, %863 : vector<2x32xf32>
    %865 = vector.extract_strided_slice %848 {offsets = [0, 0], sizes = [2, 96], strides = [1, 1]} : vector<2x128xf32> to vector<2x96xf32>
    %866 = arith.negf %865 : vector<2x96xf32>
    %867 = math.exp %866 : vector<2x96xf32>
    %cst_164 = arith.constant 1.000000e+00 : f32
    %868 = vector.broadcast %cst_164 : f32 to vector<2x96xf32>
    %869 = arith.addf %868, %867 : vector<2x96xf32>
    %870 = arith.divf %868, %869 : vector<2x96xf32>
    %871 = vector.extract_strided_slice %870 {offsets = [0, 0], sizes = [2, 32], strides = [1, 1]} : vector<2x96xf32> to vector<2x32xf32>
    %872 = vector.extract_strided_slice %870 {offsets = [0, 32], sizes = [2, 32], strides = [1, 1]} : vector<2x96xf32> to vector<2x32xf32>
    %873 = vector.extract_strided_slice %870 {offsets = [0, 64], sizes = [2, 32], strides = [1, 1]} : vector<2x96xf32> to vector<2x32xf32>
    %874 = vector.extract_strided_slice %848 {offsets = [0, 96], sizes = [2, 32], strides = [1, 1]} : vector<2x128xf32> to vector<2x32xf32>
    %875 = math.tanh %874 : vector<2x32xf32>
    %876 = arith.mulf %872, %836 : vector<2x32xf32>
    %877 = arith.mulf %871, %875 : vector<2x32xf32>
    %878 = arith.addf %876, %877 : vector<2x32xf32>
    %879 = math.tanh %878 : vector<2x32xf32>
    %880 = arith.mulf %873, %879 : vector<2x32xf32>
    %881 = arith.addf %839, %864 : vector<2x32xf32>
    %882 = arith.addf %840, %880 : vector<2x32xf32>
    %883 = tpu.concatenate %864, %880 in 1 : vector<2x32xf32>, vector<2x32xf32> -> vector<2x64xf32>
    %cst_165 = arith.constant dense<0.000000e+00> : vector<2x256xf32>
    %884 = tpu.matmul %883, %708, %cst_165 {dimension_numbers = #tpu.dot_dimension_numbers<[1], [0], [0], [1], [0, 0, 1, 1], [], []>} : vector<2x64xf32>, vector<64x256xf32>, vector<2x256xf32> -> vector<2x256xf32>
    %885 = vector.extract_strided_slice %707 {offsets = [8, 0], sizes = [2, 128], strides = [1, 1]} : vector<16x256xf32> to vector<2x128xf32>
    %886 = vector.extract_strided_slice %884 {offsets = [0, 0], sizes = [2, 128], strides = [1, 1]} : vector<2x256xf32> to vector<2x128xf32>
    %887 = arith.addf %885, %886 : vector<2x128xf32>
    %888 = vector.extract_strided_slice %707 {offsets = [6, 128], sizes = [2, 128], strides = [1, 1]} : vector<16x256xf32> to vector<2x128xf32>
    %889 = vector.extract_strided_slice %884 {offsets = [0, 128], sizes = [2, 128], strides = [1, 1]} : vector<2x256xf32> to vector<2x128xf32>
    %890 = arith.addf %888, %889 : vector<2x128xf32>
    %891 = vector.extract_strided_slice %887 {offsets = [0, 0], sizes = [2, 96], strides = [1, 1]} : vector<2x128xf32> to vector<2x96xf32>
    %892 = arith.negf %891 : vector<2x96xf32>
    %893 = math.exp %892 : vector<2x96xf32>
    %cst_166 = arith.constant 1.000000e+00 : f32
    %894 = vector.broadcast %cst_166 : f32 to vector<2x96xf32>
    %895 = arith.addf %894, %893 : vector<2x96xf32>
    %896 = arith.divf %894, %895 : vector<2x96xf32>
    %897 = vector.extract_strided_slice %896 {offsets = [0, 0], sizes = [2, 32], strides = [1, 1]} : vector<2x96xf32> to vector<2x32xf32>
    %898 = vector.extract_strided_slice %896 {offsets = [0, 32], sizes = [2, 32], strides = [1, 1]} : vector<2x96xf32> to vector<2x32xf32>
    %899 = vector.extract_strided_slice %896 {offsets = [0, 64], sizes = [2, 32], strides = [1, 1]} : vector<2x96xf32> to vector<2x32xf32>
    %900 = vector.extract_strided_slice %887 {offsets = [0, 96], sizes = [2, 32], strides = [1, 1]} : vector<2x128xf32> to vector<2x32xf32>
    %901 = math.tanh %900 : vector<2x32xf32>
    %902 = arith.mulf %898, %862 : vector<2x32xf32>
    %903 = arith.mulf %897, %901 : vector<2x32xf32>
    %904 = arith.addf %902, %903 : vector<2x32xf32>
    %905 = math.tanh %904 : vector<2x32xf32>
    %906 = arith.mulf %899, %905 : vector<2x32xf32>
    %907 = vector.extract_strided_slice %890 {offsets = [0, 0], sizes = [2, 96], strides = [1, 1]} : vector<2x128xf32> to vector<2x96xf32>
    %908 = arith.negf %907 : vector<2x96xf32>
    %909 = math.exp %908 : vector<2x96xf32>
    %cst_167 = arith.constant 1.000000e+00 : f32
    %910 = vector.broadcast %cst_167 : f32 to vector<2x96xf32>
    %911 = arith.addf %910, %909 : vector<2x96xf32>
    %912 = arith.divf %910, %911 : vector<2x96xf32>
    %913 = vector.extract_strided_slice %912 {offsets = [0, 0], sizes = [2, 32], strides = [1, 1]} : vector<2x96xf32> to vector<2x32xf32>
    %914 = vector.extract_strided_slice %912 {offsets = [0, 32], sizes = [2, 32], strides = [1, 1]} : vector<2x96xf32> to vector<2x32xf32>
    %915 = vector.extract_strided_slice %912 {offsets = [0, 64], sizes = [2, 32], strides = [1, 1]} : vector<2x96xf32> to vector<2x32xf32>
    %916 = vector.extract_strided_slice %890 {offsets = [0, 96], sizes = [2, 32], strides = [1, 1]} : vector<2x128xf32> to vector<2x32xf32>
    %917 = math.tanh %916 : vector<2x32xf32>
    %918 = arith.mulf %914, %878 : vector<2x32xf32>
    %919 = arith.mulf %913, %917 : vector<2x32xf32>
    %920 = arith.addf %918, %919 : vector<2x32xf32>
    %921 = math.tanh %920 : vector<2x32xf32>
    %922 = arith.mulf %915, %921 : vector<2x32xf32>
    %923 = arith.addf %881, %906 : vector<2x32xf32>
    %924 = arith.addf %882, %922 : vector<2x32xf32>
    %925 = tpu.concatenate %906, %922 in 1 : vector<2x32xf32>, vector<2x32xf32> -> vector<2x64xf32>
    %cst_168 = arith.constant dense<0.000000e+00> : vector<2x256xf32>
    %926 = tpu.matmul %925, %708, %cst_168 {dimension_numbers = #tpu.dot_dimension_numbers<[1], [0], [0], [1], [0, 0, 1, 1], [], []>} : vector<2x64xf32>, vector<64x256xf32>, vector<2x256xf32> -> vector<2x256xf32>
    %927 = vector.extract_strided_slice %707 {offsets = [10, 0], sizes = [2, 128], strides = [1, 1]} : vector<16x256xf32> to vector<2x128xf32>
    %928 = vector.extract_strided_slice %926 {offsets = [0, 0], sizes = [2, 128], strides = [1, 1]} : vector<2x256xf32> to vector<2x128xf32>
    %929 = arith.addf %927, %928 : vector<2x128xf32>
    %930 = vector.extract_strided_slice %707 {offsets = [4, 128], sizes = [2, 128], strides = [1, 1]} : vector<16x256xf32> to vector<2x128xf32>
    %931 = vector.extract_strided_slice %926 {offsets = [0, 128], sizes = [2, 128], strides = [1, 1]} : vector<2x256xf32> to vector<2x128xf32>
    %932 = arith.addf %930, %931 : vector<2x128xf32>
    %933 = vector.extract_strided_slice %929 {offsets = [0, 0], sizes = [2, 96], strides = [1, 1]} : vector<2x128xf32> to vector<2x96xf32>
    %934 = arith.negf %933 : vector<2x96xf32>
    %935 = math.exp %934 : vector<2x96xf32>
    %cst_169 = arith.constant 1.000000e+00 : f32
    %936 = vector.broadcast %cst_169 : f32 to vector<2x96xf32>
    %937 = arith.addf %936, %935 : vector<2x96xf32>
    %938 = arith.divf %936, %937 : vector<2x96xf32>
    %939 = vector.extract_strided_slice %938 {offsets = [0, 0], sizes = [2, 32], strides = [1, 1]} : vector<2x96xf32> to vector<2x32xf32>
    %940 = vector.extract_strided_slice %938 {offsets = [0, 32], sizes = [2, 32], strides = [1, 1]} : vector<2x96xf32> to vector<2x32xf32>
    %941 = vector.extract_strided_slice %938 {offsets = [0, 64], sizes = [2, 32], strides = [1, 1]} : vector<2x96xf32> to vector<2x32xf32>
    %942 = vector.extract_strided_slice %929 {offsets = [0, 96], sizes = [2, 32], strides = [1, 1]} : vector<2x128xf32> to vector<2x32xf32>
    %943 = math.tanh %942 : vector<2x32xf32>
    %944 = arith.mulf %940, %904 : vector<2x32xf32>
    %945 = arith.mulf %939, %943 : vector<2x32xf32>
    %946 = arith.addf %944, %945 : vector<2x32xf32>
    %947 = math.tanh %946 : vector<2x32xf32>
    %948 = arith.mulf %941, %947 : vector<2x32xf32>
    %949 = vector.extract_strided_slice %932 {offsets = [0, 0], sizes = [2, 96], strides = [1, 1]} : vector<2x128xf32> to vector<2x96xf32>
    %950 = arith.negf %949 : vector<2x96xf32>
    %951 = math.exp %950 : vector<2x96xf32>
    %cst_170 = arith.constant 1.000000e+00 : f32
    %952 = vector.broadcast %cst_170 : f32 to vector<2x96xf32>
    %953 = arith.addf %952, %951 : vector<2x96xf32>
    %954 = arith.divf %952, %953 : vector<2x96xf32>
    %955 = vector.extract_strided_slice %954 {offsets = [0, 0], sizes = [2, 32], strides = [1, 1]} : vector<2x96xf32> to vector<2x32xf32>
    %956 = vector.extract_strided_slice %954 {offsets = [0, 32], sizes = [2, 32], strides = [1, 1]} : vector<2x96xf32> to vector<2x32xf32>
    %957 = vector.extract_strided_slice %954 {offsets = [0, 64], sizes = [2, 32], strides = [1, 1]} : vector<2x96xf32> to vector<2x32xf32>
    %958 = vector.extract_strided_slice %932 {offsets = [0, 96], sizes = [2, 32], strides = [1, 1]} : vector<2x128xf32> to vector<2x32xf32>
    %959 = math.tanh %958 : vector<2x32xf32>
    %960 = arith.mulf %956, %920 : vector<2x32xf32>
    %961 = arith.mulf %955, %959 : vector<2x32xf32>
    %962 = arith.addf %960, %961 : vector<2x32xf32>
    %963 = math.tanh %962 : vector<2x32xf32>
    %964 = arith.mulf %957, %963 : vector<2x32xf32>
    %965 = arith.addf %923, %948 : vector<2x32xf32>
    %966 = arith.addf %924, %964 : vector<2x32xf32>
    %967 = tpu.concatenate %948, %964 in 1 : vector<2x32xf32>, vector<2x32xf32> -> vector<2x64xf32>
    %cst_171 = arith.constant dense<0.000000e+00> : vector<2x256xf32>
    %968 = tpu.matmul %967, %708, %cst_171 {dimension_numbers = #tpu.dot_dimension_numbers<[1], [0], [0], [1], [0, 0, 1, 1], [], []>} : vector<2x64xf32>, vector<64x256xf32>, vector<2x256xf32> -> vector<2x256xf32>
    %969 = vector.extract_strided_slice %707 {offsets = [12, 0], sizes = [2, 128], strides = [1, 1]} : vector<16x256xf32> to vector<2x128xf32>
    %970 = vector.extract_strided_slice %968 {offsets = [0, 0], sizes = [2, 128], strides = [1, 1]} : vector<2x256xf32> to vector<2x128xf32>
    %971 = arith.addf %969, %970 : vector<2x128xf32>
    %972 = vector.extract_strided_slice %707 {offsets = [2, 128], sizes = [2, 128], strides = [1, 1]} : vector<16x256xf32> to vector<2x128xf32>
    %973 = vector.extract_strided_slice %968 {offsets = [0, 128], sizes = [2, 128], strides = [1, 1]} : vector<2x256xf32> to vector<2x128xf32>
    %974 = arith.addf %972, %973 : vector<2x128xf32>
    %975 = vector.extract_strided_slice %971 {offsets = [0, 0], sizes = [2, 96], strides = [1, 1]} : vector<2x128xf32> to vector<2x96xf32>
    %976 = arith.negf %975 : vector<2x96xf32>
    %977 = math.exp %976 : vector<2x96xf32>
    %cst_172 = arith.constant 1.000000e+00 : f32
    %978 = vector.broadcast %cst_172 : f32 to vector<2x96xf32>
    %979 = arith.addf %978, %977 : vector<2x96xf32>
    %980 = arith.divf %978, %979 : vector<2x96xf32>
    %981 = vector.extract_strided_slice %980 {offsets = [0, 0], sizes = [2, 32], strides = [1, 1]} : vector<2x96xf32> to vector<2x32xf32>
    %982 = vector.extract_strided_slice %980 {offsets = [0, 32], sizes = [2, 32], strides = [1, 1]} : vector<2x96xf32> to vector<2x32xf32>
    %983 = vector.extract_strided_slice %980 {offsets = [0, 64], sizes = [2, 32], strides = [1, 1]} : vector<2x96xf32> to vector<2x32xf32>
    %984 = vector.extract_strided_slice %971 {offsets = [0, 96], sizes = [2, 32], strides = [1, 1]} : vector<2x128xf32> to vector<2x32xf32>
    %985 = math.tanh %984 : vector<2x32xf32>
    %986 = arith.mulf %982, %946 : vector<2x32xf32>
    %987 = arith.mulf %981, %985 : vector<2x32xf32>
    %988 = arith.addf %986, %987 : vector<2x32xf32>
    %989 = math.tanh %988 : vector<2x32xf32>
    %990 = arith.mulf %983, %989 : vector<2x32xf32>
    %991 = vector.extract_strided_slice %974 {offsets = [0, 0], sizes = [2, 96], strides = [1, 1]} : vector<2x128xf32> to vector<2x96xf32>
    %992 = arith.negf %991 : vector<2x96xf32>
    %993 = math.exp %992 : vector<2x96xf32>
    %cst_173 = arith.constant 1.000000e+00 : f32
    %994 = vector.broadcast %cst_173 : f32 to vector<2x96xf32>
    %995 = arith.addf %994, %993 : vector<2x96xf32>
    %996 = arith.divf %994, %995 : vector<2x96xf32>
    %997 = vector.extract_strided_slice %996 {offsets = [0, 0], sizes = [2, 32], strides = [1, 1]} : vector<2x96xf32> to vector<2x32xf32>
    %998 = vector.extract_strided_slice %996 {offsets = [0, 32], sizes = [2, 32], strides = [1, 1]} : vector<2x96xf32> to vector<2x32xf32>
    %999 = vector.extract_strided_slice %996 {offsets = [0, 64], sizes = [2, 32], strides = [1, 1]} : vector<2x96xf32> to vector<2x32xf32>
    %1000 = vector.extract_strided_slice %974 {offsets = [0, 96], sizes = [2, 32], strides = [1, 1]} : vector<2x128xf32> to vector<2x32xf32>
    %1001 = math.tanh %1000 : vector<2x32xf32>
    %1002 = arith.mulf %998, %962 : vector<2x32xf32>
    %1003 = arith.mulf %997, %1001 : vector<2x32xf32>
    %1004 = arith.addf %1002, %1003 : vector<2x32xf32>
    %1005 = math.tanh %1004 : vector<2x32xf32>
    %1006 = arith.mulf %999, %1005 : vector<2x32xf32>
    %1007 = arith.addf %965, %990 : vector<2x32xf32>
    %1008 = arith.addf %966, %1006 : vector<2x32xf32>
    %1009 = tpu.concatenate %990, %1006 in 1 : vector<2x32xf32>, vector<2x32xf32> -> vector<2x64xf32>
    %cst_174 = arith.constant dense<0.000000e+00> : vector<2x256xf32>
    %1010 = tpu.matmul %1009, %708, %cst_174 {dimension_numbers = #tpu.dot_dimension_numbers<[1], [0], [0], [1], [0, 0, 1, 1], [], []>} : vector<2x64xf32>, vector<64x256xf32>, vector<2x256xf32> -> vector<2x256xf32>
    %1011 = vector.extract_strided_slice %707 {offsets = [14, 0], sizes = [2, 128], strides = [1, 1]} : vector<16x256xf32> to vector<2x128xf32>
    %1012 = vector.extract_strided_slice %1010 {offsets = [0, 0], sizes = [2, 128], strides = [1, 1]} : vector<2x256xf32> to vector<2x128xf32>
    %1013 = arith.addf %1011, %1012 : vector<2x128xf32>
    %1014 = vector.extract_strided_slice %707 {offsets = [0, 128], sizes = [2, 128], strides = [1, 1]} : vector<16x256xf32> to vector<2x128xf32>
    %1015 = vector.extract_strided_slice %1010 {offsets = [0, 128], sizes = [2, 128], strides = [1, 1]} : vector<2x256xf32> to vector<2x128xf32>
    %1016 = arith.addf %1014, %1015 : vector<2x128xf32>
    %1017 = vector.extract_strided_slice %1013 {offsets = [0, 0], sizes = [2, 96], strides = [1, 1]} : vector<2x128xf32> to vector<2x96xf32>
    %1018 = arith.negf %1017 : vector<2x96xf32>
    %1019 = math.exp %1018 : vector<2x96xf32>
    %cst_175 = arith.constant 1.000000e+00 : f32
    %1020 = vector.broadcast %cst_175 : f32 to vector<2x96xf32>
    %1021 = arith.addf %1020, %1019 : vector<2x96xf32>
    %1022 = arith.divf %1020, %1021 : vector<2x96xf32>
    %1023 = vector.extract_strided_slice %1022 {offsets = [0, 0], sizes = [2, 32], strides = [1, 1]} : vector<2x96xf32> to vector<2x32xf32>
    %1024 = vector.extract_strided_slice %1022 {offsets = [0, 32], sizes = [2, 32], strides = [1, 1]} : vector<2x96xf32> to vector<2x32xf32>
    %1025 = vector.extract_strided_slice %1022 {offsets = [0, 64], sizes = [2, 32], strides = [1, 1]} : vector<2x96xf32> to vector<2x32xf32>
    %1026 = vector.extract_strided_slice %1013 {offsets = [0, 96], sizes = [2, 32], strides = [1, 1]} : vector<2x128xf32> to vector<2x32xf32>
    %1027 = math.tanh %1026 : vector<2x32xf32>
    %1028 = arith.mulf %1024, %988 : vector<2x32xf32>
    %1029 = arith.mulf %1023, %1027 : vector<2x32xf32>
    %1030 = arith.addf %1028, %1029 : vector<2x32xf32>
    %1031 = math.tanh %1030 : vector<2x32xf32>
    %1032 = arith.mulf %1025, %1031 : vector<2x32xf32>
    %1033 = vector.extract_strided_slice %1016 {offsets = [0, 0], sizes = [2, 96], strides = [1, 1]} : vector<2x128xf32> to vector<2x96xf32>
    %1034 = arith.negf %1033 : vector<2x96xf32>
    %1035 = math.exp %1034 : vector<2x96xf32>
    %cst_176 = arith.constant 1.000000e+00 : f32
    %1036 = vector.broadcast %cst_176 : f32 to vector<2x96xf32>
    %1037 = arith.addf %1036, %1035 : vector<2x96xf32>
    %1038 = arith.divf %1036, %1037 : vector<2x96xf32>
    %1039 = vector.extract_strided_slice %1038 {offsets = [0, 0], sizes = [2, 32], strides = [1, 1]} : vector<2x96xf32> to vector<2x32xf32>
    %1040 = vector.extract_strided_slice %1038 {offsets = [0, 32], sizes = [2, 32], strides = [1, 1]} : vector<2x96xf32> to vector<2x32xf32>
    %1041 = vector.extract_strided_slice %1038 {offsets = [0, 64], sizes = [2, 32], strides = [1, 1]} : vector<2x96xf32> to vector<2x32xf32>
    %1042 = vector.extract_strided_slice %1016 {offsets = [0, 96], sizes = [2, 32], strides = [1, 1]} : vector<2x128xf32> to vector<2x32xf32>
    %1043 = math.tanh %1042 : vector<2x32xf32>
    %1044 = arith.mulf %1040, %1004 : vector<2x32xf32>
    %1045 = arith.mulf %1039, %1043 : vector<2x32xf32>
    %1046 = arith.addf %1044, %1045 : vector<2x32xf32>
    %1047 = math.tanh %1046 : vector<2x32xf32>
    %1048 = arith.mulf %1041, %1047 : vector<2x32xf32>
    %1049 = arith.addf %1007, %1032 : vector<2x32xf32>
    %1050 = arith.addf %1008, %1048 : vector<2x32xf32>
    %cst_177 = arith.constant 1.250000e-01 : f32
    %1051 = vector.broadcast %cst_177 : f32 to vector<2x32xf32>
    %1052 = arith.mulf %1049, %1051 : vector<2x32xf32>
    %cst_178 = arith.constant 1.250000e-01 : f32
    %1053 = vector.broadcast %cst_178 : f32 to vector<2x32xf32>
    %1054 = arith.mulf %1050, %1053 : vector<2x32xf32>
    %c0_179 = arith.constant 0 : index
    %c0_180 = arith.constant 0 : index
    %1055 = vector.load %arg11[%c0_179, %c0_180] : memref<64x32xf32, #tpu.memory_space<vmem>>, vector<32x32xf32>
    %cst_181 = arith.constant dense<0.000000e+00> : vector<2x32xf32>
    %1056 = tpu.matmul %1052, %1055, %cst_181 {dimension_numbers = #tpu.dot_dimension_numbers<[1], [0], [0], [1], [0, 0, 1, 1], [], []>} : vector<2x32xf32>, vector<32x32xf32>, vector<2x32xf32> -> vector<2x32xf32>
    %c32_182 = arith.constant 32 : index
    %c0_183 = arith.constant 0 : index
    %1057 = vector.load %arg11[%c32_182, %c0_183] : memref<64x32xf32, #tpu.memory_space<vmem>>, vector<32x32xf32>
    %cst_184 = arith.constant dense<0.000000e+00> : vector<2x32xf32>
    %1058 = tpu.matmul %1054, %1057, %cst_184 {dimension_numbers = #tpu.dot_dimension_numbers<[1], [0], [0], [1], [0, 0, 1, 1], [], []>} : vector<2x32xf32>, vector<32x32xf32>, vector<2x32xf32> -> vector<2x32xf32>
    %1059 = arith.addf %1056, %1058 : vector<2x32xf32>
    %c0_185 = arith.constant 0 : index
    %c0_186 = arith.constant 0 : index
    %1060 = vector.load %arg12[%c0_185, %c0_186] : memref<1x32xf32, #tpu.memory_space<vmem>>, vector<1x32xf32>
    %1061 = vector.broadcast %1060 : vector<1x32xf32> to vector<2x32xf32>
    %1062 = arith.addf %1059, %1061 : vector<2x32xf32>
    %c0_187 = arith.constant 0 : index
    %c0_188 = arith.constant 0 : index
    %1063 = vector.load %arg13[%c0_187, %c0_188] : memref<32x16xf32, #tpu.memory_space<vmem>>, vector<32x16xf32>
    %cst_189 = arith.constant dense<0.000000e+00> : vector<2x16xf32>
    %1064 = tpu.matmul %1062, %1063, %cst_189 {dimension_numbers = #tpu.dot_dimension_numbers<[1], [0], [0], [1], [0, 0, 1, 1], [], []>} : vector<2x32xf32>, vector<32x16xf32>, vector<2x16xf32> -> vector<2x16xf32>
    %c0_190 = arith.constant 0 : index
    %c0_191 = arith.constant 0 : index
    %1065 = vector.load %arg14[%c0_190, %c0_191] : memref<1x16xf32, #tpu.memory_space<vmem>>, vector<1x16xf32>
    %1066 = vector.broadcast %1065 : vector<1x16xf32> to vector<2x16xf32>
    %1067 = arith.addf %1064, %1066 : vector<2x16xf32>
    %c0_192 = arith.constant 0 : index
    %c0_193 = arith.constant 0 : index
    %1068 = vector.load %arg15[%c0_192, %c0_193] : memref<2x16xf32, #tpu.memory_space<vmem>>, vector<2x16xf32>
    tpu.vector_store %arg15[%c0_192, %c0_193], %1067 {strides = array<i32>} : memref<2x16xf32, #tpu.memory_space<vmem>>, vector<2x16xf32>,
    return
  }
  func.func @transform_0(%arg0: i32) -> (i32, i32) {
    %c0_i32 = arith.constant 0 : i32
    %c0_i32_0 = arith.constant 0 : i32
    %c0_i32_1 = arith.constant 0 : i32
    return %c0_i32, %c0_i32_0 : i32, i32
  }
  func.func @transform_1(%arg0: i32) -> (i32, i32) {
    %c0_i32 = arith.constant 0 : i32
    %c0_i32_0 = arith.constant 0 : i32
    %c0_i32_1 = arith.constant 0 : i32
    return %c0_i32, %c0_i32_0 : i32, i32
  }
  func.func @transform_2(%arg0: i32) -> (i32, i32) {
    %c0_i32 = arith.constant 0 : i32
    %c0_i32_0 = arith.constant 0 : i32
    %c0_i32_1 = arith.constant 0 : i32
    return %c0_i32, %c0_i32_0 : i32, i32
  }
  func.func @transform_3(%arg0: i32) -> (i32, i32) {
    %c0_i32 = arith.constant 0 : i32
    %c0_i32_0 = arith.constant 0 : i32
    %c0_i32_1 = arith.constant 0 : i32
    return %c0_i32, %c0_i32_0 : i32, i32
  }
  func.func @transform_4(%arg0: i32) -> (i32, i32) {
    %c0_i32 = arith.constant 0 : i32
    %c0_i32_0 = arith.constant 0 : i32
    %c0_i32_1 = arith.constant 0 : i32
    return %c0_i32, %c0_i32_0 : i32, i32
  }
  func.func @transform_5(%arg0: i32) -> (i32, i32) {
    %c0_i32 = arith.constant 0 : i32
    %c0_i32_0 = arith.constant 0 : i32
    %c0_i32_1 = arith.constant 0 : i32
    return %c0_i32, %c0_i32_0 : i32, i32
  }
  func.func @transform_6(%arg0: i32) -> (i32, i32) {
    %c0_i32 = arith.constant 0 : i32
    %c0_i32_0 = arith.constant 0 : i32
    %c0_i32_1 = arith.constant 0 : i32
    return %c0_i32, %c0_i32_0 : i32, i32
  }
  func.func @transform_7(%arg0: i32) -> (i32, i32) {
    %c0_i32 = arith.constant 0 : i32
    %c0_i32_0 = arith.constant 0 : i32
    %c0_i32_1 = arith.constant 0 : i32
    return %c0_i32, %c0_i32_0 : i32, i32
  }
  func.func @transform_8(%arg0: i32) -> (i32, i32) {
    %c0_i32 = arith.constant 0 : i32
    %c0_i32_0 = arith.constant 0 : i32
    %c0_i32_1 = arith.constant 0 : i32
    return %c0_i32, %c0_i32_0 : i32, i32
  }
  func.func @transform_9(%arg0: i32) -> (i32, i32) {
    %c0_i32 = arith.constant 0 : i32
    %c0_i32_0 = arith.constant 0 : i32
    %c0_i32_1 = arith.constant 0 : i32
    return %c0_i32, %c0_i32_0 : i32, i32
  }
  func.func @transform_10(%arg0: i32) -> (i32, i32) {
    %c0_i32 = arith.constant 0 : i32
    %c0_i32_0 = arith.constant 0 : i32
    %c0_i32_1 = arith.constant 0 : i32
    return %c0_i32, %c0_i32_0 : i32, i32
  }
  func.func @transform_11(%arg0: i32) -> (i32, i32) {
    %c0_i32 = arith.constant 0 : i32
    %c0_i32_0 = arith.constant 0 : i32
    %c0_i32_1 = arith.constant 0 : i32
    return %c0_i32, %c0_i32_0 : i32, i32
  }
  func.func @transform_12(%arg0: i32) -> (i32, i32) {
    %c0_i32 = arith.constant 0 : i32
    %c0_i32_0 = arith.constant 0 : i32
    %c0_i32_1 = arith.constant 0 : i32
    return %c0_i32, %c0_i32_0 : i32, i32
  }
  func.func @transform_13(%arg0: i32) -> (i32, i32) {
    %c0_i32 = arith.constant 0 : i32
    %c0_i32_0 = arith.constant 0 : i32
    %c0_i32_1 = arith.constant 0 : i32
    return %c0_i32, %c0_i32_0 : i32, i32
  }
  func.func @transform_14(%arg0: i32) -> (i32, i32) {
    %c0_i32 = arith.constant 0 : i32
    %c0_i32_0 = arith.constant 0 : i32
    %c0_i32_1 = arith.constant 0 : i32
    return %c0_i32, %c0_i32_0 : i32, i32
  }
}

</mosaic_0001>

<llo_original>
// kernel: lstm_forward.1
$region0: #{lstm_forward.1}
  #allocation0 [shape = 'u32[]', space=smem, size = 0x4, offset = 0x4, fixed_abs, tag = 'smem constant byte address 0x4 - core index']
  #allocation1 [shape = 'u32[72,128]{1,0:T(1,128)}', space=vmem, size = 0x9000, scoped, tag = 'internal scratch']
  #allocation2 [shape = 'f32[16,32]{1,0:T(8,128)}', space=vmem, size = 0x2000, scoped, tag = 'scratch operand']
  #allocation3 [shape = 'f32[16,32]{1,0:T(8,128)}', space=vmem, size = 0x2000, scoped, tag = 'scratch operand']
  %s0 = inlined_call_operand.vmem [shape: f32[16,232], index: 0, kind: input, shape index: {}]
  %s1 = inlined_call_operand.vmem [shape: f32[232,256], index: 1, kind: input, shape index: {}]
  %s2 = inlined_call_operand.vmem [shape: f32[64,256], index: 2, kind: input, shape index: {}]
  %s3 = inlined_call_operand.vmem [shape: f32[1,256], index: 3, kind: input, shape index: {}]
  %s4 = inlined_call_operand.vmem [shape: f32[64,256], index: 4, kind: input, shape index: {}]
  %s5 = inlined_call_operand.vmem [shape: f32[64,256], index: 5, kind: input, shape index: {}]
  %s6 = inlined_call_operand.vmem [shape: f32[1,256], index: 6, kind: input, shape index: {}]
  %s7 = inlined_call_operand.vmem [shape: f32[64,256], index: 7, kind: input, shape index: {}]
  %s8 = inlined_call_operand.vmem [shape: f32[64,256], index: 8, kind: input, shape index: {}]
  %s9 = inlined_call_operand.vmem [shape: f32[1,256], index: 9, kind: input, shape index: {}]
  %s10 = inlined_call_operand.vmem [shape: f32[64,32], index: 10, kind: input, shape index: {}]
  %s11 = inlined_call_operand.vmem [shape: f32[1,32], index: 11, kind: input, shape index: {}]
  %s12 = inlined_call_operand.vmem [shape: f32[32,16], index: 12, kind: input, shape index: {}]
  %s13 = inlined_call_operand.vmem [shape: f32[1,16], index: 13, kind: input, shape index: {}]
  %s14 = inlined_call_operand.hbm [shape: f32[2,16], index: 14, kind: output, shape index: {}]
  %s15 = sld [smem:[#allocation0]]
  $region66: #{lstm_forward.1} parent=0
    _
  %s17 = ssub.s32 1, %s15
  %s18 = scalar_select 0, %s17, %s15
  $region1: #{lstm_forward.1} parent=0
    #allocation4 [shape = 'u8[1024]{0}', space=vmem, size = 0x400, scoped, tag = 'output window, operand 0, single buffered']
    #allocation5 [shape = 's32[1]{0}', space=sflag, size = 0x4, scoped, tag = 'scoped memory for lstm_forward.1']
    %19 = vsyncpa [#allocation5], 0
    // Predicated region
    $region2: #{lstm_forward.1} parent=1 // pred_check
      _
    $region3: #{lstm_forward.1} parent=1 // pred_check_branch
      %21 = sbr.rel (0) target = $region5
    $region4: #{lstm_forward.1} parent=1 // pred_region
      _
    $region5: #{lstm_forward.1} parent=1 // pred_fallthru
      _
    // Predicated region
    $region6: #{lstm_forward.1} parent=1 // pred_check
      _
    $region7: #{lstm_forward.1} parent=1 // pred_check_branch
      %23 = sbr.rel (0) target = $region9
    $region8: #{lstm_forward.1} parent=1 // pred_region
      _
    $region9: #{lstm_forward.1} parent=1 // pred_fallthru
      _
    // Predicated region
    $region10: #{lstm_forward.1} parent=1 // pred_check
      _
    $region11: #{lstm_forward.1} parent=1 // pred_check_branch
      %25 = sbr.rel (0) target = $region13
    $region12: #{lstm_forward.1} parent=1 // pred_region
      _
    $region13: #{lstm_forward.1} parent=1 // pred_fallthru
      _
    // Predicated region
    $region14: #{lstm_forward.1} parent=1 // pred_check
      _
    $region15: #{lstm_forward.1} parent=1 // pred_check_branch
      %27 = sbr.rel (0) target = $region17
    $region16: #{lstm_forward.1} parent=1 // pred_region
      _
    $region17: #{lstm_forward.1} parent=1 // pred_fallthru
      _
    // Predicated region
    $region18: #{lstm_forward.1} parent=1 // pred_check
      _
    $region19: #{lstm_forward.1} parent=1 // pred_check_branch
      %29 = sbr.rel (0) target = $region21
    $region20: #{lstm_forward.1} parent=1 // pred_region
      _
    $region21: #{lstm_forward.1} parent=1 // pred_fallthru
      _
    // Predicated region
    $region22: #{lstm_forward.1} parent=1 // pred_check
      _
    $region23: #{lstm_forward.1} parent=1 // pred_check_branch
      %31 = sbr.rel (0) target = $region25
    $region24: #{lstm_forward.1} parent=1 // pred_region
      _
    $region25: #{lstm_forward.1} parent=1 // pred_fallthru
      _
    // Predicated region
    $region26: #{lstm_forward.1} parent=1 // pred_check
      _
    $region27: #{lstm_forward.1} parent=1 // pred_check_branch
      %33 = sbr.rel (0) target = $region29
    $region28: #{lstm_forward.1} parent=1 // pred_region
      _
    $region29: #{lstm_forward.1} parent=1 // pred_fallthru
      _
    // Predicated region
    $region30: #{lstm_forward.1} parent=1 // pred_check
      _
    $region31: #{lstm_forward.1} parent=1 // pred_check_branch
      %35 = sbr.rel (0) target = $region33
    $region32: #{lstm_forward.1} parent=1 // pred_region
      _
    $region33: #{lstm_forward.1} parent=1 // pred_fallthru
      _
    // Predicated region
    $region34: #{lstm_forward.1} parent=1 // pred_check
      _
    $region35: #{lstm_forward.1} parent=1 // pred_check_branch
      %37 = sbr.rel (0) target = $region37
    $region36: #{lstm_forward.1} parent=1 // pred_region
      _
    $region37: #{lstm_forward.1} parent=1 // pred_fallthru
      _
    // Predicated region
    $region38: #{lstm_forward.1} parent=1 // pred_check
      _
    $region39: #{lstm_forward.1} parent=1 // pred_check_branch
      %39 = sbr.rel (0) target = $region41
    $region40: #{lstm_forward.1} parent=1 // pred_region
      _
    $region41: #{lstm_forward.1} parent=1 // pred_fallthru
      _
    // Predicated region
    $region42: #{lstm_forward.1} parent=1 // pred_check
      _
    $region43: #{lstm_forward.1} parent=1 // pred_check_branch
      %41 = sbr.rel (0) target = $region45
    $region44: #{lstm_forward.1} parent=1 // pred_region
      _
    $region45: #{lstm_forward.1} parent=1 // pred_fallthru
      _
    // Predicated region
    $region46: #{lstm_forward.1} parent=1 // pred_check
      _
    $region47: #{lstm_forward.1} parent=1 // pred_check_branch
      %43 = sbr.rel (0) target = $region49
    $region48: #{lstm_forward.1} parent=1 // pred_region
      _
    $region49: #{lstm_forward.1} parent=1 // pred_fallthru
      _
    // Predicated region
    $region50: #{lstm_forward.1} parent=1 // pred_check
      _
    $region51: #{lstm_forward.1} parent=1 // pred_check_branch
      %45 = sbr.rel (0) target = $region53
    $region52: #{lstm_forward.1} parent=1 // pred_region
      _
    $region53: #{lstm_forward.1} parent=1 // pred_fallthru
      _
    // Predicated region
    $region54: #{lstm_forward.1} parent=1 // pred_check
      _
    $region55: #{lstm_forward.1} parent=1 // pred_check_branch
      %47 = sbr.rel (0) target = $region57
    $region56: #{lstm_forward.1} parent=1 // pred_region
      _
    $region57: #{lstm_forward.1} parent=1 // pred_fallthru
      _
    %v48 = vld [vmem:[%s0] sm:$0xff]
    %v49 = vld [vmem:[%s0 + $0x8] sm:$0xff]
    %v50 = vld [vmem:[%s0 + $0x10] sm:$0xff]
    %v51 = vld [vmem:[%s0 + $0x18] sm:$0xff]
    %v52 = vld [vmem:[%s1] sm:$0xff]
    %v53 = vld [vmem:[%s1 + $0x8] sm:$0xff]
    %v54 = vld [vmem:[%s1 + $0x10] sm:$0xff]
    %v55 = vld [vmem:[%s1 + $0x18] sm:$0xff]
    %v56 = vld [vmem:[%s1 + $0x20] sm:$0xff]
    %v57 = vld [vmem:[%s1 + $0x28] sm:$0xff]
    %v58 = vld [vmem:[%s1 + $0x30] sm:$0xff]
    %v59 = vld [vmem:[%s1 + $0x38] sm:$0xff]
    %v60 = vld [vmem:[%s1 + $0x40] sm:$0xff]
    %v61 = vld [vmem:[%s1 + $0x48] sm:$0xff]
    %v62 = vld [vmem:[%s1 + $0x50] sm:$0xff]
    %v63 = vld [vmem:[%s1 + $0x58] sm:$0xff]
    %v64 = vld [vmem:[%s1 + $0x60] sm:$0xff]
    %v65 = vld [vmem:[%s1 + $0x68] sm:$0xff]
    %v66 = vld [vmem:[%s1 + $0x70] sm:$0xff]
    %v67 = vld [vmem:[%s1 + $0x78] sm:$0xff]
    %v68 = vld [vmem:[%s1 + $0x80] sm:$0xff]
    %v69 = vld [vmem:[%s1 + $0x88] sm:$0xff]
    %v70 = vld [vmem:[%s1 + $0x90] sm:$0xff]
    %v71 = vld [vmem:[%s1 + $0x98] sm:$0xff]
    %v72 = vld [vmem:[%s1 + $0xa0] sm:$0xff]
    %v73 = vld [vmem:[%s1 + $0xa8] sm:$0xff]
    %v74 = vld [vmem:[%s1 + $0xb0] sm:$0xff]
    %v75 = vld [vmem:[%s1 + $0xb8] sm:$0xff]
    %v76 = vld [vmem:[%s1 + $0xc0] sm:$0xff]
    %v77 = vld [vmem:[%s1 + $0xc8] sm:$0xff]
    %v78 = vld [vmem:[%s1 + $0xd0] sm:$0xff]
    %v79 = vld [vmem:[%s1 + $0xd8] sm:$0xff]
    %v80 = vld [vmem:[%s1 + $0xe0] sm:$0xff]
    %v81 = vld [vmem:[%s1 + $0xe8] sm:$0xff]
    %v82 = vld [vmem:[%s1 + $0xf0] sm:$0xff]
    %v83 = vld [vmem:[%s1 + $0xf8] sm:$0xff]
    %v84 = vld [vmem:[%s1 + $0x100] sm:$0xff]
    %v85 = vld [vmem:[%s1 + $0x108] sm:$0xff]
    %v86 = vld [vmem:[%s1 + $0x110] sm:$0xff]
    %v87 = vld [vmem:[%s1 + $0x118] sm:$0xff]
    %v88 = vld [vmem:[%s1 + $0x120] sm:$0xff]
    %v89 = vld [vmem:[%s1 + $0x128] sm:$0xff]
    %v90 = vld [vmem:[%s1 + $0x130] sm:$0xff]
    %v91 = vld [vmem:[%s1 + $0x138] sm:$0xff]
    %v92 = vld [vmem:[%s1 + $0x140] sm:$0xff]
    %v93 = vld [vmem:[%s1 + $0x148] sm:$0xff]
    %v94 = vld [vmem:[%s1 + $0x150] sm:$0xff]
    %v95 = vld [vmem:[%s1 + $0x158] sm:$0xff]
    %v96 = vld [vmem:[%s1 + $0x160] sm:$0xff]
    %v97 = vld [vmem:[%s1 + $0x168] sm:$0xff]
    %v98 = vld [vmem:[%s1 + $0x170] sm:$0xff]
    %v99 = vld [vmem:[%s1 + $0x178] sm:$0xff]
    %v100 = vld [vmem:[%s1 + $0x180] sm:$0xff]
    %v101 = vld [vmem:[%s1 + $0x188] sm:$0xff]
    %v102 = vld [vmem:[%s1 + $0x190] sm:$0xff]
    %v103 = vld [vmem:[%s1 + $0x198] sm:$0xff]
    %v104 = vld [vmem:[%s1 + $0x1a0] sm:$0xff]
    %v105 = vld [vmem:[%s1 + $0x1a8] sm:$0xff]
    %v106 = vld [vmem:[%s1 + $0x1b0] sm:$0xff]
    %v107 = vld [vmem:[%s1 + $0x1b8] sm:$0xff]
    %v108 = vld [vmem:[%s1 + $0x1c0] sm:$0xff]
    %v109 = vld [vmem:[%s1 + $0x1c8] sm:$0xff]
    %v110 = vld [vmem:[%s3] sm:$0x3]
    %v112 = vperm.slane %v110, 0
    %v113 = vperm.slane %v110, 1
    %vm116 = vcmask 850944
    %v118 = vsel %vm116, %v49, 0
    %v121 = vsel %vm116, %v51, 0
    %123 = vmatpush.msra.mxu0 %v82
    %124 = vmatpush.msra.mxu0 %v80
    %125 = vmatpush.msra.mxu0 %v78
    %126 = vmatpush.msra.mxu0 %v76
    %127 = vmatpush.msra.mxu0 %v74
    %128 = vmatpush.msra.mxu0 %v72
    %129 = vmatpush.msra.mxu0 %v70
    %130 = vmatpush.msra.mxu0 %v68
    %131 = vmatpush.msra.mxu0 %v66
    %132 = vmatpush.msra.mxu0 %v64
    %133 = vmatpush.msra.mxu0 %v62
    %134 = vmatpush.msra.mxu0 %v60
    %135 = vmatpush.msra.mxu0 %v58
    %136 = vmatpush.msra.mxu0 %v56
    %137 = vmatpush.msra.mxu0 %v54
    %138 = vmatpush.msra.mxu0 %v52
    %139 = vmatmul.f32.gmra.mxu0 %v48
    %v140 = vpop.f32.mrf.mxu0
    %v141 = vadd.f32 %v112, %v140
    %142 = vmatmul.f32.gmra.mxu0 %v50
    %v143 = vpop.f32.mrf.mxu0
    %v144 = vadd.f32 %v112, %v143
    %145 = vdwg.mxu0
    %146 = vmatpush.msra.mxu0 0.0
    %147 = vmatpush.msra.mxu0 0.0
    %148 = vmatpush.msra.mxu0 0.0
    %149 = vmatpush.msra.mxu0 %v108
    %150 = vmatpush.msra.mxu0 %v106
    %151 = vmatpush.msra.mxu0 %v104
    %152 = vmatpush.msra.mxu0 %v102
    %153 = vmatpush.msra.mxu0 %v100
    %154 = vmatpush.msra.mxu0 %v98
    %155 = vmatpush.msra.mxu0 %v96
    %156 = vmatpush.msra.mxu0 %v94
    %157 = vmatpush.msra.mxu0 %v92
    %158 = vmatpush.msra.mxu0 %v90
    %159 = vmatpush.msra.mxu0 %v88
    %160 = vmatpush.msra.mxu0 %v86
    %161 = vmatpush.msra.mxu0 %v84
    %162 = vmatmul.f32.gmra.mxu0 %v118
    %v163 = vpop.f32.mrf.mxu0
    %v164 = vadd.f32 %v141, %v163
    %165 = vmatmul.f32.gmra.mxu0 %v121
    %v166 = vpop.f32.mrf.mxu0
    %v167 = vadd.f32 %v144, %v166
    %168 = vdwg.mxu0
    %169 = vmatpush.msra.mxu0 %v83
    %170 = vmatpush.msra.mxu0 %v81
    %171 = vmatpush.msra.mxu0 %v79
    %172 = vmatpush.msra.mxu0 %v77
    %173 = vmatpush.msra.mxu0 %v75
    %174 = vmatpush.msra.mxu0 %v73
    %175 = vmatpush.msra.mxu0 %v71
    %176 = vmatpush.msra.mxu0 %v69
    %177 = vmatpush.msra.mxu0 %v67
    %178 = vmatpush.msra.mxu0 %v65
    %179 = vmatpush.msra.mxu0 %v63
    %180 = vmatpush.msra.mxu0 %v61
    %181 = vmatpush.msra.mxu0 %v59
    %182 = vmatpush.msra.mxu0 %v57
    %183 = vmatpush.msra.mxu0 %v55
    %184 = vmatpush.msra.mxu0 %v53
    %185 = vmatmul.f32.gmra.mxu0 %v48
    %v186 = vpop.f32.mrf.mxu0
    %v187 = vadd.f32 %v113, %v186
    %188 = vmatmul.f32.gmra.mxu0 %v50
    %v189 = vpop.f32.mrf.mxu0
    %v190 = vadd.f32 %v113, %v189
    %191 = vdwg.mxu0
    %192 = vmatpush.msra.mxu0 0.0
    %193 = vmatpush.msra.mxu0 0.0
    %194 = vmatpush.msra.mxu0 0.0
    %195 = vmatpush.msra.mxu0 %v109
    %196 = vmatpush.msra.mxu0 %v107
    %197 = vmatpush.msra.mxu0 %v105
    %198 = vmatpush.msra.mxu0 %v103
    %199 = vmatpush.msra.mxu0 %v101
    %200 = vmatpush.msra.mxu0 %v99
    %201 = vmatpush.msra.mxu0 %v97
    %202 = vmatpush.msra.mxu0 %v95
    %203 = vmatpush.msra.mxu0 %v93
    %204 = vmatpush.msra.mxu0 %v91
    %205 = vmatpush.msra.mxu0 %v89
    %206 = vmatpush.msra.mxu0 %v87
    %207 = vmatpush.msra.mxu0 %v85
    %208 = vmatmul.f32.gmra.mxu0 %v118
    %v209 = vpop.f32.mrf.mxu0
    %v210 = vadd.f32 %v187, %v209
    %211 = vmatmul.f32.gmra.mxu0 %v121
    %v212 = vpop.f32.mrf.mxu0
    %v213 = vadd.f32 %v190, %v212
    %214 = vdwg.mxu0
    %v215 = vld [vmem:[%s2] sm:$0xff]
    %v216 = vld [vmem:[%s2 + $0x8] sm:$0xff]
    %v217 = vld [vmem:[%s2 + $0x10] sm:$0xff]
    %v218 = vld [vmem:[%s2 + $0x18] sm:$0xff]
    %v219 = vld [vmem:[%s2 + $0x20] sm:$0xff]
    %v220 = vld [vmem:[%s2 + $0x28] sm:$0xff]
    %v221 = vld [vmem:[%s2 + $0x30] sm:$0xff]
    %v222 = vld [vmem:[%s2 + $0x38] sm:$0xff]
    %v223 = vld [vmem:[%s2 + $0x40] sm:$0xff]
    %v224 = vld [vmem:[%s2 + $0x48] sm:$0xff]
    %v225 = vld [vmem:[%s2 + $0x50] sm:$0xff]
    %v226 = vld [vmem:[%s2 + $0x58] sm:$0xff]
    %v227 = vld [vmem:[%s2 + $0x60] sm:$0xff]
    %v228 = vld [vmem:[%s2 + $0x68] sm:$0xff]
    %v229 = vld [vmem:[%s2 + $0x70] sm:$0xff]
    %v230 = vld [vmem:[%s2 + $0x78] sm:$0xff]
    %vm231 = vcmask 523264
    %v233 = vsel %vm231, 0.0, 0
    %235 = vmatpush.msra.mxu0 0.0
    %236 = vmatpush.msra.mxu0 0.0
    %237 = vmatpush.msra.mxu0 0.0
    %238 = vmatpush.msra.mxu0 0.0
    %239 = vmatpush.msra.mxu0 0.0
    %240 = vmatpush.msra.mxu0 0.0
    %241 = vmatpush.msra.mxu0 0.0
    %242 = vmatpush.msra.mxu0 0.0
    %243 = vmatpush.msra.mxu0 %v229
    %244 = vmatpush.msra.mxu0 %v227
    %245 = vmatpush.msra.mxu0 %v225
    %246 = vmatpush.msra.mxu0 %v223
    %247 = vmatpush.msra.mxu0 %v221
    %248 = vmatpush.msra.mxu0 %v219
    %249 = vmatpush.msra.mxu0 %v217
    %250 = vmatpush.msra.mxu0 %v215
    %251 = vmatmul.f32.gmra.mxu0 %v233
    %v252 = vpop.f32.mrf.mxu0
    %v253 = vadd.f32 0.0, %v252
    %254 = vdwg.mxu0
    %255 = vmatpush.msra.mxu0 0.0
    %256 = vmatpush.msra.mxu0 0.0
    %257 = vmatpush.msra.mxu0 0.0
    %258 = vmatpush.msra.mxu0 0.0
    %259 = vmatpush.msra.mxu0 0.0
    %260 = vmatpush.msra.mxu0 0.0
    %261 = vmatpush.msra.mxu0 0.0
    %262 = vmatpush.msra.mxu0 0.0
    %263 = vmatpush.msra.mxu0 %v230
    %264 = vmatpush.msra.mxu0 %v228
    %265 = vmatpush.msra.mxu0 %v226
    %266 = vmatpush.msra.mxu0 %v224
    %267 = vmatpush.msra.mxu0 %v222
    %268 = vmatpush.msra.mxu0 %v220
    %269 = vmatpush.msra.mxu0 %v218
    %270 = vmatpush.msra.mxu0 %v216
    %271 = vmatmul.f32.gmra.mxu0 %v233
    %v272 = vpop.f32.mrf.mxu0
    %v273 = vadd.f32 0.0, %v272
    %274 = vdwg.mxu0
    %v275 = vadd.f32 %v164, %v253
    %v277 = vrot.slane %v273, 2
    %v279 = vadd.f32 %v213, %v277
    %v280 = vxor.u32 %v275, 2147483648
    %v281 = vmul.f32 %v280, 1.442695
    %v282 = vpow.pop %v281
    %v283 = vadd.f32 %v282, 1.0
    %v284 = vrcp.pop %v283
    %v285 = vmul.f32 %v283, %v284
    %v286 = vsub.f32 1.0, %v285
    %v287 = vmul.f32 %v284, %v286
    %v288 = vadd.f32 %v284, %v287
    %vm289 = vweird.f32 %v283
    %vm290 = vweird.f32 %v284
    %vm291 = vmor %vm289, %vm290
    %v292 = vsel %vm291, %v284, %v288
    %v293 = vand.u32 2147483647, %v283
    %vm294 = vcmp.eq.f32.partialorder %v293, 8.507059e+37
    %v295 = vand.u32 %v283, 2147483648
    %v296 = vor.u32 1.1754944e-38, %v295
    %v297 = vsel %vm294, %v296, %v292
    %v298 = vmul.f32 1.0, %v297
    %v299 = vtanh.pop %v275
    %v300 = vmul.f32 %v298, 0.0
    %302 = vrot.lane.b32.xlu0 %v299, 32
    %v303 = vpop.permute.xlu0 %302
    %v305 = vmul.f32 %v298, %v303
    %307 = vrot.lane.b32.xlu0 %v305, 32
    %v308 = vpop.permute.xlu0 %307
    %v310 = vadd.f32 %v300, %v308
    %v311 = vtanh.pop %v310
    %313 = vrot.lane.b32.xlu0 %v311, 32
    %v314 = vpop.permute.xlu0 %313
    %v316 = vmul.f32 %v298, %v314
    %v317 = vxor.u32 %v279, 2147483648
    %v318 = vmul.f32 %v317, 1.442695
    %v319 = vpow.pop %v318
    %v320 = vadd.f32 %v319, 1.0
    %v321 = vrcp.pop %v320
    %v322 = vmul.f32 %v320, %v321
    %v323 = vsub.f32 1.0, %v322
    %v324 = vmul.f32 %v321, %v323
    %v325 = vadd.f32 %v321, %v324
    %vm326 = vweird.f32 %v320
    %vm327 = vweird.f32 %v321
    %vm328 = vmor %vm326, %vm327
    %v329 = vsel %vm328, %v321, %v325
    %v330 = vand.u32 2147483647, %v320
    %vm331 = vcmp.eq.f32.partialorder %v330, 8.507059e+37
    %v332 = vand.u32 %v320, 2147483648
    %v333 = vor.u32 1.1754944e-38, %v332
    %v334 = vsel %vm331, %v333, %v329
    %v335 = vmul.f32 1.0, %v334
    %v336 = vtanh.pop %v279
    %v337 = vmul.f32 %v335, 0.0
    %339 = vrot.lane.b32.xlu0 %v336, 32
    %v340 = vpop.permute.xlu0 %339
    %v342 = vmul.f32 %v335, %v340
    %344 = vrot.lane.b32.xlu0 %v342, 32
    %v345 = vpop.permute.xlu0 %344
    %v347 = vadd.f32 %v337, %v345
    %v348 = vtanh.pop %v347
    %350 = vrot.lane.b32.xlu0 %v348, 32
    %v351 = vpop.permute.xlu0 %350
    %v353 = vmul.f32 %v335, %v351
    %355 = vrot.lane.b32.xlu0 %v316, 64
    %v356 = vpop.permute.xlu0 %355
    %vm358 = vcmask 254976
    %359 = vst.msk [vmem:[#allocation2] sm:$0x3] %vm358, %v356
    %361 = vrot.lane.b32.xlu0 %v353, 64
    %v362 = vpop.permute.xlu0 %361
    %vm364 = vcmask 261126
    %365 = vst.msk [vmem:[#allocation3 + $0x8] sm:$0xc0] %vm364, %v362
    %v366 = vrot.slane %v353, 6
    %367 = vrot.lane.b32.xlu0 %v366, 96
    %v368 = vpop.permute.xlu0 %367
    %vm370 = vcmask 261120
    %v371 = vsel %vm370, %v356, %v368
    %v373 = vsel %vm231, %v371, 0
    %375 = vmatpush.msra.mxu0 0.0
    %376 = vmatpush.msra.mxu0 0.0
    %377 = vmatpush.msra.mxu0 0.0
    %378 = vmatpush.msra.mxu0 0.0
    %379 = vmatpush.msra.mxu0 0.0
    %380 = vmatpush.msra.mxu0 0.0
    %381 = vmatpush.msra.mxu0 0.0
    %382 = vmatpush.msra.mxu0 0.0
    %383 = vmatpush.msra.mxu0 %v229
    %384 = vmatpush.msra.mxu0 %v227
    %385 = vmatpush.msra.mxu0 %v225
    %386 = vmatpush.msra.mxu0 %v223
    %387 = vmatpush.msra.mxu0 %v221
    %388 = vmatpush.msra.mxu0 %v219
    %389 = vmatpush.msra.mxu0 %v217
    %390 = vmatpush.msra.mxu0 %v215
    %391 = vmatmul.f32.gmra.mxu0 %v373
    %v392 = vpop.f32.mrf.mxu0
    %v393 = vadd.f32 0.0, %v392
    %394 = vdwg.mxu0
    %395 = vmatpush.msra.mxu0 0.0
    %396 = vmatpush.msra.mxu0 0.0
    %397 = vmatpush.msra.mxu0 0.0
    %398 = vmatpush.msra.mxu0 0.0
    %399 = vmatpush.msra.mxu0 0.0
    %400 = vmatpush.msra.mxu0 0.0
    %401 = vmatpush.msra.mxu0 0.0
    %402 = vmatpush.msra.mxu0 0.0
    %403 = vmatpush.msra.mxu0 %v230
    %404 = vmatpush.msra.mxu0 %v228
    %405 = vmatpush.msra.mxu0 %v226
    %406 = vmatpush.msra.mxu0 %v224
    %407 = vmatpush.msra.mxu0 %v222
    %408 = vmatpush.msra.mxu0 %v220
    %409 = vmatpush.msra.mxu0 %v218
    %410 = vmatpush.msra.mxu0 %v216
    %411 = vmatmul.f32.gmra.mxu0 %v373
    %v412 = vpop.f32.mrf.mxu0
    %v413 = vadd.f32 0.0, %v412
    %414 = vdwg.mxu0
    %v416 = vrot.slane %v393, 6
    %v418 = vadd.f32 %v164, %v416
    %v420 = vrot.slane %v413, 4
    %v422 = vadd.f32 %v213, %v420
    %v423 = vxor.u32 %v418, 2147483648
    %v424 = vmul.f32 %v423, 1.442695
    %v425 = vpow.pop %v424
    %v426 = vadd.f32 %v425, 1.0
    %v427 = vrcp.pop %v426
    %v428 = vmul.f32 %v426, %v427
    %v429 = vsub.f32 1.0, %v428
    %v430 = vmul.f32 %v427, %v429
    %v431 = vadd.f32 %v427, %v430
    %vm432 = vweird.f32 %v426
    %vm433 = vweird.f32 %v427
    %vm434 = vmor %vm432, %vm433
    %v435 = vsel %vm434, %v427, %v431
    %v436 = vand.u32 2147483647, %v426
    %vm437 = vcmp.eq.f32.partialorder %v436, 8.507059e+37
    %v438 = vand.u32 %v426, 2147483648
    %v439 = vor.u32 1.1754944e-38, %v438
    %v440 = vsel %vm437, %v439, %v435
    %v441 = vmul.f32 1.0, %v440
    %v442 = vtanh.pop %v418
    %v444 = vrot.slane %v310, 6
    %v446 = vmul.f32 %v441, %v444
    %448 = vrot.lane.b32.xlu0 %v442, 32
    %v449 = vpop.permute.xlu0 %448
    %v451 = vmul.f32 %v441, %v449
    %453 = vrot.lane.b32.xlu0 %v451, 32
    %v454 = vpop.permute.xlu0 %453
    %v456 = vadd.f32 %v446, %v454
    %v457 = vtanh.pop %v456
    %459 = vrot.lane.b32.xlu0 %v457, 32
    %v460 = vpop.permute.xlu0 %459
    %v462 = vmul.f32 %v441, %v460
    %v463 = vxor.u32 %v422, 2147483648
    %v464 = vmul.f32 %v463, 1.442695
    %v465 = vpow.pop %v464
    %v466 = vadd.f32 %v465, 1.0
    %v467 = vrcp.pop %v466
    %v468 = vmul.f32 %v466, %v467
    %v469 = vsub.f32 1.0, %v468
    %v470 = vmul.f32 %v467, %v469
    %v471 = vadd.f32 %v467, %v470
    %vm472 = vweird.f32 %v466
    %vm473 = vweird.f32 %v467
    %vm474 = vmor %vm472, %vm473
    %v475 = vsel %vm474, %v467, %v471
    %v476 = vand.u32 2147483647, %v466
    %vm477 = vcmp.eq.f32.partialorder %v476, 8.507059e+37
    %v478 = vand.u32 %v466, 2147483648
    %v479 = vor.u32 1.1754944e-38, %v478
    %v480 = vsel %vm477, %v479, %v475
    %v481 = vmul.f32 1.0, %v480
    %v482 = vtanh.pop %v422
    %v484 = vrot.slane %v347, 2
    %v486 = vmul.f32 %v481, %v484
    %488 = vrot.lane.b32.xlu0 %v482, 32
    %v489 = vpop.permute.xlu0 %488
    %v491 = vmul.f32 %v481, %v489
    %493 = vrot.lane.b32.xlu0 %v491, 32
    %v494 = vpop.permute.xlu0 %493
    %v496 = vadd.f32 %v486, %v494
    %v497 = vtanh.pop %v496
    %499 = vrot.lane.b32.xlu0 %v497, 32
    %v500 = vpop.permute.xlu0 %499
    %v502 = vmul.f32 %v481, %v500
    %504 = vrot.lane.b32.xlu0 %v462, 64
    %v505 = vpop.permute.xlu0 %504
    %vm507 = vcmask 257026
    %508 = vst.msk [vmem:[#allocation2] sm:$0xc] %vm507, %v505
    %510 = vrot.lane.b32.xlu0 %v502, 64
    %v511 = vpop.permute.xlu0 %510
    %vm513 = vcmask 259076
    %514 = vst.msk [vmem:[#allocation3 + $0x8] sm:$0x30] %vm513, %v511
    %v515 = vrot.slane %v502, 2
    %516 = vrot.lane.b32.xlu0 %v515, 96
    %v517 = vpop.permute.xlu0 %516
    %v519 = vsel %vm370, %v505, %v517
    %v521 = vrot.slane %v519, 2
    %v522 = vsel %vm231, %v521, 0
    %524 = vmatpush.msra.mxu0 0.0
    %525 = vmatpush.msra.mxu0 0.0
    %526 = vmatpush.msra.mxu0 0.0
    %527 = vmatpush.msra.mxu0 0.0
    %528 = vmatpush.msra.mxu0 0.0
    %529 = vmatpush.msra.mxu0 0.0
    %530 = vmatpush.msra.mxu0 0.0
    %531 = vmatpush.msra.mxu0 0.0
    %532 = vmatpush.msra.mxu0 %v229
    %533 = vmatpush.msra.mxu0 %v227
    %534 = vmatpush.msra.mxu0 %v225
    %535 = vmatpush.msra.mxu0 %v223
    %536 = vmatpush.msra.mxu0 %v221
    %537 = vmatpush.msra.mxu0 %v219
    %538 = vmatpush.msra.mxu0 %v217
    %539 = vmatpush.msra.mxu0 %v215
    %540 = vmatmul.f32.gmra.mxu0 %v522
    %v541 = vpop.f32.mrf.mxu0
    %v542 = vadd.f32 0.0, %v541
    %543 = vdwg.mxu0
    %544 = vmatpush.msra.mxu0 0.0
    %545 = vmatpush.msra.mxu0 0.0
    %546 = vmatpush.msra.mxu0 0.0
    %547 = vmatpush.msra.mxu0 0.0
    %548 = vmatpush.msra.mxu0 0.0
    %549 = vmatpush.msra.mxu0 0.0
    %550 = vmatpush.msra.mxu0 0.0
    %551 = vmatpush.msra.mxu0 0.0
    %552 = vmatpush.msra.mxu0 %v230
    %553 = vmatpush.msra.mxu0 %v228
    %554 = vmatpush.msra.mxu0 %v226
    %555 = vmatpush.msra.mxu0 %v224
    %556 = vmatpush.msra.mxu0 %v222
    %557 = vmatpush.msra.mxu0 %v220
    %558 = vmatpush.msra.mxu0 %v218
    %559 = vmatpush.msra.mxu0 %v216
    %560 = vmatmul.f32.gmra.mxu0 %v522
    %v561 = vpop.f32.mrf.mxu0
    %v562 = vadd.f32 0.0, %v561
    %563 = vdwg.mxu0
    %v565 = vrot.slane %v542, 4
    %v567 = vadd.f32 %v164, %v565
    %v569 = vrot.slane %v562, 6
    %v571 = vadd.f32 %v213, %v569
    %v572 = vxor.u32 %v567, 2147483648
    %v573 = vmul.f32 %v572, 1.442695
    %v574 = vpow.pop %v573
    %v575 = vadd.f32 %v574, 1.0
    %v576 = vrcp.pop %v575
    %v577 = vmul.f32 %v575, %v576
    %v578 = vsub.f32 1.0, %v577
    %v579 = vmul.f32 %v576, %v578
    %v580 = vadd.f32 %v576, %v579
    %vm581 = vweird.f32 %v575
    %vm582 = vweird.f32 %v576
    %vm583 = vmor %vm581, %vm582
    %v584 = vsel %vm583, %v576, %v580
    %v585 = vand.u32 2147483647, %v575
    %vm586 = vcmp.eq.f32.partialorder %v585, 8.507059e+37
    %v587 = vand.u32 %v575, 2147483648
    %v588 = vor.u32 1.1754944e-38, %v587
    %v589 = vsel %vm586, %v588, %v584
    %v590 = vmul.f32 1.0, %v589
    %v591 = vtanh.pop %v567
    %v593 = vrot.slane %v456, 6
    %v595 = vmul.f32 %v590, %v593
    %597 = vrot.lane.b32.xlu0 %v591, 32
    %v598 = vpop.permute.xlu0 %597
    %v600 = vmul.f32 %v590, %v598
    %602 = vrot.lane.b32.xlu0 %v600, 32
    %v603 = vpop.permute.xlu0 %602
    %v605 = vadd.f32 %v595, %v603
    %v606 = vtanh.pop %v605
    %608 = vrot.lane.b32.xlu0 %v606, 32
    %v609 = vpop.permute.xlu0 %608
    %v611 = vmul.f32 %v590, %v609
    %v612 = vxor.u32 %v571, 2147483648
    %v613 = vmul.f32 %v612, 1.442695
    %v614 = vpow.pop %v613
    %v615 = vadd.f32 %v614, 1.0
    %v616 = vrcp.pop %v615
    %v617 = vmul.f32 %v615, %v616
    %v618 = vsub.f32 1.0, %v617
    %v619 = vmul.f32 %v616, %v618
    %v620 = vadd.f32 %v616, %v619
    %vm621 = vweird.f32 %v615
    %vm622 = vweird.f32 %v616
    %vm623 = vmor %vm621, %vm622
    %v624 = vsel %vm623, %v616, %v620
    %v625 = vand.u32 2147483647, %v615
    %vm626 = vcmp.eq.f32.partialorder %v625, 8.507059e+37
    %v627 = vand.u32 %v615, 2147483648
    %v628 = vor.u32 1.1754944e-38, %v627
    %v629 = vsel %vm626, %v628, %v624
    %v630 = vmul.f32 1.0, %v629
    %v631 = vtanh.pop %v571
    %v633 = vrot.slane %v496, 2
    %v635 = vmul.f32 %v630, %v633
    %637 = vrot.lane.b32.xlu0 %v631, 32
    %v638 = vpop.permute.xlu0 %637
    %v640 = vmul.f32 %v630, %v638
    %642 = vrot.lane.b32.xlu0 %v640, 32
    %v643 = vpop.permute.xlu0 %642
    %v645 = vadd.f32 %v635, %v643
    %v646 = vtanh.pop %v645
    %648 = vrot.lane.b32.xlu0 %v646, 32
    %v649 = vpop.permute.xlu0 %648
    %v651 = vmul.f32 %v630, %v649
    %653 = vrot.lane.b32.xlu0 %v611, 64
    %v654 = vpop.permute.xlu0 %653
    %656 = vst.msk [vmem:[#allocation2] sm:$0x30] %vm513, %v654
    %658 = vrot.lane.b32.xlu0 %v651, 64
    %v659 = vpop.permute.xlu0 %658
    %661 = vst.msk [vmem:[#allocation3 + $0x8] sm:$0xc] %vm507, %v659
    %v662 = vrot.slane %v651, 6
    %663 = vrot.lane.b32.xlu0 %v662, 96
    %v664 = vpop.permute.xlu0 %663
    %v666 = vsel %vm370, %v654, %v664
    %v668 = vrot.slane %v666, 4
    %v669 = vsel %vm231, %v668, 0
    %671 = vmatpush.msra.mxu0 0.0
    %672 = vmatpush.msra.mxu0 0.0
    %673 = vmatpush.msra.mxu0 0.0
    %674 = vmatpush.msra.mxu0 0.0
    %675 = vmatpush.msra.mxu0 0.0
    %676 = vmatpush.msra.mxu0 0.0
    %677 = vmatpush.msra.mxu0 0.0
    %678 = vmatpush.msra.mxu0 0.0
    %679 = vmatpush.msra.mxu0 %v229
    %680 = vmatpush.msra.mxu0 %v227
    %681 = vmatpush.msra.mxu0 %v225
    %682 = vmatpush.msra.mxu0 %v223
    %683 = vmatpush.msra.mxu0 %v221
    %684 = vmatpush.msra.mxu0 %v219
    %685 = vmatpush.msra.mxu0 %v217
    %686 = vmatpush.msra.mxu0 %v215
    %687 = vmatmul.f32.gmra.mxu0 %v669
    %v688 = vpop.f32.mrf.mxu0
    %v689 = vadd.f32 0.0, %v688
    %690 = vdwg.mxu0
    %691 = vmatpush.msra.mxu0 0.0
    %692 = vmatpush.msra.mxu0 0.0
    %693 = vmatpush.msra.mxu0 0.0
    %694 = vmatpush.msra.mxu0 0.0
    %695 = vmatpush.msra.mxu0 0.0
    %696 = vmatpush.msra.mxu0 0.0
    %697 = vmatpush.msra.mxu0 0.0
    %698 = vmatpush.msra.mxu0 0.0
    %699 = vmatpush.msra.mxu0 %v230
    %700 = vmatpush.msra.mxu0 %v228
    %701 = vmatpush.msra.mxu0 %v226
    %702 = vmatpush.msra.mxu0 %v224
    %703 = vmatpush.msra.mxu0 %v222
    %704 = vmatpush.msra.mxu0 %v220
    %705 = vmatpush.msra.mxu0 %v218
    %706 = vmatpush.msra.mxu0 %v216
    %707 = vmatmul.f32.gmra.mxu0 %v669
    %v708 = vpop.f32.mrf.mxu0
    %v709 = vadd.f32 0.0, %v708
    %710 = vdwg.mxu0
    %v712 = vrot.slane %v689, 2
    %v714 = vadd.f32 %v164, %v712
    %v715 = vadd.f32 %v213, %v709
    %v716 = vxor.u32 %v714, 2147483648
    %v717 = vmul.f32 %v716, 1.442695
    %v718 = vpow.pop %v717
    %v719 = vadd.f32 %v718, 1.0
    %v720 = vrcp.pop %v719
    %v721 = vmul.f32 %v719, %v720
    %v722 = vsub.f32 1.0, %v721
    %v723 = vmul.f32 %v720, %v722
    %v724 = vadd.f32 %v720, %v723
    %vm725 = vweird.f32 %v719
    %vm726 = vweird.f32 %v720
    %vm727 = vmor %vm725, %vm726
    %v728 = vsel %vm727, %v720, %v724
    %v729 = vand.u32 2147483647, %v719
    %vm730 = vcmp.eq.f32.partialorder %v729, 8.507059e+37
    %v731 = vand.u32 %v719, 2147483648
    %v732 = vor.u32 1.1754944e-38, %v731
    %v733 = vsel %vm730, %v732, %v728
    %v734 = vmul.f32 1.0, %v733
    %v735 = vtanh.pop %v714
    %v737 = vrot.slane %v605, 6
    %v739 = vmul.f32 %v734, %v737
    %741 = vrot.lane.b32.xlu0 %v735, 32
    %v742 = vpop.permute.xlu0 %741
    %v744 = vmul.f32 %v734, %v742
    %746 = vrot.lane.b32.xlu0 %v744, 32
    %v747 = vpop.permute.xlu0 %746
    %v749 = vadd.f32 %v739, %v747
    %v750 = vtanh.pop %v749
    %752 = vrot.lane.b32.xlu0 %v750, 32
    %v753 = vpop.permute.xlu0 %752
    %v755 = vmul.f32 %v734, %v753
    %v756 = vxor.u32 %v715, 2147483648
    %v757 = vmul.f32 %v756, 1.442695
    %v758 = vpow.pop %v757
    %v759 = vadd.f32 %v758, 1.0
    %v760 = vrcp.pop %v759
    %v761 = vmul.f32 %v759, %v760
    %v762 = vsub.f32 1.0, %v761
    %v763 = vmul.f32 %v760, %v762
    %v764 = vadd.f32 %v760, %v763
    %vm765 = vweird.f32 %v759
    %vm766 = vweird.f32 %v760
    %vm767 = vmor %vm765, %vm766
    %v768 = vsel %vm767, %v760, %v764
    %v769 = vand.u32 2147483647, %v759
    %vm770 = vcmp.eq.f32.partialorder %v769, 8.507059e+37
    %v771 = vand.u32 %v759, 2147483648
    %v772 = vor.u32 1.1754944e-38, %v771
    %v773 = vsel %vm770, %v772, %v768
    %v774 = vmul.f32 1.0, %v773
    %v775 = vtanh.pop %v715
    %v777 = vrot.slane %v645, 2
    %v779 = vmul.f32 %v774, %v777
    %781 = vrot.lane.b32.xlu0 %v775, 32
    %v782 = vpop.permute.xlu0 %781
    %v784 = vmul.f32 %v774, %v782
    %786 = vrot.lane.b32.xlu0 %v784, 32
    %v787 = vpop.permute.xlu0 %786
    %v789 = vadd.f32 %v779, %v787
    %v790 = vtanh.pop %v789
    %792 = vrot.lane.b32.xlu0 %v790, 32
    %v793 = vpop.permute.xlu0 %792
    %v795 = vmul.f32 %v774, %v793
    %797 = vrot.lane.b32.xlu0 %v755, 64
    %v798 = vpop.permute.xlu0 %797
    %800 = vst.msk [vmem:[#allocation2] sm:$0xc0] %vm364, %v798
    %802 = vrot.lane.b32.xlu0 %v795, 64
    %v803 = vpop.permute.xlu0 %802
    %805 = vst.msk [vmem:[#allocation3 + $0x8] sm:$0x3] %vm358, %v803
    %v806 = vrot.slane %v795, 2
    %807 = vrot.lane.b32.xlu0 %v806, 96
    %v808 = vpop.permute.xlu0 %807
    %v810 = vsel %vm370, %v798, %v808
    %v812 = vrot.slane %v810, 6
    %v813 = vsel %vm231, %v812, 0
    %815 = vmatpush.msra.mxu0 0.0
    %816 = vmatpush.msra.mxu0 0.0
    %817 = vmatpush.msra.mxu0 0.0
    %818 = vmatpush.msra.mxu0 0.0
    %819 = vmatpush.msra.mxu0 0.0
    %820 = vmatpush.msra.mxu0 0.0
    %821 = vmatpush.msra.mxu0 0.0
    %822 = vmatpush.msra.mxu0 0.0
    %823 = vmatpush.msra.mxu0 %v229
    %824 = vmatpush.msra.mxu0 %v227
    %825 = vmatpush.msra.mxu0 %v225
    %826 = vmatpush.msra.mxu0 %v223
    %827 = vmatpush.msra.mxu0 %v221
    %828 = vmatpush.msra.mxu0 %v219
    %829 = vmatpush.msra.mxu0 %v217
    %830 = vmatpush.msra.mxu0 %v215
    %831 = vmatmul.f32.gmra.mxu0 %v813
    %v832 = vpop.f32.mrf.mxu0
    %v833 = vadd.f32 0.0, %v832
    %834 = vdwg.mxu0
    %835 = vmatpush.msra.mxu0 0.0
    %836 = vmatpush.msra.mxu0 0.0
    %837 = vmatpush.msra.mxu0 0.0
    %838 = vmatpush.msra.mxu0 0.0
    %839 = vmatpush.msra.mxu0 0.0
    %840 = vmatpush.msra.mxu0 0.0
    %841 = vmatpush.msra.mxu0 0.0
    %842 = vmatpush.msra.mxu0 0.0
    %843 = vmatpush.msra.mxu0 %v230
    %844 = vmatpush.msra.mxu0 %v228
    %845 = vmatpush.msra.mxu0 %v226
    %846 = vmatpush.msra.mxu0 %v224
    %847 = vmatpush.msra.mxu0 %v222
    %848 = vmatpush.msra.mxu0 %v220
    %849 = vmatpush.msra.mxu0 %v218
    %850 = vmatpush.msra.mxu0 %v216
    %851 = vmatmul.f32.gmra.mxu0 %v813
    %v852 = vpop.f32.mrf.mxu0
    %v853 = vadd.f32 0.0, %v852
    %854 = vdwg.mxu0
    %v855 = vadd.f32 %v167, %v833
    %v857 = vrot.slane %v853, 2
    %v859 = vadd.f32 %v210, %v857
    %v860 = vxor.u32 %v855, 2147483648
    %v861 = vmul.f32 %v860, 1.442695
    %v862 = vpow.pop %v861
    %v863 = vadd.f32 %v862, 1.0
    %v864 = vrcp.pop %v863
    %v865 = vmul.f32 %v863, %v864
    %v866 = vsub.f32 1.0, %v865
    %v867 = vmul.f32 %v864, %v866
    %v868 = vadd.f32 %v864, %v867
    %vm869 = vweird.f32 %v863
    %vm870 = vweird.f32 %v864
    %vm871 = vmor %vm869, %vm870
    %v872 = vsel %vm871, %v864, %v868
    %v873 = vand.u32 2147483647, %v863
    %vm874 = vcmp.eq.f32.partialorder %v873, 8.507059e+37
    %v875 = vand.u32 %v863, 2147483648
    %v876 = vor.u32 1.1754944e-38, %v875
    %v877 = vsel %vm874, %v876, %v872
    %v878 = vmul.f32 1.0, %v877
    %v879 = vtanh.pop %v855
    %v881 = vrot.slane %v749, 6
    %v883 = vmul.f32 %v878, %v881
    %885 = vrot.lane.b32.xlu0 %v879, 32
    %v886 = vpop.permute.xlu0 %885
    %v888 = vmul.f32 %v878, %v886
    %890 = vrot.lane.b32.xlu0 %v888, 32
    %v891 = vpop.permute.xlu0 %890
    %v893 = vadd.f32 %v883, %v891
    %v894 = vtanh.pop %v893
    %896 = vrot.lane.b32.xlu0 %v894, 32
    %v897 = vpop.permute.xlu0 %896
    %v899 = vmul.f32 %v878, %v897
    %v900 = vxor.u32 %v859, 2147483648
    %v901 = vmul.f32 %v900, 1.442695
    %v902 = vpow.pop %v901
    %v903 = vadd.f32 %v902, 1.0
    %v904 = vrcp.pop %v903
    %v905 = vmul.f32 %v903, %v904
    %v906 = vsub.f32 1.0, %v905
    %v907 = vmul.f32 %v904, %v906
    %v908 = vadd.f32 %v904, %v907
    %vm909 = vweird.f32 %v903
    %vm910 = vweird.f32 %v904
    %vm911 = vmor %vm909, %vm910
    %v912 = vsel %vm911, %v904, %v908
    %v913 = vand.u32 2147483647, %v903
    %vm914 = vcmp.eq.f32.partialorder %v913, 8.507059e+37
    %v915 = vand.u32 %v903, 2147483648
    %v916 = vor.u32 1.1754944e-38, %v915
    %v917 = vsel %vm914, %v916, %v912
    %v918 = vmul.f32 1.0, %v917
    %v919 = vtanh.pop %v859
    %v921 = vrot.slane %v789, 2
    %v923 = vmul.f32 %v918, %v921
    %925 = vrot.lane.b32.xlu0 %v919, 32
    %v926 = vpop.permute.xlu0 %925
    %v928 = vmul.f32 %v918, %v926
    %930 = vrot.lane.b32.xlu0 %v928, 32
    %v931 = vpop.permute.xlu0 %930
    %v933 = vadd.f32 %v923, %v931
    %v934 = vtanh.pop %v933
    %936 = vrot.lane.b32.xlu0 %v934, 32
    %v937 = vpop.permute.xlu0 %936
    %v939 = vmul.f32 %v918, %v937
    %941 = vrot.lane.b32.xlu0 %v899, 64
    %v942 = vpop.permute.xlu0 %941
    %944 = vst.msk [vmem:[#allocation2 + $0x8] sm:$0x3] %vm358, %v942
    %946 = vrot.lane.b32.xlu0 %v939, 64
    %v947 = vpop.permute.xlu0 %946
    %949 = vst.msk [vmem:[#allocation3] sm:$0xc0] %vm364, %v947
    %v950 = vrot.slane %v939, 6
    %951 = vrot.lane.b32.xlu0 %v950, 96
    %v952 = vpop.permute.xlu0 %951
    %v954 = vsel %vm370, %v942, %v952
    %v956 = vsel %vm231, %v954, 0
    %958 = vmatpush.msra.mxu0 0.0
    %959 = vmatpush.msra.mxu0 0.0
    %960 = vmatpush.msra.mxu0 0.0
    %961 = vmatpush.msra.mxu0 0.0
    %962 = vmatpush.msra.mxu0 0.0
    %963 = vmatpush.msra.mxu0 0.0
    %964 = vmatpush.msra.mxu0 0.0
    %965 = vmatpush.msra.mxu0 0.0
    %966 = vmatpush.msra.mxu0 %v229
    %967 = vmatpush.msra.mxu0 %v227
    %968 = vmatpush.msra.mxu0 %v225
    %969 = vmatpush.msra.mxu0 %v223
    %970 = vmatpush.msra.mxu0 %v221
    %971 = vmatpush.msra.mxu0 %v219
    %972 = vmatpush.msra.mxu0 %v217
    %973 = vmatpush.msra.mxu0 %v215
    %974 = vmatmul.f32.gmra.mxu0 %v956
    %v975 = vpop.f32.mrf.mxu0
    %v976 = vadd.f32 0.0, %v975
    %977 = vdwg.mxu0
    %978 = vmatpush.msra.mxu0 0.0
    %979 = vmatpush.msra.mxu0 0.0
    %980 = vmatpush.msra.mxu0 0.0
    %981 = vmatpush.msra.mxu0 0.0
    %982 = vmatpush.msra.mxu0 0.0
    %983 = vmatpush.msra.mxu0 0.0
    %984 = vmatpush.msra.mxu0 0.0
    %985 = vmatpush.msra.mxu0 0.0
    %986 = vmatpush.msra.mxu0 %v230
    %987 = vmatpush.msra.mxu0 %v228
    %988 = vmatpush.msra.mxu0 %v226
    %989 = vmatpush.msra.mxu0 %v224
    %990 = vmatpush.msra.mxu0 %v222
    %991 = vmatpush.msra.mxu0 %v220
    %992 = vmatpush.msra.mxu0 %v218
    %993 = vmatpush.msra.mxu0 %v216
    %994 = vmatmul.f32.gmra.mxu0 %v956
    %v995 = vpop.f32.mrf.mxu0
    %v996 = vadd.f32 0.0, %v995
    %997 = vdwg.mxu0
    %v999 = vrot.slane %v976, 6
    %v1001 = vadd.f32 %v167, %v999
    %v1003 = vrot.slane %v996, 4
    %v1005 = vadd.f32 %v210, %v1003
    %v1006 = vxor.u32 %v1001, 2147483648
    %v1007 = vmul.f32 %v1006, 1.442695
    %v1008 = vpow.pop %v1007
    %v1009 = vadd.f32 %v1008, 1.0
    %v1010 = vrcp.pop %v1009
    %v1011 = vmul.f32 %v1009, %v1010
    %v1012 = vsub.f32 1.0, %v1011
    %v1013 = vmul.f32 %v1010, %v1012
    %v1014 = vadd.f32 %v1010, %v1013
    %vm1015 = vweird.f32 %v1009
    %vm1016 = vweird.f32 %v1010
    %vm1017 = vmor %vm1015, %vm1016
    %v1018 = vsel %vm1017, %v1010, %v1014
    %v1019 = vand.u32 2147483647, %v1009
    %vm1020 = vcmp.eq.f32.partialorder %v1019, 8.507059e+37
    %v1021 = vand.u32 %v1009, 2147483648
    %v1022 = vor.u32 1.1754944e-38, %v1021
    %v1023 = vsel %vm1020, %v1022, %v1018
    %v1024 = vmul.f32 1.0, %v1023
    %v1025 = vtanh.pop %v1001
    %v1027 = vrot.slane %v893, 6
    %v1029 = vmul.f32 %v1024, %v1027
    %1031 = vrot.lane.b32.xlu0 %v1025, 32
    %v1032 = vpop.permute.xlu0 %1031
    %v1034 = vmul.f32 %v1024, %v1032
    %1036 = vrot.lane.b32.xlu0 %v1034, 32
    %v1037 = vpop.permute.xlu0 %1036
    %v1039 = vadd.f32 %v1029, %v1037
    %v1040 = vtanh.pop %v1039
    %1042 = vrot.lane.b32.xlu0 %v1040, 32
    %v1043 = vpop.permute.xlu0 %1042
    %v1045 = vmul.f32 %v1024, %v1043
    %v1046 = vxor.u32 %v1005, 2147483648
    %v1047 = vmul.f32 %v1046, 1.442695
    %v1048 = vpow.pop %v1047
    %v1049 = vadd.f32 %v1048, 1.0
    %v1050 = vrcp.pop %v1049
    %v1051 = vmul.f32 %v1049, %v1050
    %v1052 = vsub.f32 1.0, %v1051
    %v1053 = vmul.f32 %v1050, %v1052
    %v1054 = vadd.f32 %v1050, %v1053
    %vm1055 = vweird.f32 %v1049
    %vm1056 = vweird.f32 %v1050
    %vm1057 = vmor %vm1055, %vm1056
    %v1058 = vsel %vm1057, %v1050, %v1054
    %v1059 = vand.u32 2147483647, %v1049
    %vm1060 = vcmp.eq.f32.partialorder %v1059, 8.507059e+37
    %v1061 = vand.u32 %v1049, 2147483648
    %v1062 = vor.u32 1.1754944e-38, %v1061
    %v1063 = vsel %vm1060, %v1062, %v1058
    %v1064 = vmul.f32 1.0, %v1063
    %v1065 = vtanh.pop %v1005
    %v1067 = vrot.slane %v933, 2
    %v1069 = vmul.f32 %v1064, %v1067
    %1071 = vrot.lane.b32.xlu0 %v1065, 32
    %v1072 = vpop.permute.xlu0 %1071
    %v1074 = vmul.f32 %v1064, %v1072
    %1076 = vrot.lane.b32.xlu0 %v1074, 32
    %v1077 = vpop.permute.xlu0 %1076
    %v1079 = vadd.f32 %v1069, %v1077
    %v1080 = vtanh.pop %v1079
    %1082 = vrot.lane.b32.xlu0 %v1080, 32
    %v1083 = vpop.permute.xlu0 %1082
    %v1085 = vmul.f32 %v1064, %v1083
    %1087 = vrot.lane.b32.xlu0 %v1045, 64
    %v1088 = vpop.permute.xlu0 %1087
    %1090 = vst.msk [vmem:[#allocation2 + $0x8] sm:$0xc] %vm507, %v1088
    %1092 = vrot.lane.b32.xlu0 %v1085, 64
    %v1093 = vpop.permute.xlu0 %1092
    %1095 = vst.msk [vmem:[#allocation3] sm:$0x30] %vm513, %v1093
    %v1096 = vrot.slane %v1085, 2
    %1097 = vrot.lane.b32.xlu0 %v1096, 96
    %v1098 = vpop.permute.xlu0 %1097
    %v1100 = vsel %vm370, %v1088, %v1098
    %v1102 = vrot.slane %v1100, 2
    %v1103 = vsel %vm231, %v1102, 0
    %1105 = vmatpush.msra.mxu0 0.0
    %1106 = vmatpush.msra.mxu0 0.0
    %1107 = vmatpush.msra.mxu0 0.0
    %1108 = vmatpush.msra.mxu0 0.0
    %1109 = vmatpush.msra.mxu0 0.0
    %1110 = vmatpush.msra.mxu0 0.0
    %1111 = vmatpush.msra.mxu0 0.0
    %1112 = vmatpush.msra.mxu0 0.0
    %1113 = vmatpush.msra.mxu0 %v229
    %1114 = vmatpush.msra.mxu0 %v227
    %1115 = vmatpush.msra.mxu0 %v225
    %1116 = vmatpush.msra.mxu0 %v223
    %1117 = vmatpush.msra.mxu0 %v221
    %1118 = vmatpush.msra.mxu0 %v219
    %1119 = vmatpush.msra.mxu0 %v217
    %1120 = vmatpush.msra.mxu0 %v215
    %1121 = vmatmul.f32.gmra.mxu0 %v1103
    %v1122 = vpop.f32.mrf.mxu0
    %v1123 = vadd.f32 0.0, %v1122
    %1124 = vdwg.mxu0
    %1125 = vmatpush.msra.mxu0 0.0
    %1126 = vmatpush.msra.mxu0 0.0
    %1127 = vmatpush.msra.mxu0 0.0
    %1128 = vmatpush.msra.mxu0 0.0
    %1129 = vmatpush.msra.mxu0 0.0
    %1130 = vmatpush.msra.mxu0 0.0
    %1131 = vmatpush.msra.mxu0 0.0
    %1132 = vmatpush.msra.mxu0 0.0
    %1133 = vmatpush.msra.mxu0 %v230
    %1134 = vmatpush.msra.mxu0 %v228
    %1135 = vmatpush.msra.mxu0 %v226
    %1136 = vmatpush.msra.mxu0 %v224
    %1137 = vmatpush.msra.mxu0 %v222
    %1138 = vmatpush.msra.mxu0 %v220
    %1139 = vmatpush.msra.mxu0 %v218
    %1140 = vmatpush.msra.mxu0 %v216
    %1141 = vmatmul.f32.gmra.mxu0 %v1103
    %v1142 = vpop.f32.mrf.mxu0
    %v1143 = vadd.f32 0.0, %v1142
    %1144 = vdwg.mxu0
    %v1146 = vrot.slane %v1123, 4
    %v1148 = vadd.f32 %v167, %v1146
    %v1150 = vrot.slane %v1143, 6
    %v1152 = vadd.f32 %v210, %v1150
    %v1153 = vxor.u32 %v1148, 2147483648
    %v1154 = vmul.f32 %v1153, 1.442695
    %v1155 = vpow.pop %v1154
    %v1156 = vadd.f32 %v1155, 1.0
    %v1157 = vrcp.pop %v1156
    %v1158 = vmul.f32 %v1156, %v1157
    %v1159 = vsub.f32 1.0, %v1158
    %v1160 = vmul.f32 %v1157, %v1159
    %v1161 = vadd.f32 %v1157, %v1160
    %vm1162 = vweird.f32 %v1156
    %vm1163 = vweird.f32 %v1157
    %vm1164 = vmor %vm1162, %vm1163
    %v1165 = vsel %vm1164, %v1157, %v1161
    %v1166 = vand.u32 2147483647, %v1156
    %vm1167 = vcmp.eq.f32.partialorder %v1166, 8.507059e+37
    %v1168 = vand.u32 %v1156, 2147483648
    %v1169 = vor.u32 1.1754944e-38, %v1168
    %v1170 = vsel %vm1167, %v1169, %v1165
    %v1171 = vmul.f32 1.0, %v1170
    %v1172 = vtanh.pop %v1148
    %v1174 = vrot.slane %v1039, 6
    %v1176 = vmul.f32 %v1171, %v1174
    %1178 = vrot.lane.b32.xlu0 %v1172, 32
    %v1179 = vpop.permute.xlu0 %1178
    %v1181 = vmul.f32 %v1171, %v1179
    %1183 = vrot.lane.b32.xlu0 %v1181, 32
    %v1184 = vpop.permute.xlu0 %1183
    %v1186 = vadd.f32 %v1176, %v1184
    %v1187 = vtanh.pop %v1186
    %1189 = vrot.lane.b32.xlu0 %v1187, 32
    %v1190 = vpop.permute.xlu0 %1189
    %v1192 = vmul.f32 %v1171, %v1190
    %v1193 = vxor.u32 %v1152, 2147483648
    %v1194 = vmul.f32 %v1193, 1.442695
    %v1195 = vpow.pop %v1194
    %v1196 = vadd.f32 %v1195, 1.0
    %v1197 = vrcp.pop %v1196
    %v1198 = vmul.f32 %v1196, %v1197
    %v1199 = vsub.f32 1.0, %v1198
    %v1200 = vmul.f32 %v1197, %v1199
    %v1201 = vadd.f32 %v1197, %v1200
    %vm1202 = vweird.f32 %v1196
    %vm1203 = vweird.f32 %v1197
    %vm1204 = vmor %vm1202, %vm1203
    %v1205 = vsel %vm1204, %v1197, %v1201
    %v1206 = vand.u32 2147483647, %v1196
    %vm1207 = vcmp.eq.f32.partialorder %v1206, 8.507059e+37
    %v1208 = vand.u32 %v1196, 2147483648
    %v1209 = vor.u32 1.1754944e-38, %v1208
    %v1210 = vsel %vm1207, %v1209, %v1205
    %v1211 = vmul.f32 1.0, %v1210
    %v1212 = vtanh.pop %v1152
    %v1214 = vrot.slane %v1079, 2
    %v1216 = vmul.f32 %v1211, %v1214
    %1218 = vrot.lane.b32.xlu0 %v1212, 32
    %v1219 = vpop.permute.xlu0 %1218
    %v1221 = vmul.f32 %v1211, %v1219
    %1223 = vrot.lane.b32.xlu0 %v1221, 32
    %v1224 = vpop.permute.xlu0 %1223
    %v1226 = vadd.f32 %v1216, %v1224
    %v1227 = vtanh.pop %v1226
    %1229 = vrot.lane.b32.xlu0 %v1227, 32
    %v1230 = vpop.permute.xlu0 %1229
    %v1232 = vmul.f32 %v1211, %v1230
    %1234 = vrot.lane.b32.xlu0 %v1192, 64
    %v1235 = vpop.permute.xlu0 %1234
    %1237 = vst.msk [vmem:[#allocation2 + $0x8] sm:$0x30] %vm513, %v1235
    %1239 = vrot.lane.b32.xlu0 %v1232, 64
    %v1240 = vpop.permute.xlu0 %1239
    %1242 = vst.msk [vmem:[#allocation3] sm:$0xc] %vm507, %v1240
    %v1243 = vrot.slane %v1232, 6
    %1244 = vrot.lane.b32.xlu0 %v1243, 96
    %v1245 = vpop.permute.xlu0 %1244
    %v1247 = vsel %vm370, %v1235, %v1245
    %v1249 = vrot.slane %v1247, 4
    %v1250 = vsel %vm231, %v1249, 0
    %1252 = vmatpush.msra.mxu0 0.0
    %1253 = vmatpush.msra.mxu0 0.0
    %1254 = vmatpush.msra.mxu0 0.0
    %1255 = vmatpush.msra.mxu0 0.0
    %1256 = vmatpush.msra.mxu0 0.0
    %1257 = vmatpush.msra.mxu0 0.0
    %1258 = vmatpush.msra.mxu0 0.0
    %1259 = vmatpush.msra.mxu0 0.0
    %1260 = vmatpush.msra.mxu0 %v229
    %1261 = vmatpush.msra.mxu0 %v227
    %1262 = vmatpush.msra.mxu0 %v225
    %1263 = vmatpush.msra.mxu0 %v223
    %1264 = vmatpush.msra.mxu0 %v221
    %1265 = vmatpush.msra.mxu0 %v219
    %1266 = vmatpush.msra.mxu0 %v217
    %1267 = vmatpush.msra.mxu0 %v215
    %1268 = vmatmul.f32.gmra.mxu0 %v1250
    %v1269 = vpop.f32.mrf.mxu0
    %v1270 = vadd.f32 0.0, %v1269
    %1271 = vdwg.mxu0
    %1272 = vmatpush.msra.mxu0 0.0
    %1273 = vmatpush.msra.mxu0 0.0
    %1274 = vmatpush.msra.mxu0 0.0
    %1275 = vmatpush.msra.mxu0 0.0
    %1276 = vmatpush.msra.mxu0 0.0
    %1277 = vmatpush.msra.mxu0 0.0
    %1278 = vmatpush.msra.mxu0 0.0
    %1279 = vmatpush.msra.mxu0 0.0
    %1280 = vmatpush.msra.mxu0 %v230
    %1281 = vmatpush.msra.mxu0 %v228
    %1282 = vmatpush.msra.mxu0 %v226
    %1283 = vmatpush.msra.mxu0 %v224
    %1284 = vmatpush.msra.mxu0 %v222
    %1285 = vmatpush.msra.mxu0 %v220
    %1286 = vmatpush.msra.mxu0 %v218
    %1287 = vmatpush.msra.mxu0 %v216
    %1288 = vmatmul.f32.gmra.mxu0 %v1250
    %v1289 = vpop.f32.mrf.mxu0
    %v1290 = vadd.f32 0.0, %v1289
    %1291 = vdwg.mxu0
    %v1293 = vrot.slane %v1270, 2
    %v1295 = vadd.f32 %v167, %v1293
    %v1296 = vadd.f32 %v210, %v1290
    %v1297 = vxor.u32 %v1295, 2147483648
    %v1298 = vmul.f32 %v1297, 1.442695
    %v1299 = vpow.pop %v1298
    %v1300 = vadd.f32 %v1299, 1.0
    %v1301 = vrcp.pop %v1300
    %v1302 = vmul.f32 %v1300, %v1301
    %v1303 = vsub.f32 1.0, %v1302
    %v1304 = vmul.f32 %v1301, %v1303
    %v1305 = vadd.f32 %v1301, %v1304
    %vm1306 = vweird.f32 %v1300
    %vm1307 = vweird.f32 %v1301
    %vm1308 = vmor %vm1306, %vm1307
    %v1309 = vsel %vm1308, %v1301, %v1305
    %v1310 = vand.u32 2147483647, %v1300
    %vm1311 = vcmp.eq.f32.partialorder %v1310, 8.507059e+37
    %v1312 = vand.u32 %v1300, 2147483648
    %v1313 = vor.u32 1.1754944e-38, %v1312
    %v1314 = vsel %vm1311, %v1313, %v1309
    %v1315 = vmul.f32 1.0, %v1314
    %v1316 = vtanh.pop %v1295
    %v1318 = vrot.slane %v1186, 6
    %v1320 = vmul.f32 %v1315, %v1318
    %1322 = vrot.lane.b32.xlu0 %v1316, 32
    %v1323 = vpop.permute.xlu0 %1322
    %v1325 = vmul.f32 %v1315, %v1323
    %1327 = vrot.lane.b32.xlu0 %v1325, 32
    %v1328 = vpop.permute.xlu0 %1327
    %v1330 = vadd.f32 %v1320, %v1328
    %v1331 = vtanh.pop %v1330
    %1333 = vrot.lane.b32.xlu0 %v1331, 32
    %v1334 = vpop.permute.xlu0 %1333
    %v1336 = vmul.f32 %v1315, %v1334
    %v1337 = vxor.u32 %v1296, 2147483648
    %v1338 = vmul.f32 %v1337, 1.442695
    %v1339 = vpow.pop %v1338
    %v1340 = vadd.f32 %v1339, 1.0
    %v1341 = vrcp.pop %v1340
    %v1342 = vmul.f32 %v1340, %v1341
    %v1343 = vsub.f32 1.0, %v1342
    %v1344 = vmul.f32 %v1341, %v1343
    %v1345 = vadd.f32 %v1341, %v1344
    %vm1346 = vweird.f32 %v1340
    %vm1347 = vweird.f32 %v1341
    %vm1348 = vmor %vm1346, %vm1347
    %v1349 = vsel %vm1348, %v1341, %v1345
    %v1350 = vand.u32 2147483647, %v1340
    %vm1351 = vcmp.eq.f32.partialorder %v1350, 8.507059e+37
    %v1352 = vand.u32 %v1340, 2147483648
    %v1353 = vor.u32 1.1754944e-38, %v1352
    %v1354 = vsel %vm1351, %v1353, %v1349
    %v1355 = vmul.f32 1.0, %v1354
    %v1356 = vtanh.pop %v1296
    %v1358 = vrot.slane %v1226, 2
    %v1360 = vmul.f32 %v1355, %v1358
    %1362 = vrot.lane.b32.xlu0 %v1356, 32
    %v1363 = vpop.permute.xlu0 %1362
    %v1365 = vmul.f32 %v1355, %v1363
    %1367 = vrot.lane.b32.xlu0 %v1365, 32
    %v1368 = vpop.permute.xlu0 %1367
    %v1370 = vadd.f32 %v1360, %v1368
    %v1371 = vtanh.pop %v1370
    %1373 = vrot.lane.b32.xlu0 %v1371, 32
    %v1374 = vpop.permute.xlu0 %1373
    %v1376 = vmul.f32 %v1355, %v1374
    %1378 = vrot.lane.b32.xlu0 %v1336, 64
    %v1379 = vpop.permute.xlu0 %1378
    %1381 = vst.msk [vmem:[#allocation2 + $0x8] sm:$0xc0] %vm364, %v1379
    %1383 = vrot.lane.b32.xlu0 %v1376, 64
    %v1384 = vpop.permute.xlu0 %1383
    %1386 = vst.msk [vmem:[#allocation3] sm:$0x3] %vm358, %v1384
    %v1387 = vld [vmem:[#allocation2] sm:$0xff]
    %v1388 = vld [vmem:[#allocation2 + $0x8] sm:$0xff]
    %v1389 = vld [vmem:[%s4] sm:$0xff]
    %v1390 = vld [vmem:[%s4 + $0x8] sm:$0xff]
    %v1391 = vld [vmem:[%s4 + $0x10] sm:$0xff]
    %v1392 = vld [vmem:[%s4 + $0x18] sm:$0xff]
    %v1393 = vld [vmem:[%s4 + $0x20] sm:$0xff]
    %v1394 = vld [vmem:[%s4 + $0x28] sm:$0xff]
    %v1395 = vld [vmem:[%s4 + $0x30] sm:$0xff]
    %v1396 = vld [vmem:[%s4 + $0x38] sm:$0xff]
    %v1397 = vld [vmem:[#allocation3] sm:$0xff]
    %v1398 = vld [vmem:[#allocation3 + $0x8] sm:$0xff]
    %v1399 = vld [vmem:[%s4 + $0x40] sm:$0xff]
    %v1400 = vld [vmem:[%s4 + $0x48] sm:$0xff]
    %v1401 = vld [vmem:[%s4 + $0x50] sm:$0xff]
    %v1402 = vld [vmem:[%s4 + $0x58] sm:$0xff]
    %v1403 = vld [vmem:[%s4 + $0x60] sm:$0xff]
    %v1404 = vld [vmem:[%s4 + $0x68] sm:$0xff]
    %v1405 = vld [vmem:[%s4 + $0x70] sm:$0xff]
    %v1406 = vld [vmem:[%s4 + $0x78] sm:$0xff]
    %v1408 = vsel %vm370, %v1397, 0
    %v1411 = vsel %vm370, %v1398, 0
    %1413 = vmatpush.msra.mxu0 0.0
    %1414 = vmatpush.msra.mxu0 0.0
    %1415 = vmatpush.msra.mxu0 0.0
    %1416 = vmatpush.msra.mxu0 0.0
    %1417 = vmatpush.msra.mxu0 0.0
    %1418 = vmatpush.msra.mxu0 0.0
    %1419 = vmatpush.msra.mxu0 0.0
    %1420 = vmatpush.msra.mxu0 0.0
    %1421 = vmatpush.msra.mxu0 0.0
    %1422 = vmatpush.msra.mxu0 0.0
    %1423 = vmatpush.msra.mxu0 0.0
    %1424 = vmatpush.msra.mxu0 0.0
    %1425 = vmatpush.msra.mxu0 %v1405
    %1426 = vmatpush.msra.mxu0 %v1403
    %1427 = vmatpush.msra.mxu0 %v1401
    %1428 = vmatpush.msra.mxu0 %v1399
    %1429 = vmatmul.f32.gmra.mxu0 %v1408
    %v1430 = vpop.f32.mrf.mxu0
    %v1431 = vadd.f32 0.0, %v1430
    %1432 = vmatmul.f32.gmra.mxu0 %v1411
    %v1433 = vpop.f32.mrf.mxu0
    %v1434 = vadd.f32 0.0, %v1433
    %1435 = vdwg.mxu0
    %1436 = vmatpush.msra.mxu0 0.0
    %1437 = vmatpush.msra.mxu0 0.0
    %1438 = vmatpush.msra.mxu0 0.0
    %1439 = vmatpush.msra.mxu0 0.0
    %1440 = vmatpush.msra.mxu0 0.0
    %1441 = vmatpush.msra.mxu0 0.0
    %1442 = vmatpush.msra.mxu0 0.0
    %1443 = vmatpush.msra.mxu0 0.0
    %1444 = vmatpush.msra.mxu0 0.0
    %1445 = vmatpush.msra.mxu0 0.0
    %1446 = vmatpush.msra.mxu0 0.0
    %1447 = vmatpush.msra.mxu0 0.0
    %1448 = vmatpush.msra.mxu0 %v1406
    %1449 = vmatpush.msra.mxu0 %v1404
    %1450 = vmatpush.msra.mxu0 %v1402
    %1451 = vmatpush.msra.mxu0 %v1400
    %1452 = vmatmul.f32.gmra.mxu0 %v1408
    %v1453 = vpop.f32.mrf.mxu0
    %v1454 = vadd.f32 0.0, %v1453
    %1455 = vmatmul.f32.gmra.mxu0 %v1411
    %v1456 = vpop.f32.mrf.mxu0
    %v1457 = vadd.f32 0.0, %v1456
    %1458 = vdwg.mxu0
    %v1460 = vsel %vm370, %v1387, 0
    %v1463 = vsel %vm370, %v1388, 0
    %1465 = vmatpush.msra.mxu0 0.0
    %1466 = vmatpush.msra.mxu0 0.0
    %1467 = vmatpush.msra.mxu0 0.0
    %1468 = vmatpush.msra.mxu0 0.0
    %1469 = vmatpush.msra.mxu0 0.0
    %1470 = vmatpush.msra.mxu0 0.0
    %1471 = vmatpush.msra.mxu0 0.0
    %1472 = vmatpush.msra.mxu0 0.0
    %1473 = vmatpush.msra.mxu0 0.0
    %1474 = vmatpush.msra.mxu0 0.0
    %1475 = vmatpush.msra.mxu0 0.0
    %1476 = vmatpush.msra.mxu0 0.0
    %1477 = vmatpush.msra.mxu0 %v1395
    %1478 = vmatpush.msra.mxu0 %v1393
    %1479 = vmatpush.msra.mxu0 %v1391
    %1480 = vmatpush.msra.mxu0 %v1389
    %1481 = vmatmul.f32.gmra.mxu0 %v1460
    %v1482 = vpop.f32.mrf.mxu0
    %v1483 = vadd.f32 %v1431, %v1482
    %1484 = vmatmul.f32.gmra.mxu0 %v1463
    %v1485 = vpop.f32.mrf.mxu0
    %v1486 = vadd.f32 %v1434, %v1485
    %1487 = vdwg.mxu0
    %1488 = vmatpush.msra.mxu0 0.0
    %1489 = vmatpush.msra.mxu0 0.0
    %1490 = vmatpush.msra.mxu0 0.0
    %1491 = vmatpush.msra.mxu0 0.0
    %1492 = vmatpush.msra.mxu0 0.0
    %1493 = vmatpush.msra.mxu0 0.0
    %1494 = vmatpush.msra.mxu0 0.0
    %1495 = vmatpush.msra.mxu0 0.0
    %1496 = vmatpush.msra.mxu0 0.0
    %1497 = vmatpush.msra.mxu0 0.0
    %1498 = vmatpush.msra.mxu0 0.0
    %1499 = vmatpush.msra.mxu0 0.0
    %1500 = vmatpush.msra.mxu0 %v1396
    %1501 = vmatpush.msra.mxu0 %v1394
    %1502 = vmatpush.msra.mxu0 %v1392
    %1503 = vmatpush.msra.mxu0 %v1390
    %1504 = vmatmul.f32.gmra.mxu0 %v1460
    %v1505 = vpop.f32.mrf.mxu0
    %v1506 = vadd.f32 %v1454, %v1505
    %1507 = vmatmul.f32.gmra.mxu0 %v1463
    %v1508 = vpop.f32.mrf.mxu0
    %v1509 = vadd.f32 %v1457, %v1508
    %1510 = vdwg.mxu0
    %v1511 = vld [vmem:[%s6] sm:$0x3]
    %v1513 = vperm.slane %v1511, 0
    %v1514 = vperm.slane %v1511, 1
    %v1517 = vadd.f32 %v1483, %v1513
    %v1518 = vadd.f32 %v1506, %v1514
    %v1519 = vadd.f32 %v1486, %v1513
    %v1520 = vadd.f32 %v1509, %v1514
    %v1521 = vld [vmem:[%s5] sm:$0xff]
    %v1522 = vld [vmem:[%s5 + $0x8] sm:$0xff]
    %v1523 = vld [vmem:[%s5 + $0x10] sm:$0xff]
    %v1524 = vld [vmem:[%s5 + $0x18] sm:$0xff]
    %v1525 = vld [vmem:[%s5 + $0x20] sm:$0xff]
    %v1526 = vld [vmem:[%s5 + $0x28] sm:$0xff]
    %v1527 = vld [vmem:[%s5 + $0x30] sm:$0xff]
    %v1528 = vld [vmem:[%s5 + $0x38] sm:$0xff]
    %v1529 = vld [vmem:[%s5 + $0x40] sm:$0xff]
    %v1530 = vld [vmem:[%s5 + $0x48] sm:$0xff]
    %v1531 = vld [vmem:[%s5 + $0x50] sm:$0xff]
    %v1532 = vld [vmem:[%s5 + $0x58] sm:$0xff]
    %v1533 = vld [vmem:[%s5 + $0x60] sm:$0xff]
    %v1534 = vld [vmem:[%s5 + $0x68] sm:$0xff]
    %v1535 = vld [vmem:[%s5 + $0x70] sm:$0xff]
    %v1536 = vld [vmem:[%s5 + $0x78] sm:$0xff]
    %1537 = vmatpush.msra.mxu0 0.0
    %1538 = vmatpush.msra.mxu0 0.0
    %1539 = vmatpush.msra.mxu0 0.0
    %1540 = vmatpush.msra.mxu0 0.0
    %1541 = vmatpush.msra.mxu0 0.0
    %1542 = vmatpush.msra.mxu0 0.0
    %1543 = vmatpush.msra.mxu0 0.0
    %1544 = vmatpush.msra.mxu0 0.0
    %1545 = vmatpush.msra.mxu0 %v1535
    %1546 = vmatpush.msra.mxu0 %v1533
    %1547 = vmatpush.msra.mxu0 %v1531
    %1548 = vmatpush.msra.mxu0 %v1529
    %1549 = vmatpush.msra.mxu0 %v1527
    %1550 = vmatpush.msra.mxu0 %v1525
    %1551 = vmatpush.msra.mxu0 %v1523
    %1552 = vmatpush.msra.mxu0 %v1521
    %1553 = vmatmul.f32.gmra.mxu0 %v233
    %v1554 = vpop.f32.mrf.mxu0
    %v1555 = vadd.f32 0.0, %v1554
    %1556 = vdwg.mxu0
    %1557 = vmatpush.msra.mxu0 0.0
    %1558 = vmatpush.msra.mxu0 0.0
    %1559 = vmatpush.msra.mxu0 0.0
    %1560 = vmatpush.msra.mxu0 0.0
    %1561 = vmatpush.msra.mxu0 0.0
    %1562 = vmatpush.msra.mxu0 0.0
    %1563 = vmatpush.msra.mxu0 0.0
    %1564 = vmatpush.msra.mxu0 0.0
    %1565 = vmatpush.msra.mxu0 %v1536
    %1566 = vmatpush.msra.mxu0 %v1534
    %1567 = vmatpush.msra.mxu0 %v1532
    %1568 = vmatpush.msra.mxu0 %v1530
    %1569 = vmatpush.msra.mxu0 %v1528
    %1570 = vmatpush.msra.mxu0 %v1526
    %1571 = vmatpush.msra.mxu0 %v1524
    %1572 = vmatpush.msra.mxu0 %v1522
    %1573 = vmatmul.f32.gmra.mxu0 %v233
    %v1574 = vpop.f32.mrf.mxu0
    %v1575 = vadd.f32 0.0, %v1574
    %1576 = vdwg.mxu0
    %v1577 = vadd.f32 %v1517, %v1555
    %v1579 = vrot.slane %v1575, 2
    %v1581 = vadd.f32 %v1520, %v1579
    %v1582 = vxor.u32 %v1577, 2147483648
    %v1583 = vmul.f32 %v1582, 1.442695
    %v1584 = vpow.pop %v1583
    %v1585 = vadd.f32 %v1584, 1.0
    %v1586 = vrcp.pop %v1585
    %v1587 = vmul.f32 %v1585, %v1586
    %v1588 = vsub.f32 1.0, %v1587
    %v1589 = vmul.f32 %v1586, %v1588
    %v1590 = vadd.f32 %v1586, %v1589
    %vm1591 = vweird.f32 %v1585
    %vm1592 = vweird.f32 %v1586
    %vm1593 = vmor %vm1591, %vm1592
    %v1594 = vsel %vm1593, %v1586, %v1590
    %v1595 = vand.u32 2147483647, %v1585
    %vm1596 = vcmp.eq.f32.partialorder %v1595, 8.507059e+37
    %v1597 = vand.u32 %v1585, 2147483648
    %v1598 = vor.u32 1.1754944e-38, %v1597
    %v1599 = vsel %vm1596, %v1598, %v1594
    %v1600 = vmul.f32 1.0, %v1599
    %v1601 = vtanh.pop %v1577
    %v1602 = vmul.f32 %v1600, 0.0
    %1604 = vrot.lane.b32.xlu0 %v1601, 32
    %v1605 = vpop.permute.xlu0 %1604
    %v1607 = vmul.f32 %v1600, %v1605
    %1609 = vrot.lane.b32.xlu0 %v1607, 32
    %v1610 = vpop.permute.xlu0 %1609
    %v1612 = vadd.f32 %v1602, %v1610
    %v1613 = vtanh.pop %v1612
    %1615 = vrot.lane.b32.xlu0 %v1613, 32
    %v1616 = vpop.permute.xlu0 %1615
    %v1618 = vmul.f32 %v1600, %v1616
    %v1619 = vxor.u32 %v1581, 2147483648
    %v1620 = vmul.f32 %v1619, 1.442695
    %v1621 = vpow.pop %v1620
    %v1622 = vadd.f32 %v1621, 1.0
    %v1623 = vrcp.pop %v1622
    %v1624 = vmul.f32 %v1622, %v1623
    %v1625 = vsub.f32 1.0, %v1624
    %v1626 = vmul.f32 %v1623, %v1625
    %v1627 = vadd.f32 %v1623, %v1626
    %vm1628 = vweird.f32 %v1622
    %vm1629 = vweird.f32 %v1623
    %vm1630 = vmor %vm1628, %vm1629
    %v1631 = vsel %vm1630, %v1623, %v1627
    %v1632 = vand.u32 2147483647, %v1622
    %vm1633 = vcmp.eq.f32.partialorder %v1632, 8.507059e+37
    %v1634 = vand.u32 %v1622, 2147483648
    %v1635 = vor.u32 1.1754944e-38, %v1634
    %v1636 = vsel %vm1633, %v1635, %v1631
    %v1637 = vmul.f32 1.0, %v1636
    %v1638 = vtanh.pop %v1581
    %v1639 = vmul.f32 %v1637, 0.0
    %1641 = vrot.lane.b32.xlu0 %v1638, 32
    %v1642 = vpop.permute.xlu0 %1641
    %v1644 = vmul.f32 %v1637, %v1642
    %1646 = vrot.lane.b32.xlu0 %v1644, 32
    %v1647 = vpop.permute.xlu0 %1646
    %v1649 = vadd.f32 %v1639, %v1647
    %v1650 = vtanh.pop %v1649
    %1652 = vrot.lane.b32.xlu0 %v1650, 32
    %v1653 = vpop.permute.xlu0 %1652
    %v1655 = vmul.f32 %v1637, %v1653
    %1657 = vrot.lane.b32.xlu0 %v1618, 64
    %v1658 = vpop.permute.xlu0 %1657
    %1660 = vst.msk [vmem:[#allocation2] sm:$0x3] %vm358, %v1658
    %1662 = vrot.lane.b32.xlu0 %v1655, 64
    %v1663 = vpop.permute.xlu0 %1662
    %1665 = vst.msk [vmem:[#allocation3 + $0x8] sm:$0xc0] %vm364, %v1663
    %v1666 = vrot.slane %v1655, 6
    %1667 = vrot.lane.b32.xlu0 %v1666, 96
    %v1668 = vpop.permute.xlu0 %1667
    %v1670 = vsel %vm370, %v1658, %v1668
    %v1672 = vsel %vm231, %v1670, 0
    %1674 = vmatpush.msra.mxu0 0.0
    %1675 = vmatpush.msra.mxu0 0.0
    %1676 = vmatpush.msra.mxu0 0.0
    %1677 = vmatpush.msra.mxu0 0.0
    %1678 = vmatpush.msra.mxu0 0.0
    %1679 = vmatpush.msra.mxu0 0.0
    %1680 = vmatpush.msra.mxu0 0.0
    %1681 = vmatpush.msra.mxu0 0.0
    %1682 = vmatpush.msra.mxu0 %v1535
    %1683 = vmatpush.msra.mxu0 %v1533
    %1684 = vmatpush.msra.mxu0 %v1531
    %1685 = vmatpush.msra.mxu0 %v1529
    %1686 = vmatpush.msra.mxu0 %v1527
    %1687 = vmatpush.msra.mxu0 %v1525
    %1688 = vmatpush.msra.mxu0 %v1523
    %1689 = vmatpush.msra.mxu0 %v1521
    %1690 = vmatmul.f32.gmra.mxu0 %v1672
    %v1691 = vpop.f32.mrf.mxu0
    %v1692 = vadd.f32 0.0, %v1691
    %1693 = vdwg.mxu0
    %1694 = vmatpush.msra.mxu0 0.0
    %1695 = vmatpush.msra.mxu0 0.0
    %1696 = vmatpush.msra.mxu0 0.0
    %1697 = vmatpush.msra.mxu0 0.0
    %1698 = vmatpush.msra.mxu0 0.0
    %1699 = vmatpush.msra.mxu0 0.0
    %1700 = vmatpush.msra.mxu0 0.0
    %1701 = vmatpush.msra.mxu0 0.0
    %1702 = vmatpush.msra.mxu0 %v1536
    %1703 = vmatpush.msra.mxu0 %v1534
    %1704 = vmatpush.msra.mxu0 %v1532
    %1705 = vmatpush.msra.mxu0 %v1530
    %1706 = vmatpush.msra.mxu0 %v1528
    %1707 = vmatpush.msra.mxu0 %v1526
    %1708 = vmatpush.msra.mxu0 %v1524
    %1709 = vmatpush.msra.mxu0 %v1522
    %1710 = vmatmul.f32.gmra.mxu0 %v1672
    %v1711 = vpop.f32.mrf.mxu0
    %v1712 = vadd.f32 0.0, %v1711
    %1713 = vdwg.mxu0
    %v1715 = vrot.slane %v1692, 6
    %v1717 = vadd.f32 %v1517, %v1715
    %v1719 = vrot.slane %v1712, 4
    %v1721 = vadd.f32 %v1520, %v1719
    %v1722 = vxor.u32 %v1717, 2147483648
    %v1723 = vmul.f32 %v1722, 1.442695
    %v1724 = vpow.pop %v1723
    %v1725 = vadd.f32 %v1724, 1.0
    %v1726 = vrcp.pop %v1725
    %v1727 = vmul.f32 %v1725, %v1726
    %v1728 = vsub.f32 1.0, %v1727
    %v1729 = vmul.f32 %v1726, %v1728
    %v1730 = vadd.f32 %v1726, %v1729
    %vm1731 = vweird.f32 %v1725
    %vm1732 = vweird.f32 %v1726
    %vm1733 = vmor %vm1731, %vm1732
    %v1734 = vsel %vm1733, %v1726, %v1730
    %v1735 = vand.u32 2147483647, %v1725
    %vm1736 = vcmp.eq.f32.partialorder %v1735, 8.507059e+37
    %v1737 = vand.u32 %v1725, 2147483648
    %v1738 = vor.u32 1.1754944e-38, %v1737
    %v1739 = vsel %vm1736, %v1738, %v1734
    %v1740 = vmul.f32 1.0, %v1739
    %v1741 = vtanh.pop %v1717
    %v1743 = vrot.slane %v1612, 6
    %v1745 = vmul.f32 %v1740, %v1743
    %1747 = vrot.lane.b32.xlu0 %v1741, 32
    %v1748 = vpop.permute.xlu0 %1747
    %v1750 = vmul.f32 %v1740, %v1748
    %1752 = vrot.lane.b32.xlu0 %v1750, 32
    %v1753 = vpop.permute.xlu0 %1752
    %v1755 = vadd.f32 %v1745, %v1753
    %v1756 = vtanh.pop %v1755
    %1758 = vrot.lane.b32.xlu0 %v1756, 32
    %v1759 = vpop.permute.xlu0 %1758
    %v1761 = vmul.f32 %v1740, %v1759
    %v1762 = vxor.u32 %v1721, 2147483648
    %v1763 = vmul.f32 %v1762, 1.442695
    %v1764 = vpow.pop %v1763
    %v1765 = vadd.f32 %v1764, 1.0
    %v1766 = vrcp.pop %v1765
    %v1767 = vmul.f32 %v1765, %v1766
    %v1768 = vsub.f32 1.0, %v1767
    %v1769 = vmul.f32 %v1766, %v1768
    %v1770 = vadd.f32 %v1766, %v1769
    %vm1771 = vweird.f32 %v1765
    %vm1772 = vweird.f32 %v1766
    %vm1773 = vmor %vm1771, %vm1772
    %v1774 = vsel %vm1773, %v1766, %v1770
    %v1775 = vand.u32 2147483647, %v1765
    %vm1776 = vcmp.eq.f32.partialorder %v1775, 8.507059e+37
    %v1777 = vand.u32 %v1765, 2147483648
    %v1778 = vor.u32 1.1754944e-38, %v1777
    %v1779 = vsel %vm1776, %v1778, %v1774
    %v1780 = vmul.f32 1.0, %v1779
    %v1781 = vtanh.pop %v1721
    %v1783 = vrot.slane %v1649, 2
    %v1785 = vmul.f32 %v1780, %v1783
    %1787 = vrot.lane.b32.xlu0 %v1781, 32
    %v1788 = vpop.permute.xlu0 %1787
    %v1790 = vmul.f32 %v1780, %v1788
    %1792 = vrot.lane.b32.xlu0 %v1790, 32
    %v1793 = vpop.permute.xlu0 %1792
    %v1795 = vadd.f32 %v1785, %v1793
    %v1796 = vtanh.pop %v1795
    %1798 = vrot.lane.b32.xlu0 %v1796, 32
    %v1799 = vpop.permute.xlu0 %1798
    %v1801 = vmul.f32 %v1780, %v1799
    %1803 = vrot.lane.b32.xlu0 %v1761, 64
    %v1804 = vpop.permute.xlu0 %1803
    %1806 = vst.msk [vmem:[#allocation2] sm:$0xc] %vm507, %v1804
    %1808 = vrot.lane.b32.xlu0 %v1801, 64
    %v1809 = vpop.permute.xlu0 %1808
    %1811 = vst.msk [vmem:[#allocation3 + $0x8] sm:$0x30] %vm513, %v1809
    %v1812 = vrot.slane %v1801, 2
    %1813 = vrot.lane.b32.xlu0 %v1812, 96
    %v1814 = vpop.permute.xlu0 %1813
    %v1816 = vsel %vm370, %v1804, %v1814
    %v1818 = vrot.slane %v1816, 2
    %v1819 = vsel %vm231, %v1818, 0
    %1821 = vmatpush.msra.mxu0 0.0
    %1822 = vmatpush.msra.mxu0 0.0
    %1823 = vmatpush.msra.mxu0 0.0
    %1824 = vmatpush.msra.mxu0 0.0
    %1825 = vmatpush.msra.mxu0 0.0
    %1826 = vmatpush.msra.mxu0 0.0
    %1827 = vmatpush.msra.mxu0 0.0
    %1828 = vmatpush.msra.mxu0 0.0
    %1829 = vmatpush.msra.mxu0 %v1535
    %1830 = vmatpush.msra.mxu0 %v1533
    %1831 = vmatpush.msra.mxu0 %v1531
    %1832 = vmatpush.msra.mxu0 %v1529
    %1833 = vmatpush.msra.mxu0 %v1527
    %1834 = vmatpush.msra.mxu0 %v1525
    %1835 = vmatpush.msra.mxu0 %v1523
    %1836 = vmatpush.msra.mxu0 %v1521
    %1837 = vmatmul.f32.gmra.mxu0 %v1819
    %v1838 = vpop.f32.mrf.mxu0
    %v1839 = vadd.f32 0.0, %v1838
    %1840 = vdwg.mxu0
    %1841 = vmatpush.msra.mxu0 0.0
    %1842 = vmatpush.msra.mxu0 0.0
    %1843 = vmatpush.msra.mxu0 0.0
    %1844 = vmatpush.msra.mxu0 0.0
    %1845 = vmatpush.msra.mxu0 0.0
    %1846 = vmatpush.msra.mxu0 0.0
    %1847 = vmatpush.msra.mxu0 0.0
    %1848 = vmatpush.msra.mxu0 0.0
    %1849 = vmatpush.msra.mxu0 %v1536
    %1850 = vmatpush.msra.mxu0 %v1534
    %1851 = vmatpush.msra.mxu0 %v1532
    %1852 = vmatpush.msra.mxu0 %v1530
    %1853 = vmatpush.msra.mxu0 %v1528
    %1854 = vmatpush.msra.mxu0 %v1526
    %1855 = vmatpush.msra.mxu0 %v1524
    %1856 = vmatpush.msra.mxu0 %v1522
    %1857 = vmatmul.f32.gmra.mxu0 %v1819
    %v1858 = vpop.f32.mrf.mxu0
    %v1859 = vadd.f32 0.0, %v1858
    %1860 = vdwg.mxu0
    %v1862 = vrot.slane %v1839, 4
    %v1864 = vadd.f32 %v1517, %v1862
    %v1866 = vrot.slane %v1859, 6
    %v1868 = vadd.f32 %v1520, %v1866
    %v1869 = vxor.u32 %v1864, 2147483648
    %v1870 = vmul.f32 %v1869, 1.442695
    %v1871 = vpow.pop %v1870
    %v1872 = vadd.f32 %v1871, 1.0
    %v1873 = vrcp.pop %v1872
    %v1874 = vmul.f32 %v1872, %v1873
    %v1875 = vsub.f32 1.0, %v1874
    %v1876 = vmul.f32 %v1873, %v1875
    %v1877 = vadd.f32 %v1873, %v1876
    %vm1878 = vweird.f32 %v1872
    %vm1879 = vweird.f32 %v1873
    %vm1880 = vmor %vm1878, %vm1879
    %v1881 = vsel %vm1880, %v1873, %v1877
    %v1882 = vand.u32 2147483647, %v1872
    %vm1883 = vcmp.eq.f32.partialorder %v1882, 8.507059e+37
    %v1884 = vand.u32 %v1872, 2147483648
    %v1885 = vor.u32 1.1754944e-38, %v1884
    %v1886 = vsel %vm1883, %v1885, %v1881
    %v1887 = vmul.f32 1.0, %v1886
    %v1888 = vtanh.pop %v1864
    %v1890 = vrot.slane %v1755, 6
    %v1892 = vmul.f32 %v1887, %v1890
    %1894 = vrot.lane.b32.xlu0 %v1888, 32
    %v1895 = vpop.permute.xlu0 %1894
    %v1897 = vmul.f32 %v1887, %v1895
    %1899 = vrot.lane.b32.xlu0 %v1897, 32
    %v1900 = vpop.permute.xlu0 %1899
    %v1902 = vadd.f32 %v1892, %v1900
    %v1903 = vtanh.pop %v1902
    %1905 = vrot.lane.b32.xlu0 %v1903, 32
    %v1906 = vpop.permute.xlu0 %1905
    %v1908 = vmul.f32 %v1887, %v1906
    %v1909 = vxor.u32 %v1868, 2147483648
    %v1910 = vmul.f32 %v1909, 1.442695
    %v1911 = vpow.pop %v1910
    %v1912 = vadd.f32 %v1911, 1.0
    %v1913 = vrcp.pop %v1912
    %v1914 = vmul.f32 %v1912, %v1913
    %v1915 = vsub.f32 1.0, %v1914
    %v1916 = vmul.f32 %v1913, %v1915
    %v1917 = vadd.f32 %v1913, %v1916
    %vm1918 = vweird.f32 %v1912
    %vm1919 = vweird.f32 %v1913
    %vm1920 = vmor %vm1918, %vm1919
    %v1921 = vsel %vm1920, %v1913, %v1917
    %v1922 = vand.u32 2147483647, %v1912
    %vm1923 = vcmp.eq.f32.partialorder %v1922, 8.507059e+37
    %v1924 = vand.u32 %v1912, 2147483648
    %v1925 = vor.u32 1.1754944e-38, %v1924
    %v1926 = vsel %vm1923, %v1925, %v1921
    %v1927 = vmul.f32 1.0, %v1926
    %v1928 = vtanh.pop %v1868
    %v1930 = vrot.slane %v1795, 2
    %v1932 = vmul.f32 %v1927, %v1930
    %1934 = vrot.lane.b32.xlu0 %v1928, 32
    %v1935 = vpop.permute.xlu0 %1934
    %v1937 = vmul.f32 %v1927, %v1935
    %1939 = vrot.lane.b32.xlu0 %v1937, 32
    %v1940 = vpop.permute.xlu0 %1939
    %v1942 = vadd.f32 %v1932, %v1940
    %v1943 = vtanh.pop %v1942
    %1945 = vrot.lane.b32.xlu0 %v1943, 32
    %v1946 = vpop.permute.xlu0 %1945
    %v1948 = vmul.f32 %v1927, %v1946
    %1950 = vrot.lane.b32.xlu0 %v1908, 64
    %v1951 = vpop.permute.xlu0 %1950
    %1953 = vst.msk [vmem:[#allocation2] sm:$0x30] %vm513, %v1951
    %1955 = vrot.lane.b32.xlu0 %v1948, 64
    %v1956 = vpop.permute.xlu0 %1955
    %1958 = vst.msk [vmem:[#allocation3 + $0x8] sm:$0xc] %vm507, %v1956
    %v1959 = vrot.slane %v1948, 6
    %1960 = vrot.lane.b32.xlu0 %v1959, 96
    %v1961 = vpop.permute.xlu0 %1960
    %v1963 = vsel %vm370, %v1951, %v1961
    %v1965 = vrot.slane %v1963, 4
    %v1966 = vsel %vm231, %v1965, 0
    %1968 = vmatpush.msra.mxu0 0.0
    %1969 = vmatpush.msra.mxu0 0.0
    %1970 = vmatpush.msra.mxu0 0.0
    %1971 = vmatpush.msra.mxu0 0.0
    %1972 = vmatpush.msra.mxu0 0.0
    %1973 = vmatpush.msra.mxu0 0.0
    %1974 = vmatpush.msra.mxu0 0.0
    %1975 = vmatpush.msra.mxu0 0.0
    %1976 = vmatpush.msra.mxu0 %v1535
    %1977 = vmatpush.msra.mxu0 %v1533
    %1978 = vmatpush.msra.mxu0 %v1531
    %1979 = vmatpush.msra.mxu0 %v1529
    %1980 = vmatpush.msra.mxu0 %v1527
    %1981 = vmatpush.msra.mxu0 %v1525
    %1982 = vmatpush.msra.mxu0 %v1523
    %1983 = vmatpush.msra.mxu0 %v1521
    %1984 = vmatmul.f32.gmra.mxu0 %v1966
    %v1985 = vpop.f32.mrf.mxu0
    %v1986 = vadd.f32 0.0, %v1985
    %1987 = vdwg.mxu0
    %1988 = vmatpush.msra.mxu0 0.0
    %1989 = vmatpush.msra.mxu0 0.0
    %1990 = vmatpush.msra.mxu0 0.0
    %1991 = vmatpush.msra.mxu0 0.0
    %1992 = vmatpush.msra.mxu0 0.0
    %1993 = vmatpush.msra.mxu0 0.0
    %1994 = vmatpush.msra.mxu0 0.0
    %1995 = vmatpush.msra.mxu0 0.0
    %1996 = vmatpush.msra.mxu0 %v1536
    %1997 = vmatpush.msra.mxu0 %v1534
    %1998 = vmatpush.msra.mxu0 %v1532
    %1999 = vmatpush.msra.mxu0 %v1530
    %2000 = vmatpush.msra.mxu0 %v1528
    %2001 = vmatpush.msra.mxu0 %v1526
    %2002 = vmatpush.msra.mxu0 %v1524
    %2003 = vmatpush.msra.mxu0 %v1522
    %2004 = vmatmul.f32.gmra.mxu0 %v1966
    %v2005 = vpop.f32.mrf.mxu0
    %v2006 = vadd.f32 0.0, %v2005
    %2007 = vdwg.mxu0
    %v2009 = vrot.slane %v1986, 2
    %v2011 = vadd.f32 %v1517, %v2009
    %v2012 = vadd.f32 %v1520, %v2006
    %v2013 = vxor.u32 %v2011, 2147483648
    %v2014 = vmul.f32 %v2013, 1.442695
    %v2015 = vpow.pop %v2014
    %v2016 = vadd.f32 %v2015, 1.0
    %v2017 = vrcp.pop %v2016
    %v2018 = vmul.f32 %v2016, %v2017
    %v2019 = vsub.f32 1.0, %v2018
    %v2020 = vmul.f32 %v2017, %v2019
    %v2021 = vadd.f32 %v2017, %v2020
    %vm2022 = vweird.f32 %v2016
    %vm2023 = vweird.f32 %v2017
    %vm2024 = vmor %vm2022, %vm2023
    %v2025 = vsel %vm2024, %v2017, %v2021
    %v2026 = vand.u32 2147483647, %v2016
    %vm2027 = vcmp.eq.f32.partialorder %v2026, 8.507059e+37
    %v2028 = vand.u32 %v2016, 2147483648
    %v2029 = vor.u32 1.1754944e-38, %v2028
    %v2030 = vsel %vm2027, %v2029, %v2025
    %v2031 = vmul.f32 1.0, %v2030
    %v2032 = vtanh.pop %v2011
    %v2034 = vrot.slane %v1902, 6
    %v2036 = vmul.f32 %v2031, %v2034
    %2038 = vrot.lane.b32.xlu0 %v2032, 32
    %v2039 = vpop.permute.xlu0 %2038
    %v2041 = vmul.f32 %v2031, %v2039
    %2043 = vrot.lane.b32.xlu0 %v2041, 32
    %v2044 = vpop.permute.xlu0 %2043
    %v2046 = vadd.f32 %v2036, %v2044
    %v2047 = vtanh.pop %v2046
    %2049 = vrot.lane.b32.xlu0 %v2047, 32
    %v2050 = vpop.permute.xlu0 %2049
    %v2052 = vmul.f32 %v2031, %v2050
    %v2053 = vxor.u32 %v2012, 2147483648
    %v2054 = vmul.f32 %v2053, 1.442695
    %v2055 = vpow.pop %v2054
    %v2056 = vadd.f32 %v2055, 1.0
    %v2057 = vrcp.pop %v2056
    %v2058 = vmul.f32 %v2056, %v2057
    %v2059 = vsub.f32 1.0, %v2058
    %v2060 = vmul.f32 %v2057, %v2059
    %v2061 = vadd.f32 %v2057, %v2060
    %vm2062 = vweird.f32 %v2056
    %vm2063 = vweird.f32 %v2057
    %vm2064 = vmor %vm2062, %vm2063
    %v2065 = vsel %vm2064, %v2057, %v2061
    %v2066 = vand.u32 2147483647, %v2056
    %vm2067 = vcmp.eq.f32.partialorder %v2066, 8.507059e+37
    %v2068 = vand.u32 %v2056, 2147483648
    %v2069 = vor.u32 1.1754944e-38, %v2068
    %v2070 = vsel %vm2067, %v2069, %v2065
    %v2071 = vmul.f32 1.0, %v2070
    %v2072 = vtanh.pop %v2012
    %v2074 = vrot.slane %v1942, 2
    %v2076 = vmul.f32 %v2071, %v2074
    %2078 = vrot.lane.b32.xlu0 %v2072, 32
    %v2079 = vpop.permute.xlu0 %2078
    %v2081 = vmul.f32 %v2071, %v2079
    %2083 = vrot.lane.b32.xlu0 %v2081, 32
    %v2084 = vpop.permute.xlu0 %2083
    %v2086 = vadd.f32 %v2076, %v2084
    %v2087 = vtanh.pop %v2086
    %2089 = vrot.lane.b32.xlu0 %v2087, 32
    %v2090 = vpop.permute.xlu0 %2089
    %v2092 = vmul.f32 %v2071, %v2090
    %2094 = vrot.lane.b32.xlu0 %v2052, 64
    %v2095 = vpop.permute.xlu0 %2094
    %2097 = vst.msk [vmem:[#allocation2] sm:$0xc0] %vm364, %v2095
    %2099 = vrot.lane.b32.xlu0 %v2092, 64
    %v2100 = vpop.permute.xlu0 %2099
    %2102 = vst.msk [vmem:[#allocation3 + $0x8] sm:$0x3] %vm358, %v2100
    %v2103 = vrot.slane %v2092, 2
    %2104 = vrot.lane.b32.xlu0 %v2103, 96
    %v2105 = vpop.permute.xlu0 %2104
    %v2107 = vsel %vm370, %v2095, %v2105
    %v2109 = vrot.slane %v2107, 6
    %v2110 = vsel %vm231, %v2109, 0
    %2112 = vmatpush.msra.mxu0 0.0
    %2113 = vmatpush.msra.mxu0 0.0
    %2114 = vmatpush.msra.mxu0 0.0
    %2115 = vmatpush.msra.mxu0 0.0
    %2116 = vmatpush.msra.mxu0 0.0
    %2117 = vmatpush.msra.mxu0 0.0
    %2118 = vmatpush.msra.mxu0 0.0
    %2119 = vmatpush.msra.mxu0 0.0
    %2120 = vmatpush.msra.mxu0 %v1535
    %2121 = vmatpush.msra.mxu0 %v1533
    %2122 = vmatpush.msra.mxu0 %v1531
    %2123 = vmatpush.msra.mxu0 %v1529
    %2124 = vmatpush.msra.mxu0 %v1527
    %2125 = vmatpush.msra.mxu0 %v1525
    %2126 = vmatpush.msra.mxu0 %v1523
    %2127 = vmatpush.msra.mxu0 %v1521
    %2128 = vmatmul.f32.gmra.mxu0 %v2110
    %v2129 = vpop.f32.mrf.mxu0
    %v2130 = vadd.f32 0.0, %v2129
    %2131 = vdwg.mxu0
    %2132 = vmatpush.msra.mxu0 0.0
    %2133 = vmatpush.msra.mxu0 0.0
    %2134 = vmatpush.msra.mxu0 0.0
    %2135 = vmatpush.msra.mxu0 0.0
    %2136 = vmatpush.msra.mxu0 0.0
    %2137 = vmatpush.msra.mxu0 0.0
    %2138 = vmatpush.msra.mxu0 0.0
    %2139 = vmatpush.msra.mxu0 0.0
    %2140 = vmatpush.msra.mxu0 %v1536
    %2141 = vmatpush.msra.mxu0 %v1534
    %2142 = vmatpush.msra.mxu0 %v1532
    %2143 = vmatpush.msra.mxu0 %v1530
    %2144 = vmatpush.msra.mxu0 %v1528
    %2145 = vmatpush.msra.mxu0 %v1526
    %2146 = vmatpush.msra.mxu0 %v1524
    %2147 = vmatpush.msra.mxu0 %v1522
    %2148 = vmatmul.f32.gmra.mxu0 %v2110
    %v2149 = vpop.f32.mrf.mxu0
    %v2150 = vadd.f32 0.0, %v2149
    %2151 = vdwg.mxu0
    %v2152 = vadd.f32 %v1519, %v2130
    %v2154 = vrot.slane %v2150, 2
    %v2156 = vadd.f32 %v1518, %v2154
    %v2157 = vxor.u32 %v2152, 2147483648
    %v2158 = vmul.f32 %v2157, 1.442695
    %v2159 = vpow.pop %v2158
    %v2160 = vadd.f32 %v2159, 1.0
    %v2161 = vrcp.pop %v2160
    %v2162 = vmul.f32 %v2160, %v2161
    %v2163 = vsub.f32 1.0, %v2162
    %v2164 = vmul.f32 %v2161, %v2163
    %v2165 = vadd.f32 %v2161, %v2164
    %vm2166 = vweird.f32 %v2160
    %vm2167 = vweird.f32 %v2161
    %vm2168 = vmor %vm2166, %vm2167
    %v2169 = vsel %vm2168, %v2161, %v2165
    %v2170 = vand.u32 2147483647, %v2160
    %vm2171 = vcmp.eq.f32.partialorder %v2170, 8.507059e+37
    %v2172 = vand.u32 %v2160, 2147483648
    %v2173 = vor.u32 1.1754944e-38, %v2172
    %v2174 = vsel %vm2171, %v2173, %v2169
    %v2175 = vmul.f32 1.0, %v2174
    %v2176 = vtanh.pop %v2152
    %v2178 = vrot.slane %v2046, 6
    %v2180 = vmul.f32 %v2175, %v2178
    %2182 = vrot.lane.b32.xlu0 %v2176, 32
    %v2183 = vpop.permute.xlu0 %2182
    %v2185 = vmul.f32 %v2175, %v2183
    %2187 = vrot.lane.b32.xlu0 %v2185, 32
    %v2188 = vpop.permute.xlu0 %2187
    %v2190 = vadd.f32 %v2180, %v2188
    %v2191 = vtanh.pop %v2190
    %2193 = vrot.lane.b32.xlu0 %v2191, 32
    %v2194 = vpop.permute.xlu0 %2193
    %v2196 = vmul.f32 %v2175, %v2194
    %v2197 = vxor.u32 %v2156, 2147483648
    %v2198 = vmul.f32 %v2197, 1.442695
    %v2199 = vpow.pop %v2198
    %v2200 = vadd.f32 %v2199, 1.0
    %v2201 = vrcp.pop %v2200
    %v2202 = vmul.f32 %v2200, %v2201
    %v2203 = vsub.f32 1.0, %v2202
    %v2204 = vmul.f32 %v2201, %v2203
    %v2205 = vadd.f32 %v2201, %v2204
    %vm2206 = vweird.f32 %v2200
    %vm2207 = vweird.f32 %v2201
    %vm2208 = vmor %vm2206, %vm2207
    %v2209 = vsel %vm2208, %v2201, %v2205
    %v2210 = vand.u32 2147483647, %v2200
    %vm2211 = vcmp.eq.f32.partialorder %v2210, 8.507059e+37
    %v2212 = vand.u32 %v2200, 2147483648
    %v2213 = vor.u32 1.1754944e-38, %v2212
    %v2214 = vsel %vm2211, %v2213, %v2209
    %v2215 = vmul.f32 1.0, %v2214
    %v2216 = vtanh.pop %v2156
    %v2218 = vrot.slane %v2086, 2
    %v2220 = vmul.f32 %v2215, %v2218
    %2222 = vrot.lane.b32.xlu0 %v2216, 32
    %v2223 = vpop.permute.xlu0 %2222
    %v2225 = vmul.f32 %v2215, %v2223
    %2227 = vrot.lane.b32.xlu0 %v2225, 32
    %v2228 = vpop.permute.xlu0 %2227
    %v2230 = vadd.f32 %v2220, %v2228
    %v2231 = vtanh.pop %v2230
    %2233 = vrot.lane.b32.xlu0 %v2231, 32
    %v2234 = vpop.permute.xlu0 %2233
    %v2236 = vmul.f32 %v2215, %v2234
    %2238 = vrot.lane.b32.xlu0 %v2196, 64
    %v2239 = vpop.permute.xlu0 %2238
    %2241 = vst.msk [vmem:[#allocation2 + $0x8] sm:$0x3] %vm358, %v2239
    %2243 = vrot.lane.b32.xlu0 %v2236, 64
    %v2244 = vpop.permute.xlu0 %2243
    %2246 = vst.msk [vmem:[#allocation3] sm:$0xc0] %vm364, %v2244
    %v2247 = vrot.slane %v2236, 6
    %2248 = vrot.lane.b32.xlu0 %v2247, 96
    %v2249 = vpop.permute.xlu0 %2248
    %v2251 = vsel %vm370, %v2239, %v2249
    %v2253 = vsel %vm231, %v2251, 0
    %2255 = vmatpush.msra.mxu0 0.0
    %2256 = vmatpush.msra.mxu0 0.0
    %2257 = vmatpush.msra.mxu0 0.0
    %2258 = vmatpush.msra.mxu0 0.0
    %2259 = vmatpush.msra.mxu0 0.0
    %2260 = vmatpush.msra.mxu0 0.0
    %2261 = vmatpush.msra.mxu0 0.0
    %2262 = vmatpush.msra.mxu0 0.0
    %2263 = vmatpush.msra.mxu0 %v1535
    %2264 = vmatpush.msra.mxu0 %v1533
    %2265 = vmatpush.msra.mxu0 %v1531
    %2266 = vmatpush.msra.mxu0 %v1529
    %2267 = vmatpush.msra.mxu0 %v1527
    %2268 = vmatpush.msra.mxu0 %v1525
    %2269 = vmatpush.msra.mxu0 %v1523
    %2270 = vmatpush.msra.mxu0 %v1521
    %2271 = vmatmul.f32.gmra.mxu0 %v2253
    %v2272 = vpop.f32.mrf.mxu0
    %v2273 = vadd.f32 0.0, %v2272
    %2274 = vdwg.mxu0
    %2275 = vmatpush.msra.mxu0 0.0
    %2276 = vmatpush.msra.mxu0 0.0
    %2277 = vmatpush.msra.mxu0 0.0
    %2278 = vmatpush.msra.mxu0 0.0
    %2279 = vmatpush.msra.mxu0 0.0
    %2280 = vmatpush.msra.mxu0 0.0
    %2281 = vmatpush.msra.mxu0 0.0
    %2282 = vmatpush.msra.mxu0 0.0
    %2283 = vmatpush.msra.mxu0 %v1536
    %2284 = vmatpush.msra.mxu0 %v1534
    %2285 = vmatpush.msra.mxu0 %v1532
    %2286 = vmatpush.msra.mxu0 %v1530
    %2287 = vmatpush.msra.mxu0 %v1528
    %2288 = vmatpush.msra.mxu0 %v1526
    %2289 = vmatpush.msra.mxu0 %v1524
    %2290 = vmatpush.msra.mxu0 %v1522
    %2291 = vmatmul.f32.gmra.mxu0 %v2253
    %v2292 = vpop.f32.mrf.mxu0
    %v2293 = vadd.f32 0.0, %v2292
    %2294 = vdwg.mxu0
    %v2296 = vrot.slane %v2273, 6
    %v2298 = vadd.f32 %v1519, %v2296
    %v2300 = vrot.slane %v2293, 4
    %v2302 = vadd.f32 %v1518, %v2300
    %v2303 = vxor.u32 %v2298, 2147483648
    %v2304 = vmul.f32 %v2303, 1.442695
    %v2305 = vpow.pop %v2304
    %v2306 = vadd.f32 %v2305, 1.0
    %v2307 = vrcp.pop %v2306
    %v2308 = vmul.f32 %v2306, %v2307
    %v2309 = vsub.f32 1.0, %v2308
    %v2310 = vmul.f32 %v2307, %v2309
    %v2311 = vadd.f32 %v2307, %v2310
    %vm2312 = vweird.f32 %v2306
    %vm2313 = vweird.f32 %v2307
    %vm2314 = vmor %vm2312, %vm2313
    %v2315 = vsel %vm2314, %v2307, %v2311
    %v2316 = vand.u32 2147483647, %v2306
    %vm2317 = vcmp.eq.f32.partialorder %v2316, 8.507059e+37
    %v2318 = vand.u32 %v2306, 2147483648
    %v2319 = vor.u32 1.1754944e-38, %v2318
    %v2320 = vsel %vm2317, %v2319, %v2315
    %v2321 = vmul.f32 1.0, %v2320
    %v2322 = vtanh.pop %v2298
    %v2324 = vrot.slane %v2190, 6
    %v2326 = vmul.f32 %v2321, %v2324
    %2328 = vrot.lane.b32.xlu0 %v2322, 32
    %v2329 = vpop.permute.xlu0 %2328
    %v2331 = vmul.f32 %v2321, %v2329
    %2333 = vrot.lane.b32.xlu0 %v2331, 32
    %v2334 = vpop.permute.xlu0 %2333
    %v2336 = vadd.f32 %v2326, %v2334
    %v2337 = vtanh.pop %v2336
    %2339 = vrot.lane.b32.xlu0 %v2337, 32
    %v2340 = vpop.permute.xlu0 %2339
    %v2342 = vmul.f32 %v2321, %v2340
    %v2343 = vxor.u32 %v2302, 2147483648
    %v2344 = vmul.f32 %v2343, 1.442695
    %v2345 = vpow.pop %v2344
    %v2346 = vadd.f32 %v2345, 1.0
    %v2347 = vrcp.pop %v2346
    %v2348 = vmul.f32 %v2346, %v2347
    %v2349 = vsub.f32 1.0, %v2348
    %v2350 = vmul.f32 %v2347, %v2349
    %v2351 = vadd.f32 %v2347, %v2350
    %vm2352 = vweird.f32 %v2346
    %vm2353 = vweird.f32 %v2347
    %vm2354 = vmor %vm2352, %vm2353
    %v2355 = vsel %vm2354, %v2347, %v2351
    %v2356 = vand.u32 2147483647, %v2346
    %vm2357 = vcmp.eq.f32.partialorder %v2356, 8.507059e+37
    %v2358 = vand.u32 %v2346, 2147483648
    %v2359 = vor.u32 1.1754944e-38, %v2358
    %v2360 = vsel %vm2357, %v2359, %v2355
    %v2361 = vmul.f32 1.0, %v2360
    %v2362 = vtanh.pop %v2302
    %v2364 = vrot.slane %v2230, 2
    %v2366 = vmul.f32 %v2361, %v2364
    %2368 = vrot.lane.b32.xlu0 %v2362, 32
    %v2369 = vpop.permute.xlu0 %2368
    %v2371 = vmul.f32 %v2361, %v2369
    %2373 = vrot.lane.b32.xlu0 %v2371, 32
    %v2374 = vpop.permute.xlu0 %2373
    %v2376 = vadd.f32 %v2366, %v2374
    %v2377 = vtanh.pop %v2376
    %2379 = vrot.lane.b32.xlu0 %v2377, 32
    %v2380 = vpop.permute.xlu0 %2379
    %v2382 = vmul.f32 %v2361, %v2380
    %2384 = vrot.lane.b32.xlu0 %v2342, 64
    %v2385 = vpop.permute.xlu0 %2384
    %2387 = vst.msk [vmem:[#allocation2 + $0x8] sm:$0xc] %vm507, %v2385
    %2389 = vrot.lane.b32.xlu0 %v2382, 64
    %v2390 = vpop.permute.xlu0 %2389
    %2392 = vst.msk [vmem:[#allocation3] sm:$0x30] %vm513, %v2390
    %v2393 = vrot.slane %v2382, 2
    %2394 = vrot.lane.b32.xlu0 %v2393, 96
    %v2395 = vpop.permute.xlu0 %2394
    %v2397 = vsel %vm370, %v2385, %v2395
    %v2399 = vrot.slane %v2397, 2
    %v2400 = vsel %vm231, %v2399, 0
    %2402 = vmatpush.msra.mxu0 0.0
    %2403 = vmatpush.msra.mxu0 0.0
    %2404 = vmatpush.msra.mxu0 0.0
    %2405 = vmatpush.msra.mxu0 0.0
    %2406 = vmatpush.msra.mxu0 0.0
    %2407 = vmatpush.msra.mxu0 0.0
    %2408 = vmatpush.msra.mxu0 0.0
    %2409 = vmatpush.msra.mxu0 0.0
    %2410 = vmatpush.msra.mxu0 %v1535
    %2411 = vmatpush.msra.mxu0 %v1533
    %2412 = vmatpush.msra.mxu0 %v1531
    %2413 = vmatpush.msra.mxu0 %v1529
    %2414 = vmatpush.msra.mxu0 %v1527
    %2415 = vmatpush.msra.mxu0 %v1525
    %2416 = vmatpush.msra.mxu0 %v1523
    %2417 = vmatpush.msra.mxu0 %v1521
    %2418 = vmatmul.f32.gmra.mxu0 %v2400
    %v2419 = vpop.f32.mrf.mxu0
    %v2420 = vadd.f32 0.0, %v2419
    %2421 = vdwg.mxu0
    %2422 = vmatpush.msra.mxu0 0.0
    %2423 = vmatpush.msra.mxu0 0.0
    %2424 = vmatpush.msra.mxu0 0.0
    %2425 = vmatpush.msra.mxu0 0.0
    %2426 = vmatpush.msra.mxu0 0.0
    %2427 = vmatpush.msra.mxu0 0.0
    %2428 = vmatpush.msra.mxu0 0.0
    %2429 = vmatpush.msra.mxu0 0.0
    %2430 = vmatpush.msra.mxu0 %v1536
    %2431 = vmatpush.msra.mxu0 %v1534
    %2432 = vmatpush.msra.mxu0 %v1532
    %2433 = vmatpush.msra.mxu0 %v1530
    %2434 = vmatpush.msra.mxu0 %v1528
    %2435 = vmatpush.msra.mxu0 %v1526
    %2436 = vmatpush.msra.mxu0 %v1524
    %2437 = vmatpush.msra.mxu0 %v1522
    %2438 = vmatmul.f32.gmra.mxu0 %v2400
    %v2439 = vpop.f32.mrf.mxu0
    %v2440 = vadd.f32 0.0, %v2439
    %2441 = vdwg.mxu0
    %v2443 = vrot.slane %v2420, 4
    %v2445 = vadd.f32 %v1519, %v2443
    %v2447 = vrot.slane %v2440, 6
    %v2449 = vadd.f32 %v1518, %v2447
    %v2450 = vxor.u32 %v2445, 2147483648
    %v2451 = vmul.f32 %v2450, 1.442695
    %v2452 = vpow.pop %v2451
    %v2453 = vadd.f32 %v2452, 1.0
    %v2454 = vrcp.pop %v2453
    %v2455 = vmul.f32 %v2453, %v2454
    %v2456 = vsub.f32 1.0, %v2455
    %v2457 = vmul.f32 %v2454, %v2456
    %v2458 = vadd.f32 %v2454, %v2457
    %vm2459 = vweird.f32 %v2453
    %vm2460 = vweird.f32 %v2454
    %vm2461 = vmor %vm2459, %vm2460
    %v2462 = vsel %vm2461, %v2454, %v2458
    %v2463 = vand.u32 2147483647, %v2453
    %vm2464 = vcmp.eq.f32.partialorder %v2463, 8.507059e+37
    %v2465 = vand.u32 %v2453, 2147483648
    %v2466 = vor.u32 1.1754944e-38, %v2465
    %v2467 = vsel %vm2464, %v2466, %v2462
    %v2468 = vmul.f32 1.0, %v2467
    %v2469 = vtanh.pop %v2445
    %v2471 = vrot.slane %v2336, 6
    %v2473 = vmul.f32 %v2468, %v2471
    %2475 = vrot.lane.b32.xlu0 %v2469, 32
    %v2476 = vpop.permute.xlu0 %2475
    %v2478 = vmul.f32 %v2468, %v2476
    %2480 = vrot.lane.b32.xlu0 %v2478, 32
    %v2481 = vpop.permute.xlu0 %2480
    %v2483 = vadd.f32 %v2473, %v2481
    %v2484 = vtanh.pop %v2483
    %2486 = vrot.lane.b32.xlu0 %v2484, 32
    %v2487 = vpop.permute.xlu0 %2486
    %v2489 = vmul.f32 %v2468, %v2487
    %v2490 = vxor.u32 %v2449, 2147483648
    %v2491 = vmul.f32 %v2490, 1.442695
    %v2492 = vpow.pop %v2491
    %v2493 = vadd.f32 %v2492, 1.0
    %v2494 = vrcp.pop %v2493
    %v2495 = vmul.f32 %v2493, %v2494
    %v2496 = vsub.f32 1.0, %v2495
    %v2497 = vmul.f32 %v2494, %v2496
    %v2498 = vadd.f32 %v2494, %v2497
    %vm2499 = vweird.f32 %v2493
    %vm2500 = vweird.f32 %v2494
    %vm2501 = vmor %vm2499, %vm2500
    %v2502 = vsel %vm2501, %v2494, %v2498
    %v2503 = vand.u32 2147483647, %v2493
    %vm2504 = vcmp.eq.f32.partialorder %v2503, 8.507059e+37
    %v2505 = vand.u32 %v2493, 2147483648
    %v2506 = vor.u32 1.1754944e-38, %v2505
    %v2507 = vsel %vm2504, %v2506, %v2502
    %v2508 = vmul.f32 1.0, %v2507
    %v2509 = vtanh.pop %v2449
    %v2511 = vrot.slane %v2376, 2
    %v2513 = vmul.f32 %v2508, %v2511
    %2515 = vrot.lane.b32.xlu0 %v2509, 32
    %v2516 = vpop.permute.xlu0 %2515
    %v2518 = vmul.f32 %v2508, %v2516
    %2520 = vrot.lane.b32.xlu0 %v2518, 32
    %v2521 = vpop.permute.xlu0 %2520
    %v2523 = vadd.f32 %v2513, %v2521
    %v2524 = vtanh.pop %v2523
    %2526 = vrot.lane.b32.xlu0 %v2524, 32
    %v2527 = vpop.permute.xlu0 %2526
    %v2529 = vmul.f32 %v2508, %v2527
    %2531 = vrot.lane.b32.xlu0 %v2489, 64
    %v2532 = vpop.permute.xlu0 %2531
    %2534 = vst.msk [vmem:[#allocation2 + $0x8] sm:$0x30] %vm513, %v2532
    %2536 = vrot.lane.b32.xlu0 %v2529, 64
    %v2537 = vpop.permute.xlu0 %2536
    %2539 = vst.msk [vmem:[#allocation3] sm:$0xc] %vm507, %v2537
    %v2540 = vrot.slane %v2529, 6
    %2541 = vrot.lane.b32.xlu0 %v2540, 96
    %v2542 = vpop.permute.xlu0 %2541
    %v2544 = vsel %vm370, %v2532, %v2542
    %v2546 = vrot.slane %v2544, 4
    %v2547 = vsel %vm231, %v2546, 0
    %2549 = vmatpush.msra.mxu0 0.0
    %2550 = vmatpush.msra.mxu0 0.0
    %2551 = vmatpush.msra.mxu0 0.0
    %2552 = vmatpush.msra.mxu0 0.0
    %2553 = vmatpush.msra.mxu0 0.0
    %2554 = vmatpush.msra.mxu0 0.0
    %2555 = vmatpush.msra.mxu0 0.0
    %2556 = vmatpush.msra.mxu0 0.0
    %2557 = vmatpush.msra.mxu0 %v1535
    %2558 = vmatpush.msra.mxu0 %v1533
    %2559 = vmatpush.msra.mxu0 %v1531
    %2560 = vmatpush.msra.mxu0 %v1529
    %2561 = vmatpush.msra.mxu0 %v1527
    %2562 = vmatpush.msra.mxu0 %v1525
    %2563 = vmatpush.msra.mxu0 %v1523
    %2564 = vmatpush.msra.mxu0 %v1521
    %2565 = vmatmul.f32.gmra.mxu0 %v2547
    %v2566 = vpop.f32.mrf.mxu0
    %v2567 = vadd.f32 0.0, %v2566
    %2568 = vdwg.mxu0
    %2569 = vmatpush.msra.mxu0 0.0
    %2570 = vmatpush.msra.mxu0 0.0
    %2571 = vmatpush.msra.mxu0 0.0
    %2572 = vmatpush.msra.mxu0 0.0
    %2573 = vmatpush.msra.mxu0 0.0
    %2574 = vmatpush.msra.mxu0 0.0
    %2575 = vmatpush.msra.mxu0 0.0
    %2576 = vmatpush.msra.mxu0 0.0
    %2577 = vmatpush.msra.mxu0 %v1536
    %2578 = vmatpush.msra.mxu0 %v1534
    %2579 = vmatpush.msra.mxu0 %v1532
    %2580 = vmatpush.msra.mxu0 %v1530
    %2581 = vmatpush.msra.mxu0 %v1528
    %2582 = vmatpush.msra.mxu0 %v1526
    %2583 = vmatpush.msra.mxu0 %v1524
    %2584 = vmatpush.msra.mxu0 %v1522
    %2585 = vmatmul.f32.gmra.mxu0 %v2547
    %v2586 = vpop.f32.mrf.mxu0
    %v2587 = vadd.f32 0.0, %v2586
    %2588 = vdwg.mxu0
    %v2590 = vrot.slane %v2567, 2
    %v2592 = vadd.f32 %v1519, %v2590
    %v2593 = vadd.f32 %v1518, %v2587
    %v2594 = vxor.u32 %v2592, 2147483648
    %v2595 = vmul.f32 %v2594, 1.442695
    %v2596 = vpow.pop %v2595
    %v2597 = vadd.f32 %v2596, 1.0
    %v2598 = vrcp.pop %v2597
    %v2599 = vmul.f32 %v2597, %v2598
    %v2600 = vsub.f32 1.0, %v2599
    %v2601 = vmul.f32 %v2598, %v2600
    %v2602 = vadd.f32 %v2598, %v2601
    %vm2603 = vweird.f32 %v2597
    %vm2604 = vweird.f32 %v2598
    %vm2605 = vmor %vm2603, %vm2604
    %v2606 = vsel %vm2605, %v2598, %v2602
    %v2607 = vand.u32 2147483647, %v2597
    %vm2608 = vcmp.eq.f32.partialorder %v2607, 8.507059e+37
    %v2609 = vand.u32 %v2597, 2147483648
    %v2610 = vor.u32 1.1754944e-38, %v2609
    %v2611 = vsel %vm2608, %v2610, %v2606
    %v2612 = vmul.f32 1.0, %v2611
    %v2613 = vtanh.pop %v2592
    %v2615 = vrot.slane %v2483, 6
    %v2617 = vmul.f32 %v2612, %v2615
    %2619 = vrot.lane.b32.xlu0 %v2613, 32
    %v2620 = vpop.permute.xlu0 %2619
    %v2622 = vmul.f32 %v2612, %v2620
    %2624 = vrot.lane.b32.xlu0 %v2622, 32
    %v2625 = vpop.permute.xlu0 %2624
    %v2627 = vadd.f32 %v2617, %v2625
    %v2628 = vtanh.pop %v2627
    %2630 = vrot.lane.b32.xlu0 %v2628, 32
    %v2631 = vpop.permute.xlu0 %2630
    %v2633 = vmul.f32 %v2612, %v2631
    %v2634 = vxor.u32 %v2593, 2147483648
    %v2635 = vmul.f32 %v2634, 1.442695
    %v2636 = vpow.pop %v2635
    %v2637 = vadd.f32 %v2636, 1.0
    %v2638 = vrcp.pop %v2637
    %v2639 = vmul.f32 %v2637, %v2638
    %v2640 = vsub.f32 1.0, %v2639
    %v2641 = vmul.f32 %v2638, %v2640
    %v2642 = vadd.f32 %v2638, %v2641
    %vm2643 = vweird.f32 %v2637
    %vm2644 = vweird.f32 %v2638
    %vm2645 = vmor %vm2643, %vm2644
    %v2646 = vsel %vm2645, %v2638, %v2642
    %v2647 = vand.u32 2147483647, %v2637
    %vm2648 = vcmp.eq.f32.partialorder %v2647, 8.507059e+37
    %v2649 = vand.u32 %v2637, 2147483648
    %v2650 = vor.u32 1.1754944e-38, %v2649
    %v2651 = vsel %vm2648, %v2650, %v2646
    %v2652 = vmul.f32 1.0, %v2651
    %v2653 = vtanh.pop %v2593
    %v2655 = vrot.slane %v2523, 2
    %v2657 = vmul.f32 %v2652, %v2655
    %2659 = vrot.lane.b32.xlu0 %v2653, 32
    %v2660 = vpop.permute.xlu0 %2659
    %v2662 = vmul.f32 %v2652, %v2660
    %2664 = vrot.lane.b32.xlu0 %v2662, 32
    %v2665 = vpop.permute.xlu0 %2664
    %v2667 = vadd.f32 %v2657, %v2665
    %v2668 = vtanh.pop %v2667
    %2670 = vrot.lane.b32.xlu0 %v2668, 32
    %v2671 = vpop.permute.xlu0 %2670
    %v2673 = vmul.f32 %v2652, %v2671
    %2675 = vrot.lane.b32.xlu0 %v2633, 64
    %v2676 = vpop.permute.xlu0 %2675
    %2678 = vst.msk [vmem:[#allocation2 + $0x8] sm:$0xc0] %vm364, %v2676
    %2680 = vrot.lane.b32.xlu0 %v2673, 64
    %v2681 = vpop.permute.xlu0 %2680
    %2683 = vst.msk [vmem:[#allocation3] sm:$0x3] %vm358, %v2681
    %v2684 = vld [vmem:[#allocation2] sm:$0xff]
    %v2685 = vld [vmem:[#allocation2 + $0x8] sm:$0xff]
    %v2686 = vld [vmem:[%s7] sm:$0xff]
    %v2687 = vld [vmem:[%s7 + $0x8] sm:$0xff]
    %v2688 = vld [vmem:[%s7 + $0x10] sm:$0xff]
    %v2689 = vld [vmem:[%s7 + $0x18] sm:$0xff]
    %v2690 = vld [vmem:[%s7 + $0x20] sm:$0xff]
    %v2691 = vld [vmem:[%s7 + $0x28] sm:$0xff]
    %v2692 = vld [vmem:[%s7 + $0x30] sm:$0xff]
    %v2693 = vld [vmem:[%s7 + $0x38] sm:$0xff]
    %v2694 = vld [vmem:[#allocation3] sm:$0xff]
    %v2695 = vld [vmem:[#allocation3 + $0x8] sm:$0xff]
    %v2696 = vld [vmem:[%s7 + $0x40] sm:$0xff]
    %v2697 = vld [vmem:[%s7 + $0x48] sm:$0xff]
    %v2698 = vld [vmem:[%s7 + $0x50] sm:$0xff]
    %v2699 = vld [vmem:[%s7 + $0x58] sm:$0xff]
    %v2700 = vld [vmem:[%s7 + $0x60] sm:$0xff]
    %v2701 = vld [vmem:[%s7 + $0x68] sm:$0xff]
    %v2702 = vld [vmem:[%s7 + $0x70] sm:$0xff]
    %v2703 = vld [vmem:[%s7 + $0x78] sm:$0xff]
    %v2705 = vsel %vm370, %v2694, 0
    %v2708 = vsel %vm370, %v2695, 0
    %2710 = vmatpush.msra.mxu0 0.0
    %2711 = vmatpush.msra.mxu0 0.0
    %2712 = vmatpush.msra.mxu0 0.0
    %2713 = vmatpush.msra.mxu0 0.0
    %2714 = vmatpush.msra.mxu0 0.0
    %2715 = vmatpush.msra.mxu0 0.0
    %2716 = vmatpush.msra.mxu0 0.0
    %2717 = vmatpush.msra.mxu0 0.0
    %2718 = vmatpush.msra.mxu0 0.0
    %2719 = vmatpush.msra.mxu0 0.0
    %2720 = vmatpush.msra.mxu0 0.0
    %2721 = vmatpush.msra.mxu0 0.0
    %2722 = vmatpush.msra.mxu0 %v2702
    %2723 = vmatpush.msra.mxu0 %v2700
    %2724 = vmatpush.msra.mxu0 %v2698
    %2725 = vmatpush.msra.mxu0 %v2696
    %2726 = vmatmul.f32.gmra.mxu0 %v2705
    %v2727 = vpop.f32.mrf.mxu0
    %v2728 = vadd.f32 0.0, %v2727
    %2729 = vmatmul.f32.gmra.mxu0 %v2708
    %v2730 = vpop.f32.mrf.mxu0
    %v2731 = vadd.f32 0.0, %v2730
    %2732 = vdwg.mxu0
    %2733 = vmatpush.msra.mxu0 0.0
    %2734 = vmatpush.msra.mxu0 0.0
    %2735 = vmatpush.msra.mxu0 0.0
    %2736 = vmatpush.msra.mxu0 0.0
    %2737 = vmatpush.msra.mxu0 0.0
    %2738 = vmatpush.msra.mxu0 0.0
    %2739 = vmatpush.msra.mxu0 0.0
    %2740 = vmatpush.msra.mxu0 0.0
    %2741 = vmatpush.msra.mxu0 0.0
    %2742 = vmatpush.msra.mxu0 0.0
    %2743 = vmatpush.msra.mxu0 0.0
    %2744 = vmatpush.msra.mxu0 0.0
    %2745 = vmatpush.msra.mxu0 %v2703
    %2746 = vmatpush.msra.mxu0 %v2701
    %2747 = vmatpush.msra.mxu0 %v2699
    %2748 = vmatpush.msra.mxu0 %v2697
    %2749 = vmatmul.f32.gmra.mxu0 %v2705
    %v2750 = vpop.f32.mrf.mxu0
    %v2751 = vadd.f32 0.0, %v2750
    %2752 = vmatmul.f32.gmra.mxu0 %v2708
    %v2753 = vpop.f32.mrf.mxu0
    %v2754 = vadd.f32 0.0, %v2753
    %2755 = vdwg.mxu0
    %v2757 = vsel %vm370, %v2684, 0
    %v2760 = vsel %vm370, %v2685, 0
    %2762 = vmatpush.msra.mxu0 0.0
    %2763 = vmatpush.msra.mxu0 0.0
    %2764 = vmatpush.msra.mxu0 0.0
    %2765 = vmatpush.msra.mxu0 0.0
    %2766 = vmatpush.msra.mxu0 0.0
    %2767 = vmatpush.msra.mxu0 0.0
    %2768 = vmatpush.msra.mxu0 0.0
    %2769 = vmatpush.msra.mxu0 0.0
    %2770 = vmatpush.msra.mxu0 0.0
    %2771 = vmatpush.msra.mxu0 0.0
    %2772 = vmatpush.msra.mxu0 0.0
    %2773 = vmatpush.msra.mxu0 0.0
    %2774 = vmatpush.msra.mxu0 %v2692
    %2775 = vmatpush.msra.mxu0 %v2690
    %2776 = vmatpush.msra.mxu0 %v2688
    %2777 = vmatpush.msra.mxu0 %v2686
    %2778 = vmatmul.f32.gmra.mxu0 %v2757
    %v2779 = vpop.f32.mrf.mxu0
    %v2780 = vadd.f32 %v2728, %v2779
    %2781 = vmatmul.f32.gmra.mxu0 %v2760
    %v2782 = vpop.f32.mrf.mxu0
    %v2783 = vadd.f32 %v2731, %v2782
    %2784 = vdwg.mxu0
    %2785 = vmatpush.msra.mxu0 0.0
    %2786 = vmatpush.msra.mxu0 0.0
    %2787 = vmatpush.msra.mxu0 0.0
    %2788 = vmatpush.msra.mxu0 0.0
    %2789 = vmatpush.msra.mxu0 0.0
    %2790 = vmatpush.msra.mxu0 0.0
    %2791 = vmatpush.msra.mxu0 0.0
    %2792 = vmatpush.msra.mxu0 0.0
    %2793 = vmatpush.msra.mxu0 0.0
    %2794 = vmatpush.msra.mxu0 0.0
    %2795 = vmatpush.msra.mxu0 0.0
    %2796 = vmatpush.msra.mxu0 0.0
    %2797 = vmatpush.msra.mxu0 %v2693
    %2798 = vmatpush.msra.mxu0 %v2691
    %2799 = vmatpush.msra.mxu0 %v2689
    %2800 = vmatpush.msra.mxu0 %v2687
    %2801 = vmatmul.f32.gmra.mxu0 %v2757
    %v2802 = vpop.f32.mrf.mxu0
    %v2803 = vadd.f32 %v2751, %v2802
    %2804 = vmatmul.f32.gmra.mxu0 %v2760
    %v2805 = vpop.f32.mrf.mxu0
    %v2806 = vadd.f32 %v2754, %v2805
    %2807 = vdwg.mxu0
    %v2808 = vld [vmem:[%s9] sm:$0x3]
    %v2810 = vperm.slane %v2808, 0
    %v2811 = vperm.slane %v2808, 1
    %v2814 = vadd.f32 %v2780, %v2810
    %v2815 = vadd.f32 %v2803, %v2811
    %v2816 = vadd.f32 %v2783, %v2810
    %v2817 = vadd.f32 %v2806, %v2811
    %v2818 = vld [vmem:[%s8] sm:$0xff]
    %v2819 = vld [vmem:[%s8 + $0x8] sm:$0xff]
    %v2820 = vld [vmem:[%s8 + $0x10] sm:$0xff]
    %v2821 = vld [vmem:[%s8 + $0x18] sm:$0xff]
    %v2822 = vld [vmem:[%s8 + $0x20] sm:$0xff]
    %v2823 = vld [vmem:[%s8 + $0x28] sm:$0xff]
    %v2824 = vld [vmem:[%s8 + $0x30] sm:$0xff]
    %v2825 = vld [vmem:[%s8 + $0x38] sm:$0xff]
    %v2826 = vld [vmem:[%s8 + $0x40] sm:$0xff]
    %v2827 = vld [vmem:[%s8 + $0x48] sm:$0xff]
    %v2828 = vld [vmem:[%s8 + $0x50] sm:$0xff]
    %v2829 = vld [vmem:[%s8 + $0x58] sm:$0xff]
    %v2830 = vld [vmem:[%s8 + $0x60] sm:$0xff]
    %v2831 = vld [vmem:[%s8 + $0x68] sm:$0xff]
    %v2832 = vld [vmem:[%s8 + $0x70] sm:$0xff]
    %v2833 = vld [vmem:[%s8 + $0x78] sm:$0xff]
    %2834 = vmatpush.msra.mxu0 0.0
    %2835 = vmatpush.msra.mxu0 0.0
    %2836 = vmatpush.msra.mxu0 0.0
    %2837 = vmatpush.msra.mxu0 0.0
    %2838 = vmatpush.msra.mxu0 0.0
    %2839 = vmatpush.msra.mxu0 0.0
    %2840 = vmatpush.msra.mxu0 0.0
    %2841 = vmatpush.msra.mxu0 0.0
    %2842 = vmatpush.msra.mxu0 %v2832
    %2843 = vmatpush.msra.mxu0 %v2830
    %2844 = vmatpush.msra.mxu0 %v2828
    %2845 = vmatpush.msra.mxu0 %v2826
    %2846 = vmatpush.msra.mxu0 %v2824
    %2847 = vmatpush.msra.mxu0 %v2822
    %2848 = vmatpush.msra.mxu0 %v2820
    %2849 = vmatpush.msra.mxu0 %v2818
    %2850 = vmatmul.f32.gmra.mxu0 %v233
    %v2851 = vpop.f32.mrf.mxu0
    %v2852 = vadd.f32 0.0, %v2851
    %2853 = vdwg.mxu0
    %2854 = vmatpush.msra.mxu0 0.0
    %2855 = vmatpush.msra.mxu0 0.0
    %2856 = vmatpush.msra.mxu0 0.0
    %2857 = vmatpush.msra.mxu0 0.0
    %2858 = vmatpush.msra.mxu0 0.0
    %2859 = vmatpush.msra.mxu0 0.0
    %2860 = vmatpush.msra.mxu0 0.0
    %2861 = vmatpush.msra.mxu0 0.0
    %2862 = vmatpush.msra.mxu0 %v2833
    %2863 = vmatpush.msra.mxu0 %v2831
    %2864 = vmatpush.msra.mxu0 %v2829
    %2865 = vmatpush.msra.mxu0 %v2827
    %2866 = vmatpush.msra.mxu0 %v2825
    %2867 = vmatpush.msra.mxu0 %v2823
    %2868 = vmatpush.msra.mxu0 %v2821
    %2869 = vmatpush.msra.mxu0 %v2819
    %2870 = vmatmul.f32.gmra.mxu0 %v233
    %v2871 = vpop.f32.mrf.mxu0
    %v2872 = vadd.f32 0.0, %v2871
    %2873 = vdwg.mxu0
    %v2874 = vadd.f32 %v2814, %v2852
    %v2876 = vrot.slane %v2872, 2
    %v2878 = vadd.f32 %v2817, %v2876
    %v2879 = vxor.u32 %v2874, 2147483648
    %v2880 = vmul.f32 %v2879, 1.442695
    %v2881 = vpow.pop %v2880
    %v2882 = vadd.f32 %v2881, 1.0
    %v2883 = vrcp.pop %v2882
    %v2884 = vmul.f32 %v2882, %v2883
    %v2885 = vsub.f32 1.0, %v2884
    %v2886 = vmul.f32 %v2883, %v2885
    %v2887 = vadd.f32 %v2883, %v2886
    %vm2888 = vweird.f32 %v2882
    %vm2889 = vweird.f32 %v2883
    %vm2890 = vmor %vm2888, %vm2889
    %v2891 = vsel %vm2890, %v2883, %v2887
    %v2892 = vand.u32 2147483647, %v2882
    %vm2893 = vcmp.eq.f32.partialorder %v2892, 8.507059e+37
    %v2894 = vand.u32 %v2882, 2147483648
    %v2895 = vor.u32 1.1754944e-38, %v2894
    %v2896 = vsel %vm2893, %v2895, %v2891
    %v2897 = vmul.f32 1.0, %v2896
    %v2898 = vtanh.pop %v2874
    %v2899 = vmul.f32 %v2897, 0.0
    %2901 = vrot.lane.b32.xlu0 %v2898, 32
    %v2902 = vpop.permute.xlu0 %2901
    %v2904 = vmul.f32 %v2897, %v2902
    %2906 = vrot.lane.b32.xlu0 %v2904, 32
    %v2907 = vpop.permute.xlu0 %2906
    %v2909 = vadd.f32 %v2899, %v2907
    %v2910 = vtanh.pop %v2909
    %2912 = vrot.lane.b32.xlu0 %v2910, 32
    %v2913 = vpop.permute.xlu0 %2912
    %v2915 = vmul.f32 %v2897, %v2913
    %v2916 = vxor.u32 %v2878, 2147483648
    %v2917 = vmul.f32 %v2916, 1.442695
    %v2918 = vpow.pop %v2917
    %v2919 = vadd.f32 %v2918, 1.0
    %v2920 = vrcp.pop %v2919
    %v2921 = vmul.f32 %v2919, %v2920
    %v2922 = vsub.f32 1.0, %v2921
    %v2923 = vmul.f32 %v2920, %v2922
    %v2924 = vadd.f32 %v2920, %v2923
    %vm2925 = vweird.f32 %v2919
    %vm2926 = vweird.f32 %v2920
    %vm2927 = vmor %vm2925, %vm2926
    %v2928 = vsel %vm2927, %v2920, %v2924
    %v2929 = vand.u32 2147483647, %v2919
    %vm2930 = vcmp.eq.f32.partialorder %v2929, 8.507059e+37
    %v2931 = vand.u32 %v2919, 2147483648
    %v2932 = vor.u32 1.1754944e-38, %v2931
    %v2933 = vsel %vm2930, %v2932, %v2928
    %v2934 = vmul.f32 1.0, %v2933
    %v2935 = vtanh.pop %v2878
    %v2936 = vmul.f32 %v2934, 0.0
    %2938 = vrot.lane.b32.xlu0 %v2935, 32
    %v2939 = vpop.permute.xlu0 %2938
    %v2941 = vmul.f32 %v2934, %v2939
    %2943 = vrot.lane.b32.xlu0 %v2941, 32
    %v2944 = vpop.permute.xlu0 %2943
    %v2946 = vadd.f32 %v2936, %v2944
    %v2947 = vtanh.pop %v2946
    %2949 = vrot.lane.b32.xlu0 %v2947, 32
    %v2950 = vpop.permute.xlu0 %2949
    %v2952 = vmul.f32 %v2934, %v2950
    %v2953 = vadd.f32 %v2915, 0.0
    %v2954 = vadd.f32 %v2952, 0.0
    %2956 = vrot.lane.b32.xlu0 %v2915, 64
    %v2957 = vpop.permute.xlu0 %2956
    %v2960 = vrot.slane %v2952, 6
    %2961 = vrot.lane.b32.xlu0 %v2960, 96
    %v2962 = vpop.permute.xlu0 %2961
    %v2964 = vsel %vm370, %v2957, %v2962
    %v2966 = vsel %vm231, %v2964, 0
    %2968 = vmatpush.msra.mxu0 0.0
    %2969 = vmatpush.msra.mxu0 0.0
    %2970 = vmatpush.msra.mxu0 0.0
    %2971 = vmatpush.msra.mxu0 0.0
    %2972 = vmatpush.msra.mxu0 0.0
    %2973 = vmatpush.msra.mxu0 0.0
    %2974 = vmatpush.msra.mxu0 0.0
    %2975 = vmatpush.msra.mxu0 0.0
    %2976 = vmatpush.msra.mxu0 %v2832
    %2977 = vmatpush.msra.mxu0 %v2830
    %2978 = vmatpush.msra.mxu0 %v2828
    %2979 = vmatpush.msra.mxu0 %v2826
    %2980 = vmatpush.msra.mxu0 %v2824
    %2981 = vmatpush.msra.mxu0 %v2822
    %2982 = vmatpush.msra.mxu0 %v2820
    %2983 = vmatpush.msra.mxu0 %v2818
    %2984 = vmatmul.f32.gmra.mxu0 %v2966
    %v2985 = vpop.f32.mrf.mxu0
    %v2986 = vadd.f32 0.0, %v2985
    %2987 = vdwg.mxu0
    %2988 = vmatpush.msra.mxu0 0.0
    %2989 = vmatpush.msra.mxu0 0.0
    %2990 = vmatpush.msra.mxu0 0.0
    %2991 = vmatpush.msra.mxu0 0.0
    %2992 = vmatpush.msra.mxu0 0.0
    %2993 = vmatpush.msra.mxu0 0.0
    %2994 = vmatpush.msra.mxu0 0.0
    %2995 = vmatpush.msra.mxu0 0.0
    %2996 = vmatpush.msra.mxu0 %v2833
    %2997 = vmatpush.msra.mxu0 %v2831
    %2998 = vmatpush.msra.mxu0 %v2829
    %2999 = vmatpush.msra.mxu0 %v2827
    %3000 = vmatpush.msra.mxu0 %v2825
    %3001 = vmatpush.msra.mxu0 %v2823
    %3002 = vmatpush.msra.mxu0 %v2821
    %3003 = vmatpush.msra.mxu0 %v2819
    %3004 = vmatmul.f32.gmra.mxu0 %v2966
    %v3005 = vpop.f32.mrf.mxu0
    %v3006 = vadd.f32 0.0, %v3005
    %3007 = vdwg.mxu0
    %v3009 = vrot.slane %v2986, 6
    %v3011 = vadd.f32 %v2814, %v3009
    %v3013 = vrot.slane %v3006, 4
    %v3015 = vadd.f32 %v2817, %v3013
    %v3016 = vxor.u32 %v3011, 2147483648
    %v3017 = vmul.f32 %v3016, 1.442695
    %v3018 = vpow.pop %v3017
    %v3019 = vadd.f32 %v3018, 1.0
    %v3020 = vrcp.pop %v3019
    %v3021 = vmul.f32 %v3019, %v3020
    %v3022 = vsub.f32 1.0, %v3021
    %v3023 = vmul.f32 %v3020, %v3022
    %v3024 = vadd.f32 %v3020, %v3023
    %vm3025 = vweird.f32 %v3019
    %vm3026 = vweird.f32 %v3020
    %vm3027 = vmor %vm3025, %vm3026
    %v3028 = vsel %vm3027, %v3020, %v3024
    %v3029 = vand.u32 2147483647, %v3019
    %vm3030 = vcmp.eq.f32.partialorder %v3029, 8.507059e+37
    %v3031 = vand.u32 %v3019, 2147483648
    %v3032 = vor.u32 1.1754944e-38, %v3031
    %v3033 = vsel %vm3030, %v3032, %v3028
    %v3034 = vmul.f32 1.0, %v3033
    %v3035 = vtanh.pop %v3011
    %v3037 = vrot.slane %v2909, 6
    %v3039 = vmul.f32 %v3034, %v3037
    %3041 = vrot.lane.b32.xlu0 %v3035, 32
    %v3042 = vpop.permute.xlu0 %3041
    %v3044 = vmul.f32 %v3034, %v3042
    %3046 = vrot.lane.b32.xlu0 %v3044, 32
    %v3047 = vpop.permute.xlu0 %3046
    %v3049 = vadd.f32 %v3039, %v3047
    %v3050 = vtanh.pop %v3049
    %3052 = vrot.lane.b32.xlu0 %v3050, 32
    %v3053 = vpop.permute.xlu0 %3052
    %v3055 = vmul.f32 %v3034, %v3053
    %v3056 = vxor.u32 %v3015, 2147483648
    %v3057 = vmul.f32 %v3056, 1.442695
    %v3058 = vpow.pop %v3057
    %v3059 = vadd.f32 %v3058, 1.0
    %v3060 = vrcp.pop %v3059
    %v3061 = vmul.f32 %v3059, %v3060
    %v3062 = vsub.f32 1.0, %v3061
    %v3063 = vmul.f32 %v3060, %v3062
    %v3064 = vadd.f32 %v3060, %v3063
    %vm3065 = vweird.f32 %v3059
    %vm3066 = vweird.f32 %v3060
    %vm3067 = vmor %vm3065, %vm3066
    %v3068 = vsel %vm3067, %v3060, %v3064
    %v3069 = vand.u32 2147483647, %v3059
    %vm3070 = vcmp.eq.f32.partialorder %v3069, 8.507059e+37
    %v3071 = vand.u32 %v3059, 2147483648
    %v3072 = vor.u32 1.1754944e-38, %v3071
    %v3073 = vsel %vm3070, %v3072, %v3068
    %v3074 = vmul.f32 1.0, %v3073
    %v3075 = vtanh.pop %v3015
    %v3077 = vrot.slane %v2946, 2
    %v3079 = vmul.f32 %v3074, %v3077
    %3081 = vrot.lane.b32.xlu0 %v3075, 32
    %v3082 = vpop.permute.xlu0 %3081
    %v3084 = vmul.f32 %v3074, %v3082
    %3086 = vrot.lane.b32.xlu0 %v3084, 32
    %v3087 = vpop.permute.xlu0 %3086
    %v3089 = vadd.f32 %v3079, %v3087
    %v3090 = vtanh.pop %v3089
    %3092 = vrot.lane.b32.xlu0 %v3090, 32
    %v3093 = vpop.permute.xlu0 %3092
    %v3095 = vmul.f32 %v3074, %v3093
    %v3097 = vrot.slane %v3055, 2
    %v3099 = vadd.f32 %v2953, %v3097
    %v3101 = vrot.slane %v3095, 6
    %v3103 = vadd.f32 %v2954, %v3101
    %3104 = vrot.lane.b32.xlu0 %v3055, 64
    %v3105 = vpop.permute.xlu0 %3104
    %v3107 = vrot.slane %v3095, 2
    %3108 = vrot.lane.b32.xlu0 %v3107, 96
    %v3109 = vpop.permute.xlu0 %3108
    %v3111 = vsel %vm370, %v3105, %v3109
    %v3113 = vrot.slane %v3111, 2
    %v3114 = vsel %vm231, %v3113, 0
    %3116 = vmatpush.msra.mxu0 0.0
    %3117 = vmatpush.msra.mxu0 0.0
    %3118 = vmatpush.msra.mxu0 0.0
    %3119 = vmatpush.msra.mxu0 0.0
    %3120 = vmatpush.msra.mxu0 0.0
    %3121 = vmatpush.msra.mxu0 0.0
    %3122 = vmatpush.msra.mxu0 0.0
    %3123 = vmatpush.msra.mxu0 0.0
    %3124 = vmatpush.msra.mxu0 %v2832
    %3125 = vmatpush.msra.mxu0 %v2830
    %3126 = vmatpush.msra.mxu0 %v2828
    %3127 = vmatpush.msra.mxu0 %v2826
    %3128 = vmatpush.msra.mxu0 %v2824
    %3129 = vmatpush.msra.mxu0 %v2822
    %3130 = vmatpush.msra.mxu0 %v2820
    %3131 = vmatpush.msra.mxu0 %v2818
    %3132 = vmatmul.f32.gmra.mxu0 %v3114
    %v3133 = vpop.f32.mrf.mxu0
    %v3134 = vadd.f32 0.0, %v3133
    %3135 = vdwg.mxu0
    %3136 = vmatpush.msra.mxu0 0.0
    %3137 = vmatpush.msra.mxu0 0.0
    %3138 = vmatpush.msra.mxu0 0.0
    %3139 = vmatpush.msra.mxu0 0.0
    %3140 = vmatpush.msra.mxu0 0.0
    %3141 = vmatpush.msra.mxu0 0.0
    %3142 = vmatpush.msra.mxu0 0.0
    %3143 = vmatpush.msra.mxu0 0.0
    %3144 = vmatpush.msra.mxu0 %v2833
    %3145 = vmatpush.msra.mxu0 %v2831
    %3146 = vmatpush.msra.mxu0 %v2829
    %3147 = vmatpush.msra.mxu0 %v2827
    %3148 = vmatpush.msra.mxu0 %v2825
    %3149 = vmatpush.msra.mxu0 %v2823
    %3150 = vmatpush.msra.mxu0 %v2821
    %3151 = vmatpush.msra.mxu0 %v2819
    %3152 = vmatmul.f32.gmra.mxu0 %v3114
    %v3153 = vpop.f32.mrf.mxu0
    %v3154 = vadd.f32 0.0, %v3153
    %3155 = vdwg.mxu0
    %v3157 = vrot.slane %v3134, 4
    %v3159 = vadd.f32 %v2814, %v3157
    %v3161 = vrot.slane %v3154, 6
    %v3163 = vadd.f32 %v2817, %v3161
    %v3164 = vxor.u32 %v3159, 2147483648
    %v3165 = vmul.f32 %v3164, 1.442695
    %v3166 = vpow.pop %v3165
    %v3167 = vadd.f32 %v3166, 1.0
    %v3168 = vrcp.pop %v3167
    %v3169 = vmul.f32 %v3167, %v3168
    %v3170 = vsub.f32 1.0, %v3169
    %v3171 = vmul.f32 %v3168, %v3170
    %v3172 = vadd.f32 %v3168, %v3171
    %vm3173 = vweird.f32 %v3167
    %vm3174 = vweird.f32 %v3168
    %vm3175 = vmor %vm3173, %vm3174
    %v3176 = vsel %vm3175, %v3168, %v3172
    %v3177 = vand.u32 2147483647, %v3167
    %vm3178 = vcmp.eq.f32.partialorder %v3177, 8.507059e+37
    %v3179 = vand.u32 %v3167, 2147483648
    %v3180 = vor.u32 1.1754944e-38, %v3179
    %v3181 = vsel %vm3178, %v3180, %v3176
    %v3182 = vmul.f32 1.0, %v3181
    %v3183 = vtanh.pop %v3159
    %v3185 = vrot.slane %v3049, 6
    %v3187 = vmul.f32 %v3182, %v3185
    %3189 = vrot.lane.b32.xlu0 %v3183, 32
    %v3190 = vpop.permute.xlu0 %3189
    %v3192 = vmul.f32 %v3182, %v3190
    %3194 = vrot.lane.b32.xlu0 %v3192, 32
    %v3195 = vpop.permute.xlu0 %3194
    %v3197 = vadd.f32 %v3187, %v3195
    %v3198 = vtanh.pop %v3197
    %3200 = vrot.lane.b32.xlu0 %v3198, 32
    %v3201 = vpop.permute.xlu0 %3200
    %v3203 = vmul.f32 %v3182, %v3201
    %v3204 = vxor.u32 %v3163, 2147483648
    %v3205 = vmul.f32 %v3204, 1.442695
    %v3206 = vpow.pop %v3205
    %v3207 = vadd.f32 %v3206, 1.0
    %v3208 = vrcp.pop %v3207
    %v3209 = vmul.f32 %v3207, %v3208
    %v3210 = vsub.f32 1.0, %v3209
    %v3211 = vmul.f32 %v3208, %v3210
    %v3212 = vadd.f32 %v3208, %v3211
    %vm3213 = vweird.f32 %v3207
    %vm3214 = vweird.f32 %v3208
    %vm3215 = vmor %vm3213, %vm3214
    %v3216 = vsel %vm3215, %v3208, %v3212
    %v3217 = vand.u32 2147483647, %v3207
    %vm3218 = vcmp.eq.f32.partialorder %v3217, 8.507059e+37
    %v3219 = vand.u32 %v3207, 2147483648
    %v3220 = vor.u32 1.1754944e-38, %v3219
    %v3221 = vsel %vm3218, %v3220, %v3216
    %v3222 = vmul.f32 1.0, %v3221
    %v3223 = vtanh.pop %v3163
    %v3225 = vrot.slane %v3089, 2
    %v3227 = vmul.f32 %v3222, %v3225
    %3229 = vrot.lane.b32.xlu0 %v3223, 32
    %v3230 = vpop.permute.xlu0 %3229
    %v3232 = vmul.f32 %v3222, %v3230
    %3234 = vrot.lane.b32.xlu0 %v3232, 32
    %v3235 = vpop.permute.xlu0 %3234
    %v3237 = vadd.f32 %v3227, %v3235
    %v3238 = vtanh.pop %v3237
    %3240 = vrot.lane.b32.xlu0 %v3238, 32
    %v3241 = vpop.permute.xlu0 %3240
    %v3243 = vmul.f32 %v3222, %v3241
    %v3245 = vrot.slane %v3203, 4
    %v3247 = vadd.f32 %v3099, %v3245
    %v3249 = vrot.slane %v3243, 4
    %v3251 = vadd.f32 %v3103, %v3249
    %3252 = vrot.lane.b32.xlu0 %v3203, 64
    %v3253 = vpop.permute.xlu0 %3252
    %v3255 = vrot.slane %v3243, 6
    %3256 = vrot.lane.b32.xlu0 %v3255, 96
    %v3257 = vpop.permute.xlu0 %3256
    %v3259 = vsel %vm370, %v3253, %v3257
    %v3261 = vrot.slane %v3259, 4
    %v3262 = vsel %vm231, %v3261, 0
    %3264 = vmatpush.msra.mxu0 0.0
    %3265 = vmatpush.msra.mxu0 0.0
    %3266 = vmatpush.msra.mxu0 0.0
    %3267 = vmatpush.msra.mxu0 0.0
    %3268 = vmatpush.msra.mxu0 0.0
    %3269 = vmatpush.msra.mxu0 0.0
    %3270 = vmatpush.msra.mxu0 0.0
    %3271 = vmatpush.msra.mxu0 0.0
    %3272 = vmatpush.msra.mxu0 %v2832
    %3273 = vmatpush.msra.mxu0 %v2830
    %3274 = vmatpush.msra.mxu0 %v2828
    %3275 = vmatpush.msra.mxu0 %v2826
    %3276 = vmatpush.msra.mxu0 %v2824
    %3277 = vmatpush.msra.mxu0 %v2822
    %3278 = vmatpush.msra.mxu0 %v2820
    %3279 = vmatpush.msra.mxu0 %v2818
    %3280 = vmatmul.f32.gmra.mxu0 %v3262
    %v3281 = vpop.f32.mrf.mxu0
    %v3282 = vadd.f32 0.0, %v3281
    %3283 = vdwg.mxu0
    %3284 = vmatpush.msra.mxu0 0.0
    %3285 = vmatpush.msra.mxu0 0.0
    %3286 = vmatpush.msra.mxu0 0.0
    %3287 = vmatpush.msra.mxu0 0.0
    %3288 = vmatpush.msra.mxu0 0.0
    %3289 = vmatpush.msra.mxu0 0.0
    %3290 = vmatpush.msra.mxu0 0.0
    %3291 = vmatpush.msra.mxu0 0.0
    %3292 = vmatpush.msra.mxu0 %v2833
    %3293 = vmatpush.msra.mxu0 %v2831
    %3294 = vmatpush.msra.mxu0 %v2829
    %3295 = vmatpush.msra.mxu0 %v2827
    %3296 = vmatpush.msra.mxu0 %v2825
    %3297 = vmatpush.msra.mxu0 %v2823
    %3298 = vmatpush.msra.mxu0 %v2821
    %3299 = vmatpush.msra.mxu0 %v2819
    %3300 = vmatmul.f32.gmra.mxu0 %v3262
    %v3301 = vpop.f32.mrf.mxu0
    %v3302 = vadd.f32 0.0, %v3301
    %3303 = vdwg.mxu0
    %v3305 = vrot.slane %v3282, 2
    %v3307 = vadd.f32 %v2814, %v3305
    %v3308 = vadd.f32 %v2817, %v3302
    %v3309 = vxor.u32 %v3307, 2147483648
    %v3310 = vmul.f32 %v3309, 1.442695
    %v3311 = vpow.pop %v3310
    %v3312 = vadd.f32 %v3311, 1.0
    %v3313 = vrcp.pop %v3312
    %v3314 = vmul.f32 %v3312, %v3313
    %v3315 = vsub.f32 1.0, %v3314
    %v3316 = vmul.f32 %v3313, %v3315
    %v3317 = vadd.f32 %v3313, %v3316
    %vm3318 = vweird.f32 %v3312
    %vm3319 = vweird.f32 %v3313
    %vm3320 = vmor %vm3318, %vm3319
    %v3321 = vsel %vm3320, %v3313, %v3317
    %v3322 = vand.u32 2147483647, %v3312
    %vm3323 = vcmp.eq.f32.partialorder %v3322, 8.507059e+37
    %v3324 = vand.u32 %v3312, 2147483648
    %v3325 = vor.u32 1.1754944e-38, %v3324
    %v3326 = vsel %vm3323, %v3325, %v3321
    %v3327 = vmul.f32 1.0, %v3326
    %v3328 = vtanh.pop %v3307
    %v3330 = vrot.slane %v3197, 6
    %v3332 = vmul.f32 %v3327, %v3330
    %3334 = vrot.lane.b32.xlu0 %v3328, 32
    %v3335 = vpop.permute.xlu0 %3334
    %v3337 = vmul.f32 %v3327, %v3335
    %3339 = vrot.lane.b32.xlu0 %v3337, 32
    %v3340 = vpop.permute.xlu0 %3339
    %v3342 = vadd.f32 %v3332, %v3340
    %v3343 = vtanh.pop %v3342
    %3345 = vrot.lane.b32.xlu0 %v3343, 32
    %v3346 = vpop.permute.xlu0 %3345
    %v3348 = vmul.f32 %v3327, %v3346
    %v3349 = vxor.u32 %v3308, 2147483648
    %v3350 = vmul.f32 %v3349, 1.442695
    %v3351 = vpow.pop %v3350
    %v3352 = vadd.f32 %v3351, 1.0
    %v3353 = vrcp.pop %v3352
    %v3354 = vmul.f32 %v3352, %v3353
    %v3355 = vsub.f32 1.0, %v3354
    %v3356 = vmul.f32 %v3353, %v3355
    %v3357 = vadd.f32 %v3353, %v3356
    %vm3358 = vweird.f32 %v3352
    %vm3359 = vweird.f32 %v3353
    %vm3360 = vmor %vm3358, %vm3359
    %v3361 = vsel %vm3360, %v3353, %v3357
    %v3362 = vand.u32 2147483647, %v3352
    %vm3363 = vcmp.eq.f32.partialorder %v3362, 8.507059e+37
    %v3364 = vand.u32 %v3352, 2147483648
    %v3365 = vor.u32 1.1754944e-38, %v3364
    %v3366 = vsel %vm3363, %v3365, %v3361
    %v3367 = vmul.f32 1.0, %v3366
    %v3368 = vtanh.pop %v3308
    %v3370 = vrot.slane %v3237, 2
    %v3372 = vmul.f32 %v3367, %v3370
    %3374 = vrot.lane.b32.xlu0 %v3368, 32
    %v3375 = vpop.permute.xlu0 %3374
    %v3377 = vmul.f32 %v3367, %v3375
    %3379 = vrot.lane.b32.xlu0 %v3377, 32
    %v3380 = vpop.permute.xlu0 %3379
    %v3382 = vadd.f32 %v3372, %v3380
    %v3383 = vtanh.pop %v3382
    %3385 = vrot.lane.b32.xlu0 %v3383, 32
    %v3386 = vpop.permute.xlu0 %3385
    %v3388 = vmul.f32 %v3367, %v3386
    %v3390 = vrot.slane %v3348, 6
    %v3392 = vadd.f32 %v3247, %v3390
    %v3394 = vrot.slane %v3388, 2
    %v3396 = vadd.f32 %v3251, %v3394
    %3397 = vrot.lane.b32.xlu0 %v3348, 64
    %v3398 = vpop.permute.xlu0 %3397
    %3400 = vrot.lane.b32.xlu0 %v3394, 96
    %v3401 = vpop.permute.xlu0 %3400
    %v3403 = vsel %vm370, %v3398, %v3401
    %v3405 = vrot.slane %v3403, 6
    %v3406 = vsel %vm231, %v3405, 0
    %3408 = vmatpush.msra.mxu0 0.0
    %3409 = vmatpush.msra.mxu0 0.0
    %3410 = vmatpush.msra.mxu0 0.0
    %3411 = vmatpush.msra.mxu0 0.0
    %3412 = vmatpush.msra.mxu0 0.0
    %3413 = vmatpush.msra.mxu0 0.0
    %3414 = vmatpush.msra.mxu0 0.0
    %3415 = vmatpush.msra.mxu0 0.0
    %3416 = vmatpush.msra.mxu0 %v2832
    %3417 = vmatpush.msra.mxu0 %v2830
    %3418 = vmatpush.msra.mxu0 %v2828
    %3419 = vmatpush.msra.mxu0 %v2826
    %3420 = vmatpush.msra.mxu0 %v2824
    %3421 = vmatpush.msra.mxu0 %v2822
    %3422 = vmatpush.msra.mxu0 %v2820
    %3423 = vmatpush.msra.mxu0 %v2818
    %3424 = vmatmul.f32.gmra.mxu0 %v3406
    %v3425 = vpop.f32.mrf.mxu0
    %v3426 = vadd.f32 0.0, %v3425
    %3427 = vdwg.mxu0
    %3428 = vmatpush.msra.mxu0 0.0
    %3429 = vmatpush.msra.mxu0 0.0
    %3430 = vmatpush.msra.mxu0 0.0
    %3431 = vmatpush.msra.mxu0 0.0
    %3432 = vmatpush.msra.mxu0 0.0
    %3433 = vmatpush.msra.mxu0 0.0
    %3434 = vmatpush.msra.mxu0 0.0
    %3435 = vmatpush.msra.mxu0 0.0
    %3436 = vmatpush.msra.mxu0 %v2833
    %3437 = vmatpush.msra.mxu0 %v2831
    %3438 = vmatpush.msra.mxu0 %v2829
    %3439 = vmatpush.msra.mxu0 %v2827
    %3440 = vmatpush.msra.mxu0 %v2825
    %3441 = vmatpush.msra.mxu0 %v2823
    %3442 = vmatpush.msra.mxu0 %v2821
    %3443 = vmatpush.msra.mxu0 %v2819
    %3444 = vmatmul.f32.gmra.mxu0 %v3406
    %v3445 = vpop.f32.mrf.mxu0
    %v3446 = vadd.f32 0.0, %v3445
    %3447 = vdwg.mxu0
    %v3448 = vadd.f32 %v2816, %v3426
    %v3450 = vrot.slane %v3446, 2
    %v3452 = vadd.f32 %v2815, %v3450
    %v3453 = vxor.u32 %v3448, 2147483648
    %v3454 = vmul.f32 %v3453, 1.442695
    %v3455 = vpow.pop %v3454
    %v3456 = vadd.f32 %v3455, 1.0
    %v3457 = vrcp.pop %v3456
    %v3458 = vmul.f32 %v3456, %v3457
    %v3459 = vsub.f32 1.0, %v3458
    %v3460 = vmul.f32 %v3457, %v3459
    %v3461 = vadd.f32 %v3457, %v3460
    %vm3462 = vweird.f32 %v3456
    %vm3463 = vweird.f32 %v3457
    %vm3464 = vmor %vm3462, %vm3463
    %v3465 = vsel %vm3464, %v3457, %v3461
    %v3466 = vand.u32 2147483647, %v3456
    %vm3467 = vcmp.eq.f32.partialorder %v3466, 8.507059e+37
    %v3468 = vand.u32 %v3456, 2147483648
    %v3469 = vor.u32 1.1754944e-38, %v3468
    %v3470 = vsel %vm3467, %v3469, %v3465
    %v3471 = vmul.f32 1.0, %v3470
    %v3472 = vtanh.pop %v3448
    %v3474 = vrot.slane %v3342, 6
    %v3476 = vmul.f32 %v3471, %v3474
    %3478 = vrot.lane.b32.xlu0 %v3472, 32
    %v3479 = vpop.permute.xlu0 %3478
    %v3481 = vmul.f32 %v3471, %v3479
    %3483 = vrot.lane.b32.xlu0 %v3481, 32
    %v3484 = vpop.permute.xlu0 %3483
    %v3486 = vadd.f32 %v3476, %v3484
    %v3487 = vtanh.pop %v3486
    %3489 = vrot.lane.b32.xlu0 %v3487, 32
    %v3490 = vpop.permute.xlu0 %3489
    %v3492 = vmul.f32 %v3471, %v3490
    %v3493 = vxor.u32 %v3452, 2147483648
    %v3494 = vmul.f32 %v3493, 1.442695
    %v3495 = vpow.pop %v3494
    %v3496 = vadd.f32 %v3495, 1.0
    %v3497 = vrcp.pop %v3496
    %v3498 = vmul.f32 %v3496, %v3497
    %v3499 = vsub.f32 1.0, %v3498
    %v3500 = vmul.f32 %v3497, %v3499
    %v3501 = vadd.f32 %v3497, %v3500
    %vm3502 = vweird.f32 %v3496
    %vm3503 = vweird.f32 %v3497
    %vm3504 = vmor %vm3502, %vm3503
    %v3505 = vsel %vm3504, %v3497, %v3501
    %v3506 = vand.u32 2147483647, %v3496
    %vm3507 = vcmp.eq.f32.partialorder %v3506, 8.507059e+37
    %v3508 = vand.u32 %v3496, 2147483648
    %v3509 = vor.u32 1.1754944e-38, %v3508
    %v3510 = vsel %vm3507, %v3509, %v3505
    %v3511 = vmul.f32 1.0, %v3510
    %v3512 = vtanh.pop %v3452
    %v3514 = vrot.slane %v3382, 2
    %v3516 = vmul.f32 %v3511, %v3514
    %3518 = vrot.lane.b32.xlu0 %v3512, 32
    %v3519 = vpop.permute.xlu0 %3518
    %v3521 = vmul.f32 %v3511, %v3519
    %3523 = vrot.lane.b32.xlu0 %v3521, 32
    %v3524 = vpop.permute.xlu0 %3523
    %v3526 = vadd.f32 %v3516, %v3524
    %v3527 = vtanh.pop %v3526
    %3529 = vrot.lane.b32.xlu0 %v3527, 32
    %v3530 = vpop.permute.xlu0 %3529
    %v3532 = vmul.f32 %v3511, %v3530
    %v3533 = vadd.f32 %v3392, %v3492
    %v3534 = vadd.f32 %v3396, %v3532
    %3536 = vrot.lane.b32.xlu0 %v3492, 64
    %v3537 = vpop.permute.xlu0 %3536
    %v3540 = vrot.slane %v3532, 6
    %3541 = vrot.lane.b32.xlu0 %v3540, 96
    %v3542 = vpop.permute.xlu0 %3541
    %v3544 = vsel %vm370, %v3537, %v3542
    %v3546 = vsel %vm231, %v3544, 0
    %3548 = vmatpush.msra.mxu0 0.0
    %3549 = vmatpush.msra.mxu0 0.0
    %3550 = vmatpush.msra.mxu0 0.0
    %3551 = vmatpush.msra.mxu0 0.0
    %3552 = vmatpush.msra.mxu0 0.0
    %3553 = vmatpush.msra.mxu0 0.0
    %3554 = vmatpush.msra.mxu0 0.0
    %3555 = vmatpush.msra.mxu0 0.0
    %3556 = vmatpush.msra.mxu0 %v2832
    %3557 = vmatpush.msra.mxu0 %v2830
    %3558 = vmatpush.msra.mxu0 %v2828
    %3559 = vmatpush.msra.mxu0 %v2826
    %3560 = vmatpush.msra.mxu0 %v2824
    %3561 = vmatpush.msra.mxu0 %v2822
    %3562 = vmatpush.msra.mxu0 %v2820
    %3563 = vmatpush.msra.mxu0 %v2818
    %3564 = vmatmul.f32.gmra.mxu0 %v3546
    %v3565 = vpop.f32.mrf.mxu0
    %v3566 = vadd.f32 0.0, %v3565
    %3567 = vdwg.mxu0
    %3568 = vmatpush.msra.mxu0 0.0
    %3569 = vmatpush.msra.mxu0 0.0
    %3570 = vmatpush.msra.mxu0 0.0
    %3571 = vmatpush.msra.mxu0 0.0
    %3572 = vmatpush.msra.mxu0 0.0
    %3573 = vmatpush.msra.mxu0 0.0
    %3574 = vmatpush.msra.mxu0 0.0
    %3575 = vmatpush.msra.mxu0 0.0
    %3576 = vmatpush.msra.mxu0 %v2833
    %3577 = vmatpush.msra.mxu0 %v2831
    %3578 = vmatpush.msra.mxu0 %v2829
    %3579 = vmatpush.msra.mxu0 %v2827
    %3580 = vmatpush.msra.mxu0 %v2825
    %3581 = vmatpush.msra.mxu0 %v2823
    %3582 = vmatpush.msra.mxu0 %v2821
    %3583 = vmatpush.msra.mxu0 %v2819
    %3584 = vmatmul.f32.gmra.mxu0 %v3546
    %v3585 = vpop.f32.mrf.mxu0
    %v3586 = vadd.f32 0.0, %v3585
    %3587 = vdwg.mxu0
    %v3589 = vrot.slane %v3566, 6
    %v3591 = vadd.f32 %v2816, %v3589
    %v3593 = vrot.slane %v3586, 4
    %v3595 = vadd.f32 %v2815, %v3593
    %v3596 = vxor.u32 %v3591, 2147483648
    %v3597 = vmul.f32 %v3596, 1.442695
    %v3598 = vpow.pop %v3597
    %v3599 = vadd.f32 %v3598, 1.0
    %v3600 = vrcp.pop %v3599
    %v3601 = vmul.f32 %v3599, %v3600
    %v3602 = vsub.f32 1.0, %v3601
    %v3603 = vmul.f32 %v3600, %v3602
    %v3604 = vadd.f32 %v3600, %v3603
    %vm3605 = vweird.f32 %v3599
    %vm3606 = vweird.f32 %v3600
    %vm3607 = vmor %vm3605, %vm3606
    %v3608 = vsel %vm3607, %v3600, %v3604
    %v3609 = vand.u32 2147483647, %v3599
    %vm3610 = vcmp.eq.f32.partialorder %v3609, 8.507059e+37
    %v3611 = vand.u32 %v3599, 2147483648
    %v3612 = vor.u32 1.1754944e-38, %v3611
    %v3613 = vsel %vm3610, %v3612, %v3608
    %v3614 = vmul.f32 1.0, %v3613
    %v3615 = vtanh.pop %v3591
    %v3617 = vrot.slane %v3486, 6
    %v3619 = vmul.f32 %v3614, %v3617
    %3621 = vrot.lane.b32.xlu0 %v3615, 32
    %v3622 = vpop.permute.xlu0 %3621
    %v3624 = vmul.f32 %v3614, %v3622
    %3626 = vrot.lane.b32.xlu0 %v3624, 32
    %v3627 = vpop.permute.xlu0 %3626
    %v3629 = vadd.f32 %v3619, %v3627
    %v3630 = vtanh.pop %v3629
    %3632 = vrot.lane.b32.xlu0 %v3630, 32
    %v3633 = vpop.permute.xlu0 %3632
    %v3635 = vmul.f32 %v3614, %v3633
    %v3636 = vxor.u32 %v3595, 2147483648
    %v3637 = vmul.f32 %v3636, 1.442695
    %v3638 = vpow.pop %v3637
    %v3639 = vadd.f32 %v3638, 1.0
    %v3640 = vrcp.pop %v3639
    %v3641 = vmul.f32 %v3639, %v3640
    %v3642 = vsub.f32 1.0, %v3641
    %v3643 = vmul.f32 %v3640, %v3642
    %v3644 = vadd.f32 %v3640, %v3643
    %vm3645 = vweird.f32 %v3639
    %vm3646 = vweird.f32 %v3640
    %vm3647 = vmor %vm3645, %vm3646
    %v3648 = vsel %vm3647, %v3640, %v3644
    %v3649 = vand.u32 2147483647, %v3639
    %vm3650 = vcmp.eq.f32.partialorder %v3649, 8.507059e+37
    %v3651 = vand.u32 %v3639, 2147483648
    %v3652 = vor.u32 1.1754944e-38, %v3651
    %v3653 = vsel %vm3650, %v3652, %v3648
    %v3654 = vmul.f32 1.0, %v3653
    %v3655 = vtanh.pop %v3595
    %v3657 = vrot.slane %v3526, 2
    %v3659 = vmul.f32 %v3654, %v3657
    %3661 = vrot.lane.b32.xlu0 %v3655, 32
    %v3662 = vpop.permute.xlu0 %3661
    %v3664 = vmul.f32 %v3654, %v3662
    %3666 = vrot.lane.b32.xlu0 %v3664, 32
    %v3667 = vpop.permute.xlu0 %3666
    %v3669 = vadd.f32 %v3659, %v3667
    %v3670 = vtanh.pop %v3669
    %3672 = vrot.lane.b32.xlu0 %v3670, 32
    %v3673 = vpop.permute.xlu0 %3672
    %v3675 = vmul.f32 %v3654, %v3673
    %v3677 = vrot.slane %v3635, 2
    %v3679 = vadd.f32 %v3533, %v3677
    %v3681 = vrot.slane %v3675, 6
    %v3683 = vadd.f32 %v3534, %v3681
    %3684 = vrot.lane.b32.xlu0 %v3635, 64
    %v3685 = vpop.permute.xlu0 %3684
    %v3687 = vrot.slane %v3675, 2
    %3688 = vrot.lane.b32.xlu0 %v3687, 96
    %v3689 = vpop.permute.xlu0 %3688
    %v3691 = vsel %vm370, %v3685, %v3689
    %v3693 = vrot.slane %v3691, 2
    %v3694 = vsel %vm231, %v3693, 0
    %3696 = vmatpush.msra.mxu0 0.0
    %3697 = vmatpush.msra.mxu0 0.0
    %3698 = vmatpush.msra.mxu0 0.0
    %3699 = vmatpush.msra.mxu0 0.0
    %3700 = vmatpush.msra.mxu0 0.0
    %3701 = vmatpush.msra.mxu0 0.0
    %3702 = vmatpush.msra.mxu0 0.0
    %3703 = vmatpush.msra.mxu0 0.0
    %3704 = vmatpush.msra.mxu0 %v2832
    %3705 = vmatpush.msra.mxu0 %v2830
    %3706 = vmatpush.msra.mxu0 %v2828
    %3707 = vmatpush.msra.mxu0 %v2826
    %3708 = vmatpush.msra.mxu0 %v2824
    %3709 = vmatpush.msra.mxu0 %v2822
    %3710 = vmatpush.msra.mxu0 %v2820
    %3711 = vmatpush.msra.mxu0 %v2818
    %3712 = vmatmul.f32.gmra.mxu0 %v3694
    %v3713 = vpop.f32.mrf.mxu0
    %v3714 = vadd.f32 0.0, %v3713
    %3715 = vdwg.mxu0
    %3716 = vmatpush.msra.mxu0 0.0
    %3717 = vmatpush.msra.mxu0 0.0
    %3718 = vmatpush.msra.mxu0 0.0
    %3719 = vmatpush.msra.mxu0 0.0
    %3720 = vmatpush.msra.mxu0 0.0
    %3721 = vmatpush.msra.mxu0 0.0
    %3722 = vmatpush.msra.mxu0 0.0
    %3723 = vmatpush.msra.mxu0 0.0
    %3724 = vmatpush.msra.mxu0 %v2833
    %3725 = vmatpush.msra.mxu0 %v2831
    %3726 = vmatpush.msra.mxu0 %v2829
    %3727 = vmatpush.msra.mxu0 %v2827
    %3728 = vmatpush.msra.mxu0 %v2825
    %3729 = vmatpush.msra.mxu0 %v2823
    %3730 = vmatpush.msra.mxu0 %v2821
    %3731 = vmatpush.msra.mxu0 %v2819
    %3732 = vmatmul.f32.gmra.mxu0 %v3694
    %v3733 = vpop.f32.mrf.mxu0
    %v3734 = vadd.f32 0.0, %v3733
    %3735 = vdwg.mxu0
    %v3737 = vrot.slane %v3714, 4
    %v3739 = vadd.f32 %v2816, %v3737
    %v3741 = vrot.slane %v3734, 6
    %v3743 = vadd.f32 %v2815, %v3741
    %v3744 = vxor.u32 %v3739, 2147483648
    %v3745 = vmul.f32 %v3744, 1.442695
    %v3746 = vpow.pop %v3745
    %v3747 = vadd.f32 %v3746, 1.0
    %v3748 = vrcp.pop %v3747
    %v3749 = vmul.f32 %v3747, %v3748
    %v3750 = vsub.f32 1.0, %v3749
    %v3751 = vmul.f32 %v3748, %v3750
    %v3752 = vadd.f32 %v3748, %v3751
    %vm3753 = vweird.f32 %v3747
    %vm3754 = vweird.f32 %v3748
    %vm3755 = vmor %vm3753, %vm3754
    %v3756 = vsel %vm3755, %v3748, %v3752
    %v3757 = vand.u32 2147483647, %v3747
    %vm3758 = vcmp.eq.f32.partialorder %v3757, 8.507059e+37
    %v3759 = vand.u32 %v3747, 2147483648
    %v3760 = vor.u32 1.1754944e-38, %v3759
    %v3761 = vsel %vm3758, %v3760, %v3756
    %v3762 = vmul.f32 1.0, %v3761
    %v3763 = vtanh.pop %v3739
    %v3765 = vrot.slane %v3629, 6
    %v3767 = vmul.f32 %v3762, %v3765
    %3769 = vrot.lane.b32.xlu0 %v3763, 32
    %v3770 = vpop.permute.xlu0 %3769
    %v3772 = vmul.f32 %v3762, %v3770
    %3774 = vrot.lane.b32.xlu0 %v3772, 32
    %v3775 = vpop.permute.xlu0 %3774
    %v3777 = vadd.f32 %v3767, %v3775
    %v3778 = vtanh.pop %v3777
    %3780 = vrot.lane.b32.xlu0 %v3778, 32
    %v3781 = vpop.permute.xlu0 %3780
    %v3783 = vmul.f32 %v3762, %v3781
    %v3784 = vxor.u32 %v3743, 2147483648
    %v3785 = vmul.f32 %v3784, 1.442695
    %v3786 = vpow.pop %v3785
    %v3787 = vadd.f32 %v3786, 1.0
    %v3788 = vrcp.pop %v3787
    %v3789 = vmul.f32 %v3787, %v3788
    %v3790 = vsub.f32 1.0, %v3789
    %v3791 = vmul.f32 %v3788, %v3790
    %v3792 = vadd.f32 %v3788, %v3791
    %vm3793 = vweird.f32 %v3787
    %vm3794 = vweird.f32 %v3788
    %vm3795 = vmor %vm3793, %vm3794
    %v3796 = vsel %vm3795, %v3788, %v3792
    %v3797 = vand.u32 2147483647, %v3787
    %vm3798 = vcmp.eq.f32.partialorder %v3797, 8.507059e+37
    %v3799 = vand.u32 %v3787, 2147483648
    %v3800 = vor.u32 1.1754944e-38, %v3799
    %v3801 = vsel %vm3798, %v3800, %v3796
    %v3802 = vmul.f32 1.0, %v3801
    %v3803 = vtanh.pop %v3743
    %v3805 = vrot.slane %v3669, 2
    %v3807 = vmul.f32 %v3802, %v3805
    %3809 = vrot.lane.b32.xlu0 %v3803, 32
    %v3810 = vpop.permute.xlu0 %3809
    %v3812 = vmul.f32 %v3802, %v3810
    %3814 = vrot.lane.b32.xlu0 %v3812, 32
    %v3815 = vpop.permute.xlu0 %3814
    %v3817 = vadd.f32 %v3807, %v3815
    %v3818 = vtanh.pop %v3817
    %3820 = vrot.lane.b32.xlu0 %v3818, 32
    %v3821 = vpop.permute.xlu0 %3820
    %v3823 = vmul.f32 %v3802, %v3821
    %v3825 = vrot.slane %v3783, 4
    %v3827 = vadd.f32 %v3679, %v3825
    %v3829 = vrot.slane %v3823, 4
    %v3831 = vadd.f32 %v3683, %v3829
    %3832 = vrot.lane.b32.xlu0 %v3783, 64
    %v3833 = vpop.permute.xlu0 %3832
    %v3835 = vrot.slane %v3823, 6
    %3836 = vrot.lane.b32.xlu0 %v3835, 96
    %v3837 = vpop.permute.xlu0 %3836
    %v3839 = vsel %vm370, %v3833, %v3837
    %v3841 = vrot.slane %v3839, 4
    %v3842 = vsel %vm231, %v3841, 0
    %3844 = vmatpush.msra.mxu0 0.0
    %3845 = vmatpush.msra.mxu0 0.0
    %3846 = vmatpush.msra.mxu0 0.0
    %3847 = vmatpush.msra.mxu0 0.0
    %3848 = vmatpush.msra.mxu0 0.0
    %3849 = vmatpush.msra.mxu0 0.0
    %3850 = vmatpush.msra.mxu0 0.0
    %3851 = vmatpush.msra.mxu0 0.0
    %3852 = vmatpush.msra.mxu0 %v2832
    %3853 = vmatpush.msra.mxu0 %v2830
    %3854 = vmatpush.msra.mxu0 %v2828
    %3855 = vmatpush.msra.mxu0 %v2826
    %3856 = vmatpush.msra.mxu0 %v2824
    %3857 = vmatpush.msra.mxu0 %v2822
    %3858 = vmatpush.msra.mxu0 %v2820
    %3859 = vmatpush.msra.mxu0 %v2818
    %3860 = vmatmul.f32.gmra.mxu0 %v3842
    %v3861 = vpop.f32.mrf.mxu0
    %v3862 = vadd.f32 0.0, %v3861
    %3863 = vdwg.mxu0
    %3864 = vmatpush.msra.mxu0 0.0
    %3865 = vmatpush.msra.mxu0 0.0
    %3866 = vmatpush.msra.mxu0 0.0
    %3867 = vmatpush.msra.mxu0 0.0
    %3868 = vmatpush.msra.mxu0 0.0
    %3869 = vmatpush.msra.mxu0 0.0
    %3870 = vmatpush.msra.mxu0 0.0
    %3871 = vmatpush.msra.mxu0 0.0
    %3872 = vmatpush.msra.mxu0 %v2833
    %3873 = vmatpush.msra.mxu0 %v2831
    %3874 = vmatpush.msra.mxu0 %v2829
    %3875 = vmatpush.msra.mxu0 %v2827
    %3876 = vmatpush.msra.mxu0 %v2825
    %3877 = vmatpush.msra.mxu0 %v2823
    %3878 = vmatpush.msra.mxu0 %v2821
    %3879 = vmatpush.msra.mxu0 %v2819
    %3880 = vmatmul.f32.gmra.mxu0 %v3842
    %v3881 = vpop.f32.mrf.mxu0
    %v3882 = vadd.f32 0.0, %v3881
    %3883 = vdwg.mxu0
    %v3885 = vrot.slane %v3862, 2
    %v3887 = vadd.f32 %v2816, %v3885
    %v3888 = vadd.f32 %v2815, %v3882
    %v3889 = vxor.u32 %v3887, 2147483648
    %v3890 = vmul.f32 %v3889, 1.442695
    %v3891 = vpow.pop %v3890
    %v3892 = vadd.f32 %v3891, 1.0
    %v3893 = vrcp.pop %v3892
    %v3894 = vmul.f32 %v3892, %v3893
    %v3895 = vsub.f32 1.0, %v3894
    %v3896 = vmul.f32 %v3893, %v3895
    %v3897 = vadd.f32 %v3893, %v3896
    %vm3898 = vweird.f32 %v3892
    %vm3899 = vweird.f32 %v3893
    %vm3900 = vmor %vm3898, %vm3899
    %v3901 = vsel %vm3900, %v3893, %v3897
    %v3902 = vand.u32 2147483647, %v3892
    %vm3903 = vcmp.eq.f32.partialorder %v3902, 8.507059e+37
    %v3904 = vand.u32 %v3892, 2147483648
    %v3905 = vor.u32 1.1754944e-38, %v3904
    %v3906 = vsel %vm3903, %v3905, %v3901
    %v3907 = vmul.f32 1.0, %v3906
    %v3908 = vtanh.pop %v3887
    %v3910 = vrot.slane %v3777, 6
    %v3912 = vmul.f32 %v3907, %v3910
    %3914 = vrot.lane.b32.xlu0 %v3908, 32
    %v3915 = vpop.permute.xlu0 %3914
    %v3917 = vmul.f32 %v3907, %v3915
    %3919 = vrot.lane.b32.xlu0 %v3917, 32
    %v3920 = vpop.permute.xlu0 %3919
    %v3922 = vadd.f32 %v3912, %v3920
    %v3923 = vtanh.pop %v3922
    %3925 = vrot.lane.b32.xlu0 %v3923, 32
    %v3926 = vpop.permute.xlu0 %3925
    %v3928 = vmul.f32 %v3907, %v3926
    %v3929 = vxor.u32 %v3888, 2147483648
    %v3930 = vmul.f32 %v3929, 1.442695
    %v3931 = vpow.pop %v3930
    %v3932 = vadd.f32 %v3931, 1.0
    %v3933 = vrcp.pop %v3932
    %v3934 = vmul.f32 %v3932, %v3933
    %v3935 = vsub.f32 1.0, %v3934
    %v3936 = vmul.f32 %v3933, %v3935
    %v3937 = vadd.f32 %v3933, %v3936
    %vm3938 = vweird.f32 %v3932
    %vm3939 = vweird.f32 %v3933
    %vm3940 = vmor %vm3938, %vm3939
    %v3941 = vsel %vm3940, %v3933, %v3937
    %v3942 = vand.u32 2147483647, %v3932
    %vm3943 = vcmp.eq.f32.partialorder %v3942, 8.507059e+37
    %v3944 = vand.u32 %v3932, 2147483648
    %v3945 = vor.u32 1.1754944e-38, %v3944
    %v3946 = vsel %vm3943, %v3945, %v3941
    %v3947 = vmul.f32 1.0, %v3946
    %v3948 = vtanh.pop %v3888
    %v3950 = vrot.slane %v3817, 2
    %v3952 = vmul.f32 %v3947, %v3950
    %3954 = vrot.lane.b32.xlu0 %v3948, 32
    %v3955 = vpop.permute.xlu0 %3954
    %v3957 = vmul.f32 %v3947, %v3955
    %3959 = vrot.lane.b32.xlu0 %v3957, 32
    %v3960 = vpop.permute.xlu0 %3959
    %v3962 = vadd.f32 %v3952, %v3960
    %v3963 = vtanh.pop %v3962
    %3965 = vrot.lane.b32.xlu0 %v3963, 32
    %v3966 = vpop.permute.xlu0 %3965
    %v3968 = vmul.f32 %v3947, %v3966
    %v3970 = vrot.slane %v3928, 6
    %v3972 = vadd.f32 %v3827, %v3970
    %v3974 = vrot.slane %v3968, 2
    %v3976 = vadd.f32 %v3831, %v3974
    %v3977 = vmul.f32 %v3972, 0.125
    %v3978 = vmul.f32 %v3976, 0.125
    %v3979 = vld [vmem:[%s10] sm:$0xff]
    %v3980 = vld [vmem:[%s10 + $0x8] sm:$0xff]
    %v3981 = vld [vmem:[%s10 + $0x10] sm:$0xff]
    %v3982 = vld [vmem:[%s10 + $0x18] sm:$0xff]
    %v3983 = vld [vmem:[%s10 + $0x20] sm:$0xff]
    %v3984 = vld [vmem:[%s10 + $0x28] sm:$0xff]
    %v3985 = vld [vmem:[%s10 + $0x30] sm:$0xff]
    %v3986 = vld [vmem:[%s10 + $0x38] sm:$0xff]
    %v3988 = vrot.slane %v3978, 6
    %3989 = vrot.lane.b32.xlu0 %v3988, 64
    %v3990 = vpop.permute.xlu0 %3989
    %v3991 = vsel %vm370, %v3990, 0
    %3993 = vmatpush.msra.mxu0 0.0
    %3994 = vmatpush.msra.mxu0 0.0
    %3995 = vmatpush.msra.mxu0 0.0
    %3996 = vmatpush.msra.mxu0 0.0
    %3997 = vmatpush.msra.mxu0 0.0
    %3998 = vmatpush.msra.mxu0 0.0
    %3999 = vmatpush.msra.mxu0 0.0
    %4000 = vmatpush.msra.mxu0 0.0
    %4001 = vmatpush.msra.mxu0 0.0
    %4002 = vmatpush.msra.mxu0 0.0
    %4003 = vmatpush.msra.mxu0 0.0
    %4004 = vmatpush.msra.mxu0 0.0
    %4005 = vmatpush.msra.mxu0 %v3986
    %4006 = vmatpush.msra.mxu0 %v3985
    %4007 = vmatpush.msra.mxu0 %v3984
    %4008 = vmatpush.msra.mxu0 %v3983
    %4009 = vmatmul.f32.gmra.mxu0 %v3991
    %v4010 = vpop.f32.mrf.mxu0
    %v4011 = vadd.f32 0.0, %v4010
    %4012 = vdwg.mxu0
    %4014 = vrot.lane.b32.xlu0 %v3977, 64
    %v4015 = vpop.permute.xlu0 %4014
    %v4016 = vsel %vm370, %v4015, 0
    %4018 = vmatpush.msra.mxu0 0.0
    %4019 = vmatpush.msra.mxu0 0.0
    %4020 = vmatpush.msra.mxu0 0.0
    %4021 = vmatpush.msra.mxu0 0.0
    %4022 = vmatpush.msra.mxu0 0.0
    %4023 = vmatpush.msra.mxu0 0.0
    %4024 = vmatpush.msra.mxu0 0.0
    %4025 = vmatpush.msra.mxu0 0.0
    %4026 = vmatpush.msra.mxu0 0.0
    %4027 = vmatpush.msra.mxu0 0.0
    %4028 = vmatpush.msra.mxu0 0.0
    %4029 = vmatpush.msra.mxu0 0.0
    %4030 = vmatpush.msra.mxu0 %v3982
    %4031 = vmatpush.msra.mxu0 %v3981
    %4032 = vmatpush.msra.mxu0 %v3980
    %4033 = vmatpush.msra.mxu0 %v3979
    %4034 = vmatmul.f32.gmra.mxu0 %v4016
    %v4035 = vpop.f32.mrf.mxu0
    %v4036 = vadd.f32 %v4011, %v4035
    %4037 = vdwg.mxu0
    %v4038 = vld [vmem:[%s11] sm:$0x1]
    %v4040 = vperm.slane %v4038, 0
    %v4042 = vadd.f32 %v4036, %v4040
    %v4043 = vld [vmem:[%s12] sm:$0xff]
    %v4044 = vld [vmem:[%s12 + $0x8] sm:$0xff]
    %v4045 = vld [vmem:[%s12 + $0x10] sm:$0xff]
    %v4046 = vld [vmem:[%s12 + $0x18] sm:$0xff]
    %v4047 = vld [vmem:[%s13] sm:$0x1]
    %v4049 = vperm.slane %v4047, 0
    %v4052 = vsel %vm370, %v4042, 0
    %4054 = vmatpush.msra.mxu0 0.0
    %4055 = vmatpush.msra.mxu0 0.0
    %4056 = vmatpush.msra.mxu0 0.0
    %4057 = vmatpush.msra.mxu0 0.0
    %4058 = vmatpush.msra.mxu0 0.0
    %4059 = vmatpush.msra.mxu0 0.0
    %4060 = vmatpush.msra.mxu0 0.0
    %4061 = vmatpush.msra.mxu0 0.0
    %4062 = vmatpush.msra.mxu0 0.0
    %4063 = vmatpush.msra.mxu0 0.0
    %4064 = vmatpush.msra.mxu0 0.0
    %4065 = vmatpush.msra.mxu0 0.0
    %4066 = vmatpush.msra.mxu0 %v4046
    %4067 = vmatpush.msra.mxu0 %v4045
    %4068 = vmatpush.msra.mxu0 %v4044
    %4069 = vmatpush.msra.mxu0 %v4043
    %4070 = vmatmul.f32.gmra.mxu0 %v4052
    %v4071 = vpop.f32.mrf.mxu0
    %v4072 = vadd.f32 %v4049, %v4071
    %4073 = vdwg.mxu0
    %vm4074 = vcmask 123904
    %4075 = vst.msk [vmem:[#allocation4] sm:$0x3] %vm4074, %v4072
    // Predicated region
    $region58: #{lstm_forward.1} parent=1 // pred_check
      _
    $region59: #{lstm_forward.1} parent=1 // pred_check_branch
      %4077 = sbr.rel (0) target = $region61
    $region60: #{lstm_forward.1} parent=1 // pred_region
      %4079 = vsyncadd [#allocation5], 0
      %s4081 = sshll.u32 [#allocation4], 4
      %s4082 = int_to_ptr.vmem [resolvable:$true] %s4081
      %s4083 = sshll.u32 %s14, 4
      %s4084 = int_to_ptr.hbm [resolvable:$true] %s4083
      %4086 = dma.vmem_to_hbm [thread:$0]  %s4082, 32, %s4084, [#allocation5]
    $region61: #{lstm_forward.1} parent=1 // pred_fallthru
      _
    // Predicated region
    $region62: #{lstm_forward.1} parent=1 // pred_check
      _
    $region63: #{lstm_forward.1} parent=1 // pred_check_branch
      %4088 = sbr.rel (0) target = $region65
    $region64: #{lstm_forward.1} parent=1 // pred_region
      %4090 = dma.done [#allocation5], 32
    $region65: #{lstm_forward.1} parent=1 // pred_fallthru
      _
    %4091 = vsyncpa [#allocation5], 1

</llo_original>
